<compile_context>
chip_gen: v7x
topology: tpu7x:2x2x1
jax: 0.10.0
libtpu: 0.0.40
codegen_flags: <defaults>
</compile_context>

<pallas_src>
import math
import functools

import jax
import jax.numpy as jnp
from jax import lax
from jax.experimental import pallas as pl
from jax.experimental.pallas import tpu as pltpu


# ---------------------------------------------------------------------------
# small helpers usable inside kernels (exp/log/abs/max/rsqrt only -> safe lowering)
# ---------------------------------------------------------------------------
def _round_up(x, m):
    return (x + m - 1) // m * m


def _sigmoid(x):
    return 1.0 / (1.0 + jnp.exp(-x))


def _silu(x):
    return x * _sigmoid(x)


def _softplus(x):
    # numerically stable softplus
    return jnp.maximum(x, 0.0) + jnp.log(1.0 + jnp.exp(-jnp.abs(x)))


def _ln(x, g, b, eps):
    mu = jnp.mean(x, axis=-1, keepdims=True)
    xc = x - mu
    var = jnp.mean(xc * xc, axis=-1, keepdims=True)
    return xc * lax.rsqrt(var + eps) * g + b


# ---------------------------------------------------------------------------
# row-tiled dense kernel:  y = x @ w + b   (bf16 MXU operands, f32 accumulate)
# ---------------------------------------------------------------------------
def _dense_kernel(x_ref, w_ref, b_ref, o_ref):
    y = jnp.dot(x_ref[...], w_ref[...],
                preferred_element_type=jnp.float32) + b_ref[...]
    o_ref[...] = y.astype(o_ref.dtype)


def dense(x, w, b, block_rows=256):
    # x: (..., K), w: (K, O), b: (O,)
    K, O = w.shape
    lead = x.shape[:-1]
    # bf16 activations from the wrapper: the patch-embed matmul is HBM-bound, so this
    # halves its read bytes (the kernel accumulates in f32 regardless).
    x2 = x.reshape(-1, K).astype(jnp.bfloat16)
    N = x2.shape[0]
    bn = min(block_rows, _round_up(N, 8))
    Np = _round_up(N, bn)
    if Np != N:
        x2 = jnp.pad(x2, ((0, Np - N), (0, 0)))
    out = pl.pallas_call(
        _dense_kernel,
        out_shape=jax.ShapeDtypeStruct((Np, O), jnp.float32),
        grid=(Np // bn,),
        in_specs=[
            pl.BlockSpec((bn, K), lambda i: (i, 0)),
            pl.BlockSpec((K, O), lambda i: (0, 0)),
            pl.BlockSpec((1, O), lambda i: (0, 0)),
        ],
        out_specs=pl.BlockSpec((bn, O), lambda i: (i, 0)),
        compiler_params=pltpu.CompilerParams(dimension_semantics=("parallel",)),
    )(x2, w.astype(jnp.bfloat16), b.reshape(1, O).astype(jnp.float32))
    return out[:N].reshape(*lead, O)


# ---------------------------------------------------------------------------
# fused final LayerNorm (row-wise) + classifier head on the cls token
# ---------------------------------------------------------------------------
def _ln_head_kernel(eps, x_ref, g_ref, b_ref, w_ref, hb_ref, o_ref):
    xn = _ln(x_ref[...].astype(jnp.float32), g_ref[...], b_ref[...], eps)
    o_ref[...] = (jnp.dot(xn.astype(jnp.bfloat16), w_ref[...],
                          preferred_element_type=jnp.float32)
                  + hb_ref[...]).astype(o_ref.dtype)


def ln_head(x, g, b, w, hb, eps=1e-5):
    # x: (B, E) -> (B, num_classes)
    B, E = x.shape
    O = w.shape[1]
    return pl.pallas_call(
        functools.partial(_ln_head_kernel, eps),
        out_shape=jax.ShapeDtypeStruct((B, O), jnp.float32),
        grid=(1,),
        in_specs=[
            pl.BlockSpec((B, E), lambda i: (0, 0)),
            pl.BlockSpec((1, E), lambda i: (0, 0)),
            pl.BlockSpec((1, E), lambda i: (0, 0)),
            pl.BlockSpec((E, O), lambda i: (0, 0)),
            pl.BlockSpec((1, O), lambda i: (0, 0)),
        ],
        out_specs=pl.BlockSpec((B, O), lambda i: (0, 0)),
    )(x.astype(jnp.float32), g.reshape(1, E), b.reshape(1, E),
      w.astype(jnp.bfloat16), hb.reshape(1, O))


# ---------------------------------------------------------------------------
# fused Adventurer Block kernel (one grid step per batch element)
# ---------------------------------------------------------------------------
def _block_kernel(eps,
                  h_ref, ng_ref, nb_ref,
                  wi_ref, cw_ref, cb_ref,
                  wxdt_ref, wxbc_ref, dtw_ref, dtb_ref,
                  A_ref, D_ref, wo_ref,
                  mg_ref, mb_ref, w12_ref, b12_ref, w3_ref, b3_ref,
                  o_ref,
                  xm_s, pad_s, dt_s, dtu_s, bt_s, ct_s, ys_s):
    L, E = h_ref.shape
    K, Din = cw_ref.shape
    S = A_ref.shape[0]
    H = w3_ref.shape[0]
    Lm = L + 1
    Lm_pad = xm_s.shape[0]            # sequence (mean + tokens) padded to 8-row chunks
    n_chunks = Lm_pad // 8
    bf = jnp.bfloat16

    h_in = h_ref[...].astype(jnp.float32)

    # ---- LayerNorm 1, prepend the mean token, zero-pad the tail rows (stays in VMEM)
    x = _ln(h_in, ng_ref[...], nb_ref[...], eps)                       # (L, E)
    xm_s[pl.ds(0, 1), :] = jnp.mean(x, axis=0, keepdims=True)
    xm_s[pl.ds(1, L), :] = x
    if Lm_pad > Lm:
        xm_s[pl.ds(Lm, Lm_pad - Lm), :] = jnp.zeros((Lm_pad - Lm, E), jnp.float32)
    xm = xm_s[...].astype(bf)                                          # (Lm_pad, E)

    # ---- in_proj: one fused lane-dense matmul (N = 2*Din), split in-kernel
    xz = jnp.dot(xm, wi_ref[...], preferred_element_type=jnp.float32)  # (Lm_pad, 2*Din)
    xs = xz[:, :Din]
    z = xz[:, Din:]

    # ---- causal depthwise conv1d + SiLU (zero padding handled in VMEM scratch)
    # TODO(synk): could be replaced by pltpu.roll + mask to skip the scratch round trip.
    pad_s[pl.ds(0, K - 1), :] = jnp.zeros((K - 1, Din), jnp.float32)
    pad_s[pl.ds(K - 1, Lm_pad), :] = xs
    acc = jnp.zeros((Lm_pad, Din), jnp.float32)
    for k in range(K):                                                 # K is small/static
        acc = acc + pad_s[pl.ds(k, Lm_pad), :] * cw_ref[pl.ds(k, 1), :]
    u = _silu(acc + cb_ref[...])                                       # (Lm_pad, Din)
    u_bf = u.astype(bf)

    # ---- x_proj:
    #   * dt_lr in time-major orientation (rows = timesteps) for dt_proj,
    #   * B and C produced DIRECTLY transposed (state-major) by a single a @ b.T
    #     matmul against the pre-transposed (2S, Din) weight -> no in-loop transposes.
    dt_lr = jnp.dot(u_bf, wxdt_ref[...], preferred_element_type=jnp.float32)  # (Lm_pad, R)
    dt = _softplus(jnp.dot(dt_lr, dtw_ref[...], preferred_element_type=jnp.float32)
                   + dtb_ref[...])                                     # (Lm_pad, Din) f32
    dt_s[...] = dt
    dtu_s[...] = dt * u
    bct = lax.dot_general(wxbc_ref[...], u_bf, (((1,), (1,)), ((), ())),
                          preferred_element_type=jnp.float32)          # (2S, Lm_pad)
    for c in range(n_chunks):          # one-time static repack into chunk-major scratch
        bt_s[c] = bct[:S, c * 8:(c + 1) * 8]                           # (S, 8)
        ct_s[c] = bct[S:, c * 8:(c + 1) * 8]                           # (S, 8)

    A = A_ref[...]                                                     # (S, Din)
    row_ids = lax.broadcasted_iota(jnp.int32, (8, 1), 0)

    # ---- selective scan: fori_loop over 8-step chunks; state (S, Din) kept in vregs;
    #      no MXU work inside the loop (VPU multiply + sublane reduce per step), 8-row
    #      aligned loads/stores per chunk instead of single-row masked accesses.
    def chunk_body(c, h_state):
        base = pl.multiple_of(c * 8, 8)
        dt_c = dt_s[pl.ds(base, 8), :]                                 # (8, Din)
        dtu_c = dtu_s[pl.ds(base, 8), :]                               # (8, Din)
        b_c = bt_s[c]                                                  # (S, 8)
        c_c = ct_s[c]                                                  # (S, 8)
        y_chunk = jnp.zeros((8, Din), jnp.float32)
        for k in range(8):
            dA = jnp.exp(dt_c[k:k + 1, :] * A)                         # (S, Din)
            h_state = dA * h_state + b_c[:, k:k + 1] * dtu_c[k:k + 1, :]
            y_t = jnp.sum(c_c[:, k:k + 1] * h_state, axis=0, keepdims=True)  # (1, Din)
            y_chunk = jnp.where(row_ids == k, y_t, y_chunk)
        ys_s[pl.ds(base, 8), :] = y_chunk
        return h_state

    lax.fori_loop(0, n_chunks, chunk_body, jnp.zeros((S, Din), jnp.float32))

    # ---- skip term, SiLU gate, out_proj; drop the mean token by slicing directly
    y = (ys_s[...] + u * D_ref[...]) * _silu(z)                        # (Lm_pad, Din)
    y_out = jnp.dot(y.astype(bf), wo_ref[...],
                    preferred_element_type=jnp.float32)                # (Lm_pad, E)
    h1 = h_in + y_out[1:Lm, :]                                         # first residual

    # ---- LayerNorm 2 + SwiGLU (w1/w2 fused into one matmul) + second residual
    xb = _ln(h1, mg_ref[...], mb_ref[...], eps).astype(bf)
    a12 = jnp.dot(xb, w12_ref[...], preferred_element_type=jnp.float32) + b12_ref[...]
    a1 = a12[:, :H]
    a2 = a12[:, H:]
    mlp = jnp.dot((_silu(a1) * a2).astype(bf), w3_ref[...],
                  preferred_element_type=jnp.float32) + b3_ref[...]
    o_ref[...] = (h1 + mlp).astype(o_ref.dtype)


def block_forward(h, p, eps=1e-5):
    # h: (B, L, E); returns (B, L, E)
    B, L, E = h.shape
    Lm = L + 1
    Lm_pad = _round_up(Lm, 8)
    n_chunks = Lm_pad // 8
    mx = p["mixer"]
    S, Din = mx["A_T"].shape
    R = mx["dt_proj_w"].shape[0]
    K = mx["conv_w"].shape[0]
    H = p["mlp"]["w1"].shape[1]
    bf = jnp.bfloat16

    wi = mx["in_proj_w"].astype(bf)                               # (E, 2*Din), merged
    wxdt = mx["x_proj_w"][:, :R].astype(bf)                       # (Din, R)
    wxbc = jnp.transpose(mx["x_proj_w"][:, R:]).astype(bf)        # (2S, Din), B|C rows
    wo = mx["out_proj_w"].astype(bf)
    w12 = jnp.concatenate([p["mlp"]["w1"], p["mlp"]["w2"]], axis=1).astype(bf)  # (E, 2H)
    b12 = jnp.concatenate([p["mlp"]["b1"], p["mlp"]["b2"]]).reshape(1, 2 * H)
    w3 = p["mlp"]["w3"].astype(bf)

    def full(shape):
        return pl.BlockSpec(shape, lambda b: (0, 0))

    # TODO(synk): at production sizes (E~768, L~200) single-buffer the constant weight
    # BlockSpecs (pl.Buffered(1)) or split mixer / MLP into two pallas_calls to fit the
    # 64 MiB VMEM of v7x; also block over batch (Bblk>1) to feed the MXU taller M.
    return pl.pallas_call(
        functools.partial(_block_kernel, eps),
        out_shape=jax.ShapeDtypeStruct((B, L, E), jnp.float32),
        grid=(B,),
        in_specs=[
            pl.BlockSpec((None, L, E), lambda b: (b, 0, 0)),   # h
            full((1, E)), full((1, E)),                         # norm gamma / beta
            full((E, 2 * Din)),                                 # in_proj (merged)
            full((K, Din)), full((1, Din)),                     # conv w / b
            full((Din, R)), full((2 * S, Din)),                 # x_proj dt / (B|C)^T
            full((R, Din)), full((1, Din)),                     # dt_proj w / b
            full((S, Din)), full((1, Din)),                     # A, D
            full((Din, E)),                                     # out_proj
            full((1, E)), full((1, E)),                         # norm_mlp gamma / beta
            full((E, 2 * H)), full((1, 2 * H)),                 # w1|w2 merged, b1|b2
            full((H, E)), full((1, E)),                         # w3, b3
        ],
        out_specs=pl.BlockSpec((None, L, E), lambda b: (b, 0, 0)),
        scratch_shapes=[
            pltpu.VMEM((Lm_pad, E), jnp.float32),               # xm_s (mean + tokens)
            pltpu.VMEM((Lm_pad + K - 1, Din), jnp.float32),     # pad_s (causal conv pad)
            pltpu.VMEM((Lm_pad, Din), jnp.float32),             # dt_s
            pltpu.VMEM((Lm_pad, Din), jnp.float32),             # dtu_s
            pltpu.VMEM((n_chunks, S, 8), jnp.float32),          # bt_s (chunk-major B^T)
            pltpu.VMEM((n_chunks, S, 8), jnp.float32),          # ct_s (chunk-major C^T)
            pltpu.VMEM((Lm_pad, Din), jnp.float32),             # ys_s (scan output)
        ],
        compiler_params=pltpu.CompilerParams(
            dimension_semantics=("parallel",),
            vmem_limit_bytes=64 * 1024 * 1024,
        ),
    )(
        h.astype(jnp.float32),
        p["norm_g"].reshape(1, E), p["norm_b"].reshape(1, E),
        wi,
        mx["conv_w"], mx["conv_b"].reshape(1, Din),
        wxdt, wxbc,
        mx["dt_proj_w"], mx["dt_proj_b"].reshape(1, Din),
        mx["A_T"], mx["D"].reshape(1, Din),
        wo,
        p["norm_mlp_g"].reshape(1, E), p["norm_mlp_b"].reshape(1, E),
        w12, b12,
        w3, p["mlp"]["b3"].reshape(1, E),
    )


# ---------------------------------------------------------------------------
# Adventurer forward
# ---------------------------------------------------------------------------
def _flip_tokens(x):
    # reverse all tokens except the last (cls); an involution
    return jnp.concatenate([x[:, :-1][:, ::-1], x[:, -1:]], axis=1)


@functools.partial(jax.jit, static_argnames=("patch_size",))
def adventurer_forward(x_img, params, *, patch_size):
    B, C, H, W = x_img.shape
    p = patch_size
    E = params["cls_token"].shape[-1]
    nH, nW = H // p, W // p

    # patch extraction (glue): NCHW -> (B*nH*nW, C*p*p), channel-major within a patch,
    # matching Conv2d(kernel=stride=patch) followed by flatten(2).transpose(1, 2).
    patches = x_img.reshape(B, C, nH, p, nW, p)
    patches = jnp.transpose(patches, (0, 2, 4, 1, 3, 5)).reshape(B * nH * nW, C * p * p)
    x = dense(patches, params["patch_w"], params["patch_b"]).reshape(B, nH * nW, E)

    cls = jnp.broadcast_to(params["cls_token"], (B, 1, E))
    x = jnp.concatenate([x, cls], axis=1)                 # cls token appended at the END
    x = x + params["pos_embed"]                           # pos_drop = identity (inference)

    for n, lp in enumerate(params["layers"]):
        flip = (n // 2 == 1)                               # matches the reference schedule
        if flip:
            # Block(h, flip=True) == flip(Block(flip(h), flip=False)): LayerNorm / MLP
            # are token-wise and the mean token is permutation-invariant, so the flip
            # becomes two cheap slice-reverses instead of (L,L) permutation matmuls.
            x = _flip_tokens(x)
        x = block_forward(x, lp)
        if flip:
            x = _flip_tokens(x)

    # norm_f is row-wise, so norm_f(x)[:, -1] == norm_f(x[:, -1]); fuse LN + head
    return ln_head(x[:, -1], params["norm_f_g"], params["norm_f_b"],
                   params["head_w"], params["head_b"])


# ---------------------------------------------------------------------------
# deterministic parameter init (synthetic; shapes follow the module's __init__)
# ---------------------------------------------------------------------------
def init_params(key, *, img_size=16, patch_size=8, depth=4, embed_dim=32,
                channels=3, num_classes=10, mamba_expand=2, mamba_d_state=8, d_conv=4):
    E = embed_dim
    Din = mamba_expand * E
    S = mamba_d_state
    dt_rank = math.ceil(E / 16)
    H_mlp = int(E * 2.5)
    num_patches = ((img_size - patch_size) // patch_size + 1) ** 2

    keys = iter(jax.random.split(key, 16 + depth * 16))

    def nrm(shape, std=0.02):
        return jax.random.normal(next(keys), shape, jnp.float32) * std

    params = {
        "patch_w": nrm((channels * patch_size * patch_size, E)),
        "patch_b": jnp.zeros((E,), jnp.float32),
        "cls_token": nrm((1, 1, E)),
        "pos_embed": nrm((1, num_patches + 1, E)),
        "head_w": nrm((E, num_classes)),
        "head_b": jnp.zeros((num_classes,), jnp.float32),
        "norm_f_g": jnp.ones((E,), jnp.float32),
        "norm_f_b": jnp.zeros((E,), jnp.float32),
        "layers": [],
    }

    # canonical Mamba state-space inits: A = -(1..S), D = 1, dt bias = inv-softplus(dt0)
    A_T = -jnp.tile(jnp.arange(1, S + 1, dtype=jnp.float32)[:, None], (1, Din))  # (S, Din)
    dt0 = jnp.exp(jnp.linspace(math.log(1e-3), math.log(1e-1), Din)).astype(jnp.float32)
    dt_bias = dt0 + jnp.log(-jnp.expm1(-dt0))

    for _ in range(depth):
        mixer = {
            "in_proj_w": nrm((E, 2 * Din)),
            "conv_w": nrm((d_conv, Din), std=0.1),
            "conv_b": jnp.zeros((Din,), jnp.float32),
            "x_proj_w": nrm((Din, dt_rank + 2 * S)),
            "dt_proj_w": nrm((dt_rank, Din), std=dt_rank ** -0.5),
            "dt_proj_b": dt_bias,
            "A_T": A_T,
            "D": jnp.ones((Din,), jnp.float32),
            "out_proj_w": nrm((Din, E)),
        }
        mlp = {
            "w1": nrm((E, H_mlp)), "b1": jnp.zeros((H_mlp,), jnp.float32),
            "w2": nrm((E, H_mlp)), "b2": jnp.zeros((H_mlp,), jnp.float32),
            "w3": nrm((H_mlp, E)), "b3": jnp.zeros((E,), jnp.float32),
        }
        params["layers"].append({
            "norm_g": jnp.ones((E,), jnp.float32),
            "norm_b": jnp.zeros((E,), jnp.float32),
            "norm_mlp_g": jnp.ones((E,), jnp.float32),
            "norm_mlp_b": jnp.zeros((E,), jnp.float32),
            "mixer": mixer,
            "mlp": mlp,
        })
    return params


# TODO(synk): nn.Dropout / DropPath are stochastic at train time; this implements
# inference semantics (identity), matching the deterministic forward pass.

if __name__ == "__main__":
    key = jax.random.PRNGKey(0)
    pkey, xkey = jax.random.split(key)
    params = init_params(pkey, img_size=16, patch_size=8, depth=4, embed_dim=32,
                         channels=3, num_classes=10, mamba_expand=2, mamba_d_state=8)
    x = jax.random.normal(xkey, (2, 3, 16, 16), jnp.float32)

    logits = adventurer_forward(x, params, patch_size=8)
    jax.block_until_ready(logits)
    assert logits.shape == (2, 10), logits.shape
    assert bool(jnp.all(jnp.isfinite(logits)))
    print("KERNEL_OK")
</pallas_src>

<mosaic_0001>
module attributes {stable_mosaic.version = 11 : i64} {
  func.func @_dense_kernel(%arg0: i32, %arg1: memref<8x192xbf16, #tpu.memory_space<vmem>>, %arg2: memref<192x32xbf16, #tpu.memory_space<vmem>>, %arg3: memref<1x32xf32, #tpu.memory_space<vmem>>, %arg4: memref<8x32xf32, #tpu.memory_space<vmem>>) attributes {dimension_semantics = [#tpu.dimension_semantics<parallel>], iteration_bounds = array<i64: 1>, scalar_prefetch = 0 : i64, scratch_operands = 0 : i64, tpu.core_type = #tpu.core_type<tc>, window_params = [{transform_indices = @transform_0, window_bounds = array<i64: 8, 192>}, {pipeline_mode = #tpu.pipeline_mode<synchronous>, transform_indices = @transform_1, window_bounds = array<i64: 192, 32>}, {pipeline_mode = #tpu.pipeline_mode<synchronous>, transform_indices = @transform_2, window_bounds = array<i64: 1, 32>}, {transform_indices = @transform_3, window_bounds = array<i64: 8, 32>}]} {
    %c0 = arith.constant 0 : index
    %c0_0 = arith.constant 0 : index
    %0 = vector.load %arg1[%c0, %c0_0] : memref<8x192xbf16, #tpu.memory_space<vmem>>, vector<8x192xbf16>
    %c0_1 = arith.constant 0 : index
    %c0_2 = arith.constant 0 : index
    %1 = vector.load %arg2[%c0_1, %c0_2] : memref<192x32xbf16, #tpu.memory_space<vmem>>, vector<192x32xbf16>
    %cst = arith.constant dense<0.000000e+00> : vector<8x32xf32>
    %2 = tpu.matmul %0, %1, %cst {dimension_numbers = #tpu.dot_dimension_numbers<[1], [0], [0], [1], [0, 0, 1, 1], [], []>} : vector<8x192xbf16>, vector<192x32xbf16>, vector<8x32xf32> -> vector<8x32xf32>
    %c0_3 = arith.constant 0 : index
    %c0_4 = arith.constant 0 : index
    %3 = vector.load %arg3[%c0_3, %c0_4] : memref<1x32xf32, #tpu.memory_space<vmem>>, vector<1x32xf32>
    %4 = vector.broadcast %3 : vector<1x32xf32> to vector<8x32xf32>
    %5 = arith.addf %2, %4 : vector<8x32xf32>
    %c0_5 = arith.constant 0 : index
    %c0_6 = arith.constant 0 : index
    %6 = vector.load %arg4[%c0_5, %c0_6] : memref<8x32xf32, #tpu.memory_space<vmem>>, vector<8x32xf32>
    tpu.vector_store %arg4[%c0_5, %c0_6], %5 {strides = array<i32>} : memref<8x32xf32, #tpu.memory_space<vmem>>, vector<8x32xf32>,
    return
  }
  func.func @transform_0(%arg0: i32) -> (i32, i32) {
    %c0_i32 = arith.constant 0 : i32
    %c0_i32_0 = arith.constant 0 : i32
    return %arg0, %c0_i32 : i32, i32
  }
  func.func @transform_1(%arg0: i32) -> (i32, i32) {
    %c0_i32 = arith.constant 0 : i32
    %c0_i32_0 = arith.constant 0 : i32
    %c0_i32_1 = arith.constant 0 : i32
    return %c0_i32, %c0_i32_0 : i32, i32
  }
  func.func @transform_2(%arg0: i32) -> (i32, i32) {
    %c0_i32 = arith.constant 0 : i32
    %c0_i32_0 = arith.constant 0 : i32
    %c0_i32_1 = arith.constant 0 : i32
    return %c0_i32, %c0_i32_0 : i32, i32
  }
  func.func @transform_3(%arg0: i32) -> (i32, i32) {
    %c0_i32 = arith.constant 0 : i32
    %c0_i32_0 = arith.constant 0 : i32
    return %arg0, %c0_i32 : i32, i32
  }
}

module attributes {stable_mosaic.version = 11 : i64} {
  func.func @_block_kernel(%arg0: i32, %arg1: memref<1x5x32xf32, #tpu.memory_space<vmem>>, %arg2: memref<1x32xf32, #tpu.memory_space<vmem>>, %arg3: memref<1x32xf32, #tpu.memory_space<vmem>>, %arg4: memref<32x128xbf16, #tpu.memory_space<vmem>>, %arg5: memref<4x64xf32, #tpu.memory_space<vmem>>, %arg6: memref<1x64xf32, #tpu.memory_space<vmem>>, %arg7: memref<64x2xbf16, #tpu.memory_space<vmem>>, %arg8: memref<16x64xbf16, #tpu.memory_space<vmem>>, %arg9: memref<2x64xf32, #tpu.memory_space<vmem>>, %arg10: memref<1x64xf32, #tpu.memory_space<vmem>>, %arg11: memref<8x64xf32, #tpu.memory_space<vmem>>, %arg12: memref<1x64xf32, #tpu.memory_space<vmem>>, %arg13: memref<64x32xbf16, #tpu.memory_space<vmem>>, %arg14: memref<1x32xf32, #tpu.memory_space<vmem>>, %arg15: memref<1x32xf32, #tpu.memory_space<vmem>>, %arg16: memref<32x160xbf16, #tpu.memory_space<vmem>>, %arg17: memref<1x160xf32, #tpu.memory_space<vmem>>, %arg18: memref<80x32xbf16, #tpu.memory_space<vmem>>, %arg19: memref<1x32xf32, #tpu.memory_space<vmem>>, %arg20: memref<1x5x32xf32, #tpu.memory_space<vmem>>, %arg21: memref<8x32xf32, #tpu.memory_space<vmem>>, %arg22: memref<11x64xf32, #tpu.memory_space<vmem>>, %arg23: memref<8x64xf32, #tpu.memory_space<vmem>>, %arg24: memref<8x64xf32, #tpu.memory_space<vmem>>, %arg25: memref<1x8x8xf32, #tpu.memory_space<vmem>>, %arg26: memref<1x8x8xf32, #tpu.memory_space<vmem>>, %arg27: memref<8x64xf32, #tpu.memory_space<vmem>>) attributes {dimension_semantics = [#tpu.dimension_semantics<parallel>], iteration_bounds = array<i64: 2>, scalar_prefetch = 0 : i64, scratch_operands = 7 : i64, tpu.core_type = #tpu.core_type<tc>, window_params = [{transform_indices = @transform_0, window_bounds = array<i64: 1, 5, 32>}, {pipeline_mode = #tpu.pipeline_mode<synchronous>, transform_indices = @transform_1, window_bounds = array<i64: 1, 32>}, {pipeline_mode = #tpu.pipeline_mode<synchronous>, transform_indices = @transform_2, window_bounds = array<i64: 1, 32>}, {pipeline_mode = #tpu.pipeline_mode<synchronous>, transform_indices = @transform_3, window_bounds = array<i64: 32, 128>}, {pipeline_mode = #tpu.pipeline_mode<synchronous>, transform_indices = @transform_4, window_bounds = array<i64: 4, 64>}, {pipeline_mode = #tpu.pipeline_mode<synchronous>, transform_indices = @transform_5, window_bounds = array<i64: 1, 64>}, {pipeline_mode = #tpu.pipeline_mode<synchronous>, transform_indices = @transform_6, window_bounds = array<i64: 64, 2>}, {pipeline_mode = #tpu.pipeline_mode<synchronous>, transform_indices = @transform_7, window_bounds = array<i64: 16, 64>}, {pipeline_mode = #tpu.pipeline_mode<synchronous>, transform_indices = @transform_8, window_bounds = array<i64: 2, 64>}, {pipeline_mode = #tpu.pipeline_mode<synchronous>, transform_indices = @transform_9, window_bounds = array<i64: 1, 64>}, {pipeline_mode = #tpu.pipeline_mode<synchronous>, transform_indices = @transform_10, window_bounds = array<i64: 8, 64>}, {pipeline_mode = #tpu.pipeline_mode<synchronous>, transform_indices = @transform_11, window_bounds = array<i64: 1, 64>}, {pipeline_mode = #tpu.pipeline_mode<synchronous>, transform_indices = @transform_12, window_bounds = array<i64: 64, 32>}, {pipeline_mode = #tpu.pipeline_mode<synchronous>, transform_indices = @transform_13, window_bounds = array<i64: 1, 32>}, {pipeline_mode = #tpu.pipeline_mode<synchronous>, transform_indices = @transform_14, window_bounds = array<i64: 1, 32>}, {pipeline_mode = #tpu.pipeline_mode<synchronous>, transform_indices = @transform_15, window_bounds = array<i64: 32, 160>}, {pipeline_mode = #tpu.pipeline_mode<synchronous>, transform_indices = @transform_16, window_bounds = array<i64: 1, 160>}, {pipeline_mode = #tpu.pipeline_mode<synchronous>, transform_indices = @transform_17, window_bounds = array<i64: 80, 32>}, {pipeline_mode = #tpu.pipeline_mode<synchronous>, transform_indices = @transform_18, window_bounds = array<i64: 1, 32>}, {transform_indices = @transform_19, window_bounds = array<i64: 1, 5, 32>}]} {
    %c0 = arith.constant 0 : index
    %c0_0 = arith.constant 0 : index
    %c0_1 = arith.constant 0 : index
    %0 = vector.load %arg1[%c0, %c0_0, %c0_1] : memref<1x5x32xf32, #tpu.memory_space<vmem>>, vector<1x5x32xf32>
    %1 = vector.shape_cast %0 : vector<1x5x32xf32> to vector<5x32xf32>
    %c0_2 = arith.constant 0 : index
    %c0_3 = arith.constant 0 : index
    %2 = vector.load %arg2[%c0_2, %c0_3] : memref<1x32xf32, #tpu.memory_space<vmem>>, vector<1x32xf32>
    %c0_4 = arith.constant 0 : index
    %c0_5 = arith.constant 0 : index
    %3 = vector.load %arg3[%c0_4, %c0_5] : memref<1x32xf32, #tpu.memory_space<vmem>>, vector<1x32xf32>
    %cst = arith.constant dense<0.000000e+00> : vector<5xf32>
    %4 = vector.multi_reduction <add>, %1, %cst [1] : vector<5x32xf32> to vector<5xf32>
    %5 = vector.shape_cast %4 : vector<5xf32> to vector<5x1xf32>
    %cst_6 = arith.constant 3.200000e+01 : f32
    %6 = vector.broadcast %cst_6 : f32 to vector<5x1xf32>
    %7 = arith.divf %5, %6 : vector<5x1xf32>
    %8 = vector.broadcast %7 : vector<5x1xf32> to vector<5x32xf32>
    %9 = arith.subf %1, %8 : vector<5x32xf32>
    %10 = arith.mulf %9, %9 : vector<5x32xf32>
    %cst_7 = arith.constant dense<0.000000e+00> : vector<5xf32>
    %11 = vector.multi_reduction <add>, %10, %cst_7 [1] : vector<5x32xf32> to vector<5xf32>
    %12 = vector.shape_cast %11 : vector<5xf32> to vector<5x1xf32>
    %cst_8 = arith.constant 3.200000e+01 : f32
    %13 = vector.broadcast %cst_8 : f32 to vector<5x1xf32>
    %14 = arith.divf %12, %13 : vector<5x1xf32>
    %cst_9 = arith.constant 9.99999974E-6 : f32
    %15 = vector.broadcast %cst_9 : f32 to vector<5x1xf32>
    %16 = arith.addf %14, %15 : vector<5x1xf32>
    %17 = math.rsqrt %16 : vector<5x1xf32>
    %18 = vector.broadcast %17 : vector<5x1xf32> to vector<5x32xf32>
    %19 = arith.mulf %9, %18 : vector<5x32xf32>
    %20 = vector.broadcast %2 : vector<1x32xf32> to vector<5x32xf32>
    %21 = arith.mulf %19, %20 : vector<5x32xf32>
    %22 = vector.broadcast %3 : vector<1x32xf32> to vector<5x32xf32>
    %23 = arith.addf %21, %22 : vector<5x32xf32>
    %cst_10 = arith.constant dense<0.000000e+00> : vector<32xf32>
    %24 = vector.multi_reduction <add>, %23, %cst_10 [0] : vector<5x32xf32> to vector<32xf32>
    %25 = vector.shape_cast %24 : vector<32xf32> to vector<1x32xf32>
    %cst_11 = arith.constant 5.000000e+00 : f32
    %26 = vector.broadcast %cst_11 : f32 to vector<1x32xf32>
    %27 = arith.divf %25, %26 : vector<1x32xf32>
    %c0_12 = arith.constant 0 : index
    %c0_13 = arith.constant 0 : index
    %28 = vector.load %arg21[%c0_12, %c0_13] : memref<8x32xf32, #tpu.memory_space<vmem>>, vector<1x32xf32>
    tpu.vector_store %arg21[%c0_12, %c0_13], %27 {strides = array<i32>} : memref<8x32xf32, #tpu.memory_space<vmem>>, vector<1x32xf32>,
    %c1 = arith.constant 1 : index
    %c0_14 = arith.constant 0 : index
    %29 = vector.load %arg21[%c1, %c0_14] : memref<8x32xf32, #tpu.memory_space<vmem>>, vector<5x32xf32>
    tpu.vector_store %arg21[%c1, %c0_14], %23 {strides = array<i32>} : memref<8x32xf32, #tpu.memory_space<vmem>>, vector<5x32xf32>,
    %cst_15 = arith.constant 0.000000e+00 : f32
    %30 = vector.broadcast %cst_15 : f32 to vector<2x32xf32>
    %c6 = arith.constant 6 : index
    %c0_16 = arith.constant 0 : index
    %31 = vector.load %arg21[%c6, %c0_16] : memref<8x32xf32, #tpu.memory_space<vmem>>, vector<2x32xf32>
    tpu.vector_store %arg21[%c6, %c0_16], %30 {strides = array<i32>} : memref<8x32xf32, #tpu.memory_space<vmem>>, vector<2x32xf32>,
    %c0_17 = arith.constant 0 : index
    %c0_18 = arith.constant 0 : index
    %32 = vector.load %arg21[%c0_17, %c0_18] : memref<8x32xf32, #tpu.memory_space<vmem>>, vector<8x32xf32>
    %33 = arith.truncf %32 : vector<8x32xf32> to vector<8x32xbf16>
    %c0_19 = arith.constant 0 : index
    %c0_20 = arith.constant 0 : index
    %34 = vector.load %arg4[%c0_19, %c0_20] : memref<32x128xbf16, #tpu.memory_space<vmem>>, vector<32x128xbf16>
    %cst_21 = arith.constant dense<0.000000e+00> : vector<8x128xf32>
    %35 = tpu.matmul %33, %34, %cst_21 {dimension_numbers = #tpu.dot_dimension_numbers<[1], [0], [0], [1], [0, 0, 1, 1], [], []>} : vector<8x32xbf16>, vector<32x128xbf16>, vector<8x128xf32> -> vector<8x128xf32>
    %36 = vector.extract_strided_slice %35 {offsets = [0, 0], sizes = [8, 64], strides = [1, 1]} : vector<8x128xf32> to vector<8x64xf32>
    %37 = vector.extract_strided_slice %35 {offsets = [0, 64], sizes = [8, 64], strides = [1, 1]} : vector<8x128xf32> to vector<8x64xf32>
    %cst_22 = arith.constant 0.000000e+00 : f32
    %38 = vector.broadcast %cst_22 : f32 to vector<3x64xf32>
    %c0_23 = arith.constant 0 : index
    %c0_24 = arith.constant 0 : index
    %39 = vector.load %arg22[%c0_23, %c0_24] : memref<11x64xf32, #tpu.memory_space<vmem>>, vector<3x64xf32>
    tpu.vector_store %arg22[%c0_23, %c0_24], %38 {strides = array<i32>} : memref<11x64xf32, #tpu.memory_space<vmem>>, vector<3x64xf32>,
    %c3 = arith.constant 3 : index
    %c0_25 = arith.constant 0 : index
    %40 = vector.load %arg22[%c3, %c0_25] : memref<11x64xf32, #tpu.memory_space<vmem>>, vector<8x64xf32>
    tpu.vector_store %arg22[%c3, %c0_25], %36 {strides = array<i32>} : memref<11x64xf32, #tpu.memory_space<vmem>>, vector<8x64xf32>,
    %cst_26 = arith.constant 0.000000e+00 : f32
    %41 = vector.broadcast %cst_26 : f32 to vector<8x64xf32>
    %c0_27 = arith.constant 0 : index
    %c0_28 = arith.constant 0 : index
    %42 = vector.load %arg22[%c0_27, %c0_28] : memref<11x64xf32, #tpu.memory_space<vmem>>, vector<8x64xf32>
    %c0_29 = arith.constant 0 : index
    %c0_30 = arith.constant 0 : index
    %43 = vector.load %arg5[%c0_29, %c0_30] : memref<4x64xf32, #tpu.memory_space<vmem>>, vector<1x64xf32>
    %44 = vector.broadcast %43 : vector<1x64xf32> to vector<8x64xf32>
    %45 = arith.mulf %42, %44 : vector<8x64xf32>
    %46 = arith.addf %41, %45 : vector<8x64xf32>
    %c1_31 = arith.constant 1 : index
    %c0_32 = arith.constant 0 : index
    %47 = vector.load %arg22[%c1_31, %c0_32] : memref<11x64xf32, #tpu.memory_space<vmem>>, vector<8x64xf32>
    %c1_33 = arith.constant 1 : index
    %c0_34 = arith.constant 0 : index
    %48 = vector.load %arg5[%c1_33, %c0_34] : memref<4x64xf32, #tpu.memory_space<vmem>>, vector<1x64xf32>
    %49 = vector.broadcast %48 : vector<1x64xf32> to vector<8x64xf32>
    %50 = arith.mulf %47, %49 : vector<8x64xf32>
    %51 = arith.addf %46, %50 : vector<8x64xf32>
    %c2 = arith.constant 2 : index
    %c0_35 = arith.constant 0 : index
    %52 = vector.load %arg22[%c2, %c0_35] : memref<11x64xf32, #tpu.memory_space<vmem>>, vector<8x64xf32>
    %c2_36 = arith.constant 2 : index
    %c0_37 = arith.constant 0 : index
    %53 = vector.load %arg5[%c2_36, %c0_37] : memref<4x64xf32, #tpu.memory_space<vmem>>, vector<1x64xf32>
    %54 = vector.broadcast %53 : vector<1x64xf32> to vector<8x64xf32>
    %55 = arith.mulf %52, %54 : vector<8x64xf32>
    %56 = arith.addf %51, %55 : vector<8x64xf32>
    %c3_38 = arith.constant 3 : index
    %c0_39 = arith.constant 0 : index
    %57 = vector.load %arg22[%c3_38, %c0_39] : memref<11x64xf32, #tpu.memory_space<vmem>>, vector<8x64xf32>
    %c3_40 = arith.constant 3 : index
    %c0_41 = arith.constant 0 : index
    %58 = vector.load %arg5[%c3_40, %c0_41] : memref<4x64xf32, #tpu.memory_space<vmem>>, vector<1x64xf32>
    %59 = vector.broadcast %58 : vector<1x64xf32> to vector<8x64xf32>
    %60 = arith.mulf %57, %59 : vector<8x64xf32>
    %61 = arith.addf %56, %60 : vector<8x64xf32>
    %c0_42 = arith.constant 0 : index
    %c0_43 = arith.constant 0 : index
    %62 = vector.load %arg6[%c0_42, %c0_43] : memref<1x64xf32, #tpu.memory_space<vmem>>, vector<1x64xf32>
    %63 = vector.broadcast %62 : vector<1x64xf32> to vector<8x64xf32>
    %64 = arith.addf %61, %63 : vector<8x64xf32>
    %cst_44 = arith.constant 0.000000e+00 : f32
    %65 = vector.broadcast %cst_44 : f32 to vector<8x64xf32>
    %66 = arith.subf %65, %64 : vector<8x64xf32>
    %67 = math.exp %66 : vector<8x64xf32>
    %cst_45 = arith.constant 1.000000e+00 : f32
    %68 = vector.broadcast %cst_45 : f32 to vector<8x64xf32>
    %69 = arith.addf %68, %67 : vector<8x64xf32>
    %cst_46 = arith.constant 1.000000e+00 : f32
    %70 = vector.broadcast %cst_46 : f32 to vector<8x64xf32>
    %71 = arith.divf %70, %69 : vector<8x64xf32>
    %72 = arith.mulf %64, %71 : vector<8x64xf32>
    %73 = arith.truncf %72 : vector<8x64xf32> to vector<8x64xbf16>
    %c0_47 = arith.constant 0 : index
    %c0_48 = arith.constant 0 : index
    %74 = vector.load %arg7[%c0_47, %c0_48] : memref<64x2xbf16, #tpu.memory_space<vmem>>, vector<64x2xbf16>
    %cst_49 = arith.constant dense<0.000000e+00> : vector<8x2xf32>
    %75 = tpu.matmul %73, %74, %cst_49 {dimension_numbers = #tpu.dot_dimension_numbers<[1], [0], [0], [1], [0, 0, 1, 1], [], []>} : vector<8x64xbf16>, vector<64x2xbf16>, vector<8x2xf32> -> vector<8x2xf32>
    %c0_50 = arith.constant 0 : index
    %c0_51 = arith.constant 0 : index
    %76 = vector.load %arg9[%c0_50, %c0_51] : memref<2x64xf32, #tpu.memory_space<vmem>>, vector<2x64xf32>
    %cst_52 = arith.constant dense<0.000000e+00> : vector<8x64xf32>
    %77 = tpu.matmul %75, %76, %cst_52 {dimension_numbers = #tpu.dot_dimension_numbers<[1], [0], [0], [1], [0, 0, 1, 1], [], []>} : vector<8x2xf32>, vector<2x64xf32>, vector<8x64xf32> -> vector<8x64xf32>
    %c0_53 = arith.constant 0 : index
    %c0_54 = arith.constant 0 : index
    %78 = vector.load %arg10[%c0_53, %c0_54] : memref<1x64xf32, #tpu.memory_space<vmem>>, vector<1x64xf32>
    %79 = vector.broadcast %78 : vector<1x64xf32> to vector<8x64xf32>
    %80 = arith.addf %77, %79 : vector<8x64xf32>
    %cst_55 = arith.constant 0.000000e+00 : f32
    %81 = vector.broadcast %cst_55 : f32 to vector<8x64xf32>
    %82 = arith.maximumf %80, %81 : vector<8x64xf32>
    %83 = math.absf %80 : vector<8x64xf32>
    %cst_56 = arith.constant 0.000000e+00 : f32
    %84 = vector.broadcast %cst_56 : f32 to vector<8x64xf32>
    %85 = arith.subf %84, %83 : vector<8x64xf32>
    %86 = math.exp %85 : vector<8x64xf32>
    %cst_57 = arith.constant 1.000000e+00 : f32
    %87 = vector.broadcast %cst_57 : f32 to vector<8x64xf32>
    %88 = arith.addf %87, %86 : vector<8x64xf32>
    %89 = math.log %88 : vector<8x64xf32>
    %90 = arith.addf %82, %89 : vector<8x64xf32>
    %c0_58 = arith.constant 0 : index
    %c0_59 = arith.constant 0 : index
    %91 = vector.load %arg23[%c0_58, %c0_59] : memref<8x64xf32, #tpu.memory_space<vmem>>, vector<8x64xf32>
    tpu.vector_store %arg23[%c0_58, %c0_59], %90 {strides = array<i32>} : memref<8x64xf32, #tpu.memory_space<vmem>>, vector<8x64xf32>,
    %92 = arith.mulf %90, %72 : vector<8x64xf32>
    %c0_60 = arith.constant 0 : index
    %c0_61 = arith.constant 0 : index
    %93 = vector.load %arg24[%c0_60, %c0_61] : memref<8x64xf32, #tpu.memory_space<vmem>>, vector<8x64xf32>
    tpu.vector_store %arg24[%c0_60, %c0_61], %92 {strides = array<i32>} : memref<8x64xf32, #tpu.memory_space<vmem>>, vector<8x64xf32>,
    %c0_62 = arith.constant 0 : index
    %c0_63 = arith.constant 0 : index
    %94 = vector.load %arg8[%c0_62, %c0_63] : memref<16x64xbf16, #tpu.memory_space<vmem>>, vector<16x64xbf16>
    %cst_64 = arith.constant dense<0.000000e+00> : vector<16x8xf32>
    %95 = tpu.matmul %94, %73, %cst_64 {dimension_numbers = #tpu.dot_dimension_numbers<[1], [1], [0], [0], [0, 0, 1, 0], [], []>} : vector<16x64xbf16>, vector<8x64xbf16>, vector<16x8xf32> -> vector<16x8xf32>
    %96 = vector.extract_strided_slice %95 {offsets = [0, 0], sizes = [8, 8], strides = [1, 1]} : vector<16x8xf32> to vector<8x8xf32>
    %c0_65 = arith.constant 0 : index
    %c0_66 = arith.constant 0 : index
    %c0_67 = arith.constant 0 : index
    %97 = vector.load %arg25[%c0_65, %c0_66, %c0_67] : memref<1x8x8xf32, #tpu.memory_space<vmem>>, vector<1x8x8xf32>
    %98 = vector.shape_cast %97 : vector<1x8x8xf32> to vector<8x8xf32>
    %99 = vector.shape_cast %96 : vector<8x8xf32> to vector<1x8x8xf32>
    tpu.vector_store %arg25[%c0_65, %c0_66, %c0_67], %99 {strides = array<i32>} : memref<1x8x8xf32, #tpu.memory_space<vmem>>, vector<1x8x8xf32>,
    %100 = vector.extract_strided_slice %95 {offsets = [8, 0], sizes = [8, 8], strides = [1, 1]} : vector<16x8xf32> to vector<8x8xf32>
    %c0_68 = arith.constant 0 : index
    %c0_69 = arith.constant 0 : index
    %c0_70 = arith.constant 0 : index
    %101 = vector.load %arg26[%c0_68, %c0_69, %c0_70] : memref<1x8x8xf32, #tpu.memory_space<vmem>>, vector<1x8x8xf32>
    %102 = vector.shape_cast %101 : vector<1x8x8xf32> to vector<8x8xf32>
    %103 = vector.shape_cast %100 : vector<8x8xf32> to vector<1x8x8xf32>
    tpu.vector_store %arg26[%c0_68, %c0_69, %c0_70], %103 {strides = array<i32>} : memref<1x8x8xf32, #tpu.memory_space<vmem>>, vector<1x8x8xf32>,
    %c0_71 = arith.constant 0 : index
    %c0_72 = arith.constant 0 : index
    %104 = vector.load %arg11[%c0_71, %c0_72] : memref<8x64xf32, #tpu.memory_space<vmem>>, vector<8x64xf32>
    %105 = tpu.iota {dimensions = array<i32: 0>} : vector<8x1xi32>
    %cst_73 = arith.constant 0.000000e+00 : f32
    %106 = vector.broadcast %cst_73 : f32 to vector<8x64xf32>
    %c0_i32 = arith.constant 0 : i32
    %c8_i32 = arith.constant 8 : i32
    %107 = arith.muli %c0_i32, %c8_i32 : i32
    %108 = tpu.assume_multiple %107, 8 : i32
    %109 = arith.index_cast %108 : i32 to index
    %c0_74 = arith.constant 0 : index
    %110 = vector.load %arg23[%109, %c0_74] : memref<8x64xf32, #tpu.memory_space<vmem>>, vector<8x64xf32>
    %111 = arith.index_cast %108 : i32 to index
    %c0_75 = arith.constant 0 : index
    %112 = vector.load %arg24[%111, %c0_75] : memref<8x64xf32, #tpu.memory_space<vmem>>, vector<8x64xf32>
    %113 = arith.index_cast %c0_i32 : i32 to index
    %c0_76 = arith.constant 0 : index
    %c0_77 = arith.constant 0 : index
    %114 = vector.load %arg25[%113, %c0_76, %c0_77] : memref<1x8x8xf32, #tpu.memory_space<vmem>>, vector<1x8x8xf32>
    %115 = vector.shape_cast %114 : vector<1x8x8xf32> to vector<8x8xf32>
    %116 = arith.index_cast %c0_i32 : i32 to index
    %c0_78 = arith.constant 0 : index
    %c0_79 = arith.constant 0 : index
    %117 = vector.load %arg26[%116, %c0_78, %c0_79] : memref<1x8x8xf32, #tpu.memory_space<vmem>>, vector<1x8x8xf32>
    %118 = vector.shape_cast %117 : vector<1x8x8xf32> to vector<8x8xf32>
    %cst_80 = arith.constant 0.000000e+00 : f32
    %119 = vector.broadcast %cst_80 : f32 to vector<8x64xf32>
    %120 = vector.extract_strided_slice %110 {offsets = [0, 0], sizes = [1, 64], strides = [1, 1]} : vector<8x64xf32> to vector<1x64xf32>
    %121 = vector.broadcast %120 : vector<1x64xf32> to vector<8x64xf32>
    %122 = arith.mulf %121, %104 : vector<8x64xf32>
    %123 = math.exp %122 : vector<8x64xf32>
    %124 = arith.mulf %123, %106 : vector<8x64xf32>
    %125 = vector.extract_strided_slice %115 {offsets = [0, 0], sizes = [8, 1], strides = [1, 1]} : vector<8x8xf32> to vector<8x1xf32>
    %126 = vector.extract_strided_slice %112 {offsets = [0, 0], sizes = [1, 64], strides = [1, 1]} : vector<8x64xf32> to vector<1x64xf32>
    %127 = vector.broadcast %125 : vector<8x1xf32> to vector<8x64xf32>
    %128 = vector.broadcast %126 : vector<1x64xf32> to vector<8x64xf32>
    %129 = arith.mulf %127, %128 : vector<8x64xf32>
    %130 = arith.addf %124, %129 : vector<8x64xf32>
    %131 = vector.extract_strided_slice %118 {offsets = [0, 0], sizes = [8, 1], strides = [1, 1]} : vector<8x8xf32> to vector<8x1xf32>
    %132 = vector.broadcast %131 : vector<8x1xf32> to vector<8x64xf32>
    %133 = arith.mulf %132, %130 : vector<8x64xf32>
    %cst_81 = arith.constant dense<0.000000e+00> : vector<64xf32>
    %134 = vector.multi_reduction <add>, %133, %cst_81 [0] : vector<8x64xf32> to vector<64xf32>
    %135 = vector.shape_cast %134 : vector<64xf32> to vector<1x64xf32>
    %c0_i32_82 = arith.constant 0 : i32
    %136 = vector.broadcast %c0_i32_82 : i32 to vector<8x1xi32>
    %137 = arith.cmpi eq, %105, %136 : vector<8x1xi32>
    %138 = vector.shape_cast %137 : vector<8x1xi1> to vector<8x1xi1>
    %139 = vector.broadcast %138 : vector<8x1xi1> to vector<8x64xi1>
    %140 = vector.shape_cast %135 : vector<1x64xf32> to vector<1x64xf32>
    %141 = vector.broadcast %140 : vector<1x64xf32> to vector<8x64xf32>
    %142 = arith.select %139, %141, %119 : vector<8x64xi1>, vector<8x64xf32>
    %143 = vector.extract_strided_slice %110 {offsets = [1, 0], sizes = [1, 64], strides = [1, 1]} : vector<8x64xf32> to vector<1x64xf32>
    %144 = vector.broadcast %143 : vector<1x64xf32> to vector<8x64xf32>
    %145 = arith.mulf %144, %104 : vector<8x64xf32>
    %146 = math.exp %145 : vector<8x64xf32>
    %147 = arith.mulf %146, %130 : vector<8x64xf32>
    %148 = vector.extract_strided_slice %115 {offsets = [0, 1], sizes = [8, 1], strides = [1, 1]} : vector<8x8xf32> to vector<8x1xf32>
    %149 = vector.extract_strided_slice %112 {offsets = [1, 0], sizes = [1, 64], strides = [1, 1]} : vector<8x64xf32> to vector<1x64xf32>
    %150 = vector.broadcast %148 : vector<8x1xf32> to vector<8x64xf32>
    %151 = vector.broadcast %149 : vector<1x64xf32> to vector<8x64xf32>
    %152 = arith.mulf %150, %151 : vector<8x64xf32>
    %153 = arith.addf %147, %152 : vector<8x64xf32>
    %154 = vector.extract_strided_slice %118 {offsets = [0, 1], sizes = [8, 1], strides = [1, 1]} : vector<8x8xf32> to vector<8x1xf32>
    %155 = vector.broadcast %154 : vector<8x1xf32> to vector<8x64xf32>
    %156 = arith.mulf %155, %153 : vector<8x64xf32>
    %cst_83 = arith.constant dense<0.000000e+00> : vector<64xf32>
    %157 = vector.multi_reduction <add>, %156, %cst_83 [0] : vector<8x64xf32> to vector<64xf32>
    %158 = vector.shape_cast %157 : vector<64xf32> to vector<1x64xf32>
    %c1_i32 = arith.constant 1 : i32
    %159 = vector.broadcast %c1_i32 : i32 to vector<8x1xi32>
    %160 = arith.cmpi eq, %105, %159 : vector<8x1xi32>
    %161 = vector.shape_cast %160 : vector<8x1xi1> to vector<8x1xi1>
    %162 = vector.broadcast %161 : vector<8x1xi1> to vector<8x64xi1>
    %163 = vector.shape_cast %158 : vector<1x64xf32> to vector<1x64xf32>
    %164 = vector.broadcast %163 : vector<1x64xf32> to vector<8x64xf32>
    %165 = arith.select %162, %164, %142 : vector<8x64xi1>, vector<8x64xf32>
    %166 = vector.extract_strided_slice %110 {offsets = [2, 0], sizes = [1, 64], strides = [1, 1]} : vector<8x64xf32> to vector<1x64xf32>
    %167 = vector.broadcast %166 : vector<1x64xf32> to vector<8x64xf32>
    %168 = arith.mulf %167, %104 : vector<8x64xf32>
    %169 = math.exp %168 : vector<8x64xf32>
    %170 = arith.mulf %169, %153 : vector<8x64xf32>
    %171 = vector.extract_strided_slice %115 {offsets = [0, 2], sizes = [8, 1], strides = [1, 1]} : vector<8x8xf32> to vector<8x1xf32>
    %172 = vector.extract_strided_slice %112 {offsets = [2, 0], sizes = [1, 64], strides = [1, 1]} : vector<8x64xf32> to vector<1x64xf32>
    %173 = vector.broadcast %171 : vector<8x1xf32> to vector<8x64xf32>
    %174 = vector.broadcast %172 : vector<1x64xf32> to vector<8x64xf32>
    %175 = arith.mulf %173, %174 : vector<8x64xf32>
    %176 = arith.addf %170, %175 : vector<8x64xf32>
    %177 = vector.extract_strided_slice %118 {offsets = [0, 2], sizes = [8, 1], strides = [1, 1]} : vector<8x8xf32> to vector<8x1xf32>
    %178 = vector.broadcast %177 : vector<8x1xf32> to vector<8x64xf32>
    %179 = arith.mulf %178, %176 : vector<8x64xf32>
    %cst_84 = arith.constant dense<0.000000e+00> : vector<64xf32>
    %180 = vector.multi_reduction <add>, %179, %cst_84 [0] : vector<8x64xf32> to vector<64xf32>
    %181 = vector.shape_cast %180 : vector<64xf32> to vector<1x64xf32>
    %c2_i32 = arith.constant 2 : i32
    %182 = vector.broadcast %c2_i32 : i32 to vector<8x1xi32>
    %183 = arith.cmpi eq, %105, %182 : vector<8x1xi32>
    %184 = vector.shape_cast %183 : vector<8x1xi1> to vector<8x1xi1>
    %185 = vector.broadcast %184 : vector<8x1xi1> to vector<8x64xi1>
    %186 = vector.shape_cast %181 : vector<1x64xf32> to vector<1x64xf32>
    %187 = vector.broadcast %186 : vector<1x64xf32> to vector<8x64xf32>
    %188 = arith.select %185, %187, %165 : vector<8x64xi1>, vector<8x64xf32>
    %189 = vector.extract_strided_slice %110 {offsets = [3, 0], sizes = [1, 64], strides = [1, 1]} : vector<8x64xf32> to vector<1x64xf32>
    %190 = vector.broadcast %189 : vector<1x64xf32> to vector<8x64xf32>
    %191 = arith.mulf %190, %104 : vector<8x64xf32>
    %192 = math.exp %191 : vector<8x64xf32>
    %193 = arith.mulf %192, %176 : vector<8x64xf32>
    %194 = vector.extract_strided_slice %115 {offsets = [0, 3], sizes = [8, 1], strides = [1, 1]} : vector<8x8xf32> to vector<8x1xf32>
    %195 = vector.extract_strided_slice %112 {offsets = [3, 0], sizes = [1, 64], strides = [1, 1]} : vector<8x64xf32> to vector<1x64xf32>
    %196 = vector.broadcast %194 : vector<8x1xf32> to vector<8x64xf32>
    %197 = vector.broadcast %195 : vector<1x64xf32> to vector<8x64xf32>
    %198 = arith.mulf %196, %197 : vector<8x64xf32>
    %199 = arith.addf %193, %198 : vector<8x64xf32>
    %200 = vector.extract_strided_slice %118 {offsets = [0, 3], sizes = [8, 1], strides = [1, 1]} : vector<8x8xf32> to vector<8x1xf32>
    %201 = vector.broadcast %200 : vector<8x1xf32> to vector<8x64xf32>
    %202 = arith.mulf %201, %199 : vector<8x64xf32>
    %cst_85 = arith.constant dense<0.000000e+00> : vector<64xf32>
    %203 = vector.multi_reduction <add>, %202, %cst_85 [0] : vector<8x64xf32> to vector<64xf32>
    %204 = vector.shape_cast %203 : vector<64xf32> to vector<1x64xf32>
    %c3_i32 = arith.constant 3 : i32
    %205 = vector.broadcast %c3_i32 : i32 to vector<8x1xi32>
    %206 = arith.cmpi eq, %105, %205 : vector<8x1xi32>
    %207 = vector.shape_cast %206 : vector<8x1xi1> to vector<8x1xi1>
    %208 = vector.broadcast %207 : vector<8x1xi1> to vector<8x64xi1>
    %209 = vector.shape_cast %204 : vector<1x64xf32> to vector<1x64xf32>
    %210 = vector.broadcast %209 : vector<1x64xf32> to vector<8x64xf32>
    %211 = arith.select %208, %210, %188 : vector<8x64xi1>, vector<8x64xf32>
    %212 = vector.extract_strided_slice %110 {offsets = [4, 0], sizes = [1, 64], strides = [1, 1]} : vector<8x64xf32> to vector<1x64xf32>
    %213 = vector.broadcast %212 : vector<1x64xf32> to vector<8x64xf32>
    %214 = arith.mulf %213, %104 : vector<8x64xf32>
    %215 = math.exp %214 : vector<8x64xf32>
    %216 = arith.mulf %215, %199 : vector<8x64xf32>
    %217 = vector.extract_strided_slice %115 {offsets = [0, 4], sizes = [8, 1], strides = [1, 1]} : vector<8x8xf32> to vector<8x1xf32>
    %218 = vector.extract_strided_slice %112 {offsets = [4, 0], sizes = [1, 64], strides = [1, 1]} : vector<8x64xf32> to vector<1x64xf32>
    %219 = vector.broadcast %217 : vector<8x1xf32> to vector<8x64xf32>
    %220 = vector.broadcast %218 : vector<1x64xf32> to vector<8x64xf32>
    %221 = arith.mulf %219, %220 : vector<8x64xf32>
    %222 = arith.addf %216, %221 : vector<8x64xf32>
    %223 = vector.extract_strided_slice %118 {offsets = [0, 4], sizes = [8, 1], strides = [1, 1]} : vector<8x8xf32> to vector<8x1xf32>
    %224 = vector.broadcast %223 : vector<8x1xf32> to vector<8x64xf32>
    %225 = arith.mulf %224, %222 : vector<8x64xf32>
    %cst_86 = arith.constant dense<0.000000e+00> : vector<64xf32>
    %226 = vector.multi_reduction <add>, %225, %cst_86 [0] : vector<8x64xf32> to vector<64xf32>
    %227 = vector.shape_cast %226 : vector<64xf32> to vector<1x64xf32>
    %c4_i32 = arith.constant 4 : i32
    %228 = vector.broadcast %c4_i32 : i32 to vector<8x1xi32>
    %229 = arith.cmpi eq, %105, %228 : vector<8x1xi32>
    %230 = vector.shape_cast %229 : vector<8x1xi1> to vector<8x1xi1>
    %231 = vector.broadcast %230 : vector<8x1xi1> to vector<8x64xi1>
    %232 = vector.shape_cast %227 : vector<1x64xf32> to vector<1x64xf32>
    %233 = vector.broadcast %232 : vector<1x64xf32> to vector<8x64xf32>
    %234 = arith.select %231, %233, %211 : vector<8x64xi1>, vector<8x64xf32>
    %235 = vector.extract_strided_slice %110 {offsets = [5, 0], sizes = [1, 64], strides = [1, 1]} : vector<8x64xf32> to vector<1x64xf32>
    %236 = vector.broadcast %235 : vector<1x64xf32> to vector<8x64xf32>
    %237 = arith.mulf %236, %104 : vector<8x64xf32>
    %238 = math.exp %237 : vector<8x64xf32>
    %239 = arith.mulf %238, %222 : vector<8x64xf32>
    %240 = vector.extract_strided_slice %115 {offsets = [0, 5], sizes = [8, 1], strides = [1, 1]} : vector<8x8xf32> to vector<8x1xf32>
    %241 = vector.extract_strided_slice %112 {offsets = [5, 0], sizes = [1, 64], strides = [1, 1]} : vector<8x64xf32> to vector<1x64xf32>
    %242 = vector.broadcast %240 : vector<8x1xf32> to vector<8x64xf32>
    %243 = vector.broadcast %241 : vector<1x64xf32> to vector<8x64xf32>
    %244 = arith.mulf %242, %243 : vector<8x64xf32>
    %245 = arith.addf %239, %244 : vector<8x64xf32>
    %246 = vector.extract_strided_slice %118 {offsets = [0, 5], sizes = [8, 1], strides = [1, 1]} : vector<8x8xf32> to vector<8x1xf32>
    %247 = vector.broadcast %246 : vector<8x1xf32> to vector<8x64xf32>
    %248 = arith.mulf %247, %245 : vector<8x64xf32>
    %cst_87 = arith.constant dense<0.000000e+00> : vector<64xf32>
    %249 = vector.multi_reduction <add>, %248, %cst_87 [0] : vector<8x64xf32> to vector<64xf32>
    %250 = vector.shape_cast %249 : vector<64xf32> to vector<1x64xf32>
    %c5_i32 = arith.constant 5 : i32
    %251 = vector.broadcast %c5_i32 : i32 to vector<8x1xi32>
    %252 = arith.cmpi eq, %105, %251 : vector<8x1xi32>
    %253 = vector.shape_cast %252 : vector<8x1xi1> to vector<8x1xi1>
    %254 = vector.broadcast %253 : vector<8x1xi1> to vector<8x64xi1>
    %255 = vector.shape_cast %250 : vector<1x64xf32> to vector<1x64xf32>
    %256 = vector.broadcast %255 : vector<1x64xf32> to vector<8x64xf32>
    %257 = arith.select %254, %256, %234 : vector<8x64xi1>, vector<8x64xf32>
    %258 = vector.extract_strided_slice %110 {offsets = [6, 0], sizes = [1, 64], strides = [1, 1]} : vector<8x64xf32> to vector<1x64xf32>
    %259 = vector.broadcast %258 : vector<1x64xf32> to vector<8x64xf32>
    %260 = arith.mulf %259, %104 : vector<8x64xf32>
    %261 = math.exp %260 : vector<8x64xf32>
    %262 = arith.mulf %261, %245 : vector<8x64xf32>
    %263 = vector.extract_strided_slice %115 {offsets = [0, 6], sizes = [8, 1], strides = [1, 1]} : vector<8x8xf32> to vector<8x1xf32>
    %264 = vector.extract_strided_slice %112 {offsets = [6, 0], sizes = [1, 64], strides = [1, 1]} : vector<8x64xf32> to vector<1x64xf32>
    %265 = vector.broadcast %263 : vector<8x1xf32> to vector<8x64xf32>
    %266 = vector.broadcast %264 : vector<1x64xf32> to vector<8x64xf32>
    %267 = arith.mulf %265, %266 : vector<8x64xf32>
    %268 = arith.addf %262, %267 : vector<8x64xf32>
    %269 = vector.extract_strided_slice %118 {offsets = [0, 6], sizes = [8, 1], strides = [1, 1]} : vector<8x8xf32> to vector<8x1xf32>
    %270 = vector.broadcast %269 : vector<8x1xf32> to vector<8x64xf32>
    %271 = arith.mulf %270, %268 : vector<8x64xf32>
    %cst_88 = arith.constant dense<0.000000e+00> : vector<64xf32>
    %272 = vector.multi_reduction <add>, %271, %cst_88 [0] : vector<8x64xf32> to vector<64xf32>
    %273 = vector.shape_cast %272 : vector<64xf32> to vector<1x64xf32>
    %c6_i32 = arith.constant 6 : i32
    %274 = vector.broadcast %c6_i32 : i32 to vector<8x1xi32>
    %275 = arith.cmpi eq, %105, %274 : vector<8x1xi32>
    %276 = vector.shape_cast %275 : vector<8x1xi1> to vector<8x1xi1>
    %277 = vector.broadcast %276 : vector<8x1xi1> to vector<8x64xi1>
    %278 = vector.shape_cast %273 : vector<1x64xf32> to vector<1x64xf32>
    %279 = vector.broadcast %278 : vector<1x64xf32> to vector<8x64xf32>
    %280 = arith.select %277, %279, %257 : vector<8x64xi1>, vector<8x64xf32>
    %281 = vector.extract_strided_slice %110 {offsets = [7, 0], sizes = [1, 64], strides = [1, 1]} : vector<8x64xf32> to vector<1x64xf32>
    %282 = vector.broadcast %281 : vector<1x64xf32> to vector<8x64xf32>
    %283 = arith.mulf %282, %104 : vector<8x64xf32>
    %284 = math.exp %283 : vector<8x64xf32>
    %285 = arith.mulf %284, %268 : vector<8x64xf32>
    %286 = vector.extract_strided_slice %115 {offsets = [0, 7], sizes = [8, 1], strides = [1, 1]} : vector<8x8xf32> to vector<8x1xf32>
    %287 = vector.extract_strided_slice %112 {offsets = [7, 0], sizes = [1, 64], strides = [1, 1]} : vector<8x64xf32> to vector<1x64xf32>
    %288 = vector.broadcast %286 : vector<8x1xf32> to vector<8x64xf32>
    %289 = vector.broadcast %287 : vector<1x64xf32> to vector<8x64xf32>
    %290 = arith.mulf %288, %289 : vector<8x64xf32>
    %291 = arith.addf %285, %290 : vector<8x64xf32>
    %292 = vector.extract_strided_slice %118 {offsets = [0, 7], sizes = [8, 1], strides = [1, 1]} : vector<8x8xf32> to vector<8x1xf32>
    %293 = vector.broadcast %292 : vector<8x1xf32> to vector<8x64xf32>
    %294 = arith.mulf %293, %291 : vector<8x64xf32>
    %cst_89 = arith.constant dense<0.000000e+00> : vector<64xf32>
    %295 = vector.multi_reduction <add>, %294, %cst_89 [0] : vector<8x64xf32> to vector<64xf32>
    %296 = vector.shape_cast %295 : vector<64xf32> to vector<1x64xf32>
    %c7_i32 = arith.constant 7 : i32
    %297 = vector.broadcast %c7_i32 : i32 to vector<8x1xi32>
    %298 = arith.cmpi eq, %105, %297 : vector<8x1xi32>
    %299 = vector.shape_cast %298 : vector<8x1xi1> to vector<8x1xi1>
    %300 = vector.broadcast %299 : vector<8x1xi1> to vector<8x64xi1>
    %301 = vector.shape_cast %296 : vector<1x64xf32> to vector<1x64xf32>
    %302 = vector.broadcast %301 : vector<1x64xf32> to vector<8x64xf32>
    %303 = arith.select %300, %302, %280 : vector<8x64xi1>, vector<8x64xf32>
    %304 = arith.index_cast %108 : i32 to index
    %c0_90 = arith.constant 0 : index
    %305 = vector.load %arg27[%304, %c0_90] : memref<8x64xf32, #tpu.memory_space<vmem>>, vector<8x64xf32>
    tpu.vector_store %arg27[%304, %c0_90], %303 {strides = array<i32>} : memref<8x64xf32, #tpu.memory_space<vmem>>, vector<8x64xf32>,
    %c1_i32_91 = arith.constant 1 : i32
    %c0_92 = arith.constant 0 : index
    %c0_93 = arith.constant 0 : index
    %306 = vector.load %arg27[%c0_92, %c0_93] : memref<8x64xf32, #tpu.memory_space<vmem>>, vector<8x64xf32>
    %c0_94 = arith.constant 0 : index
    %c0_95 = arith.constant 0 : index
    %307 = vector.load %arg12[%c0_94, %c0_95] : memref<1x64xf32, #tpu.memory_space<vmem>>, vector<1x64xf32>
    %308 = vector.broadcast %307 : vector<1x64xf32> to vector<8x64xf32>
    %309 = arith.mulf %72, %308 : vector<8x64xf32>
    %310 = arith.addf %306, %309 : vector<8x64xf32>
    %cst_96 = arith.constant 0.000000e+00 : f32
    %311 = vector.broadcast %cst_96 : f32 to vector<8x64xf32>
    %312 = arith.subf %311, %37 : vector<8x64xf32>
    %313 = math.exp %312 : vector<8x64xf32>
    %cst_97 = arith.constant 1.000000e+00 : f32
    %314 = vector.broadcast %cst_97 : f32 to vector<8x64xf32>
    %315 = arith.addf %314, %313 : vector<8x64xf32>
    %cst_98 = arith.constant 1.000000e+00 : f32
    %316 = vector.broadcast %cst_98 : f32 to vector<8x64xf32>
    %317 = arith.divf %316, %315 : vector<8x64xf32>
    %318 = arith.mulf %37, %317 : vector<8x64xf32>
    %319 = arith.mulf %310, %318 : vector<8x64xf32>
    %320 = arith.truncf %319 : vector<8x64xf32> to vector<8x64xbf16>
    %c0_99 = arith.constant 0 : index
    %c0_100 = arith.constant 0 : index
    %321 = vector.load %arg13[%c0_99, %c0_100] : memref<64x32xbf16, #tpu.memory_space<vmem>>, vector<64x32xbf16>
    %cst_101 = arith.constant dense<0.000000e+00> : vector<8x32xf32>
    %322 = tpu.matmul %320, %321, %cst_101 {dimension_numbers = #tpu.dot_dimension_numbers<[1], [0], [0], [1], [0, 0, 1, 1], [], []>} : vector<8x64xbf16>, vector<64x32xbf16>, vector<8x32xf32> -> vector<8x32xf32>
    %323 = vector.extract_strided_slice %322 {offsets = [1, 0], sizes = [5, 32], strides = [1, 1]} : vector<8x32xf32> to vector<5x32xf32>
    %324 = arith.addf %1, %323 : vector<5x32xf32>
    %c0_102 = arith.constant 0 : index
    %c0_103 = arith.constant 0 : index
    %325 = vector.load %arg14[%c0_102, %c0_103] : memref<1x32xf32, #tpu.memory_space<vmem>>, vector<1x32xf32>
    %c0_104 = arith.constant 0 : index
    %c0_105 = arith.constant 0 : index
    %326 = vector.load %arg15[%c0_104, %c0_105] : memref<1x32xf32, #tpu.memory_space<vmem>>, vector<1x32xf32>
    %cst_106 = arith.constant dense<0.000000e+00> : vector<5xf32>
    %327 = vector.multi_reduction <add>, %324, %cst_106 [1] : vector<5x32xf32> to vector<5xf32>
    %328 = vector.shape_cast %327 : vector<5xf32> to vector<5x1xf32>
    %cst_107 = arith.constant 3.200000e+01 : f32
    %329 = vector.broadcast %cst_107 : f32 to vector<5x1xf32>
    %330 = arith.divf %328, %329 : vector<5x1xf32>
    %331 = vector.broadcast %330 : vector<5x1xf32> to vector<5x32xf32>
    %332 = arith.subf %324, %331 : vector<5x32xf32>
    %333 = arith.mulf %332, %332 : vector<5x32xf32>
    %cst_108 = arith.constant dense<0.000000e+00> : vector<5xf32>
    %334 = vector.multi_reduction <add>, %333, %cst_108 [1] : vector<5x32xf32> to vector<5xf32>
    %335 = vector.shape_cast %334 : vector<5xf32> to vector<5x1xf32>
    %cst_109 = arith.constant 3.200000e+01 : f32
    %336 = vector.broadcast %cst_109 : f32 to vector<5x1xf32>
    %337 = arith.divf %335, %336 : vector<5x1xf32>
    %cst_110 = arith.constant 9.99999974E-6 : f32
    %338 = vector.broadcast %cst_110 : f32 to vector<5x1xf32>
    %339 = arith.addf %337, %338 : vector<5x1xf32>
    %340 = math.rsqrt %339 : vector<5x1xf32>
    %341 = vector.broadcast %340 : vector<5x1xf32> to vector<5x32xf32>
    %342 = arith.mulf %332, %341 : vector<5x32xf32>
    %343 = vector.broadcast %325 : vector<1x32xf32> to vector<5x32xf32>
    %344 = arith.mulf %342, %343 : vector<5x32xf32>
    %345 = vector.broadcast %326 : vector<1x32xf32> to vector<5x32xf32>
    %346 = arith.addf %344, %345 : vector<5x32xf32>
    %347 = arith.truncf %346 : vector<5x32xf32> to vector<5x32xbf16>
    %c0_111 = arith.constant 0 : index
    %c0_112 = arith.constant 0 : index
    %348 = vector.load %arg16[%c0_111, %c0_112] : memref<32x160xbf16, #tpu.memory_space<vmem>>, vector<32x160xbf16>
    %cst_113 = arith.constant dense<0.000000e+00> : vector<5x160xf32>
    %349 = tpu.matmul %347, %348, %cst_113 {dimension_numbers = #tpu.dot_dimension_numbers<[1], [0], [0], [1], [0, 0, 1, 1], [], []>} : vector<5x32xbf16>, vector<32x160xbf16>, vector<5x160xf32> -> vector<5x160xf32>
    %c0_114 = arith.constant 0 : index
    %c0_115 = arith.constant 0 : index
    %350 = vector.load %arg17[%c0_114, %c0_115] : memref<1x160xf32, #tpu.memory_space<vmem>>, vector<1x160xf32>
    %351 = vector.broadcast %350 : vector<1x160xf32> to vector<5x160xf32>
    %352 = arith.addf %349, %351 : vector<5x160xf32>
    %353 = vector.extract_strided_slice %352 {offsets = [0, 0], sizes = [5, 80], strides = [1, 1]} : vector<5x160xf32> to vector<5x80xf32>
    %354 = vector.extract_strided_slice %352 {offsets = [0, 80], sizes = [5, 80], strides = [1, 1]} : vector<5x160xf32> to vector<5x80xf32>
    %cst_116 = arith.constant 0.000000e+00 : f32
    %355 = vector.broadcast %cst_116 : f32 to vector<5x80xf32>
    %356 = arith.subf %355, %353 : vector<5x80xf32>
    %357 = math.exp %356 : vector<5x80xf32>
    %cst_117 = arith.constant 1.000000e+00 : f32
    %358 = vector.broadcast %cst_117 : f32 to vector<5x80xf32>
    %359 = arith.addf %358, %357 : vector<5x80xf32>
    %cst_118 = arith.constant 1.000000e+00 : f32
    %360 = vector.broadcast %cst_118 : f32 to vector<5x80xf32>
    %361 = arith.divf %360, %359 : vector<5x80xf32>
    %362 = arith.mulf %353, %361 : vector<5x80xf32>
    %363 = arith.mulf %362, %354 : vector<5x80xf32>
    %364 = arith.truncf %363 : vector<5x80xf32> to vector<5x80xbf16>
    %c0_119 = arith.constant 0 : index
    %c0_120 = arith.constant 0 : index
    %365 = vector.load %arg18[%c0_119, %c0_120] : memref<80x32xbf16, #tpu.memory_space<vmem>>, vector<80x32xbf16>
    %cst_121 = arith.constant dense<0.000000e+00> : vector<5x32xf32>
    %366 = tpu.matmul %364, %365, %cst_121 {dimension_numbers = #tpu.dot_dimension_numbers<[1], [0], [0], [1], [0, 0, 1, 1], [], []>} : vector<5x80xbf16>, vector<80x32xbf16>, vector<5x32xf32> -> vector<5x32xf32>
    %c0_122 = arith.constant 0 : index
    %c0_123 = arith.constant 0 : index
    %367 = vector.load %arg19[%c0_122, %c0_123] : memref<1x32xf32, #tpu.memory_space<vmem>>, vector<1x32xf32>
    %368 = vector.broadcast %367 : vector<1x32xf32> to vector<5x32xf32>
    %369 = arith.addf %366, %368 : vector<5x32xf32>
    %370 = arith.addf %324, %369 : vector<5x32xf32>
    %c0_124 = arith.constant 0 : index
    %c0_125 = arith.constant 0 : index
    %c0_126 = arith.constant 0 : index
    %371 = vector.load %arg20[%c0_124, %c0_125, %c0_126] : memref<1x5x32xf32, #tpu.memory_space<vmem>>, vector<1x5x32xf32>
    %372 = vector.shape_cast %371 : vector<1x5x32xf32> to vector<5x32xf32>
    %373 = vector.shape_cast %370 : vector<5x32xf32> to vector<1x5x32xf32>
    tpu.vector_store %arg20[%c0_124, %c0_125, %c0_126], %373 {strides = array<i32>} : memref<1x5x32xf32, #tpu.memory_space<vmem>>, vector<1x5x32xf32>,
    return
  }
  func.func @transform_0(%arg0: i32) -> (i32, i32, i32) {
    %c0_i32 = arith.constant 0 : i32
    %c0_i32_0 = arith.constant 0 : i32
    %c0_i32_1 = arith.constant 0 : i32
    return %arg0, %c0_i32, %c0_i32_0 : i32, i32, i32
  }
  func.func @transform_1(%arg0: i32) -> (i32, i32) {
    %c0_i32 = arith.constant 0 : i32
    %c0_i32_0 = arith.constant 0 : i32
    %c0_i32_1 = arith.constant 0 : i32
    return %c0_i32, %c0_i32_0 : i32, i32
  }
  func.func @transform_2(%arg0: i32) -> (i32, i32) {
    %c0_i32 = arith.constant 0 : i32
    %c0_i32_0 = arith.constant 0 : i32
    %c0_i32_1 = arith.constant 0 : i32
    return %c0_i32, %c0_i32_0 : i32, i32
  }
  func.func @transform_3(%arg0: i32) -> (i32, i32) {
    %c0_i32 = arith.constant 0 : i32
    %c0_i32_0 = arith.constant 0 : i32
    %c0_i32_1 = arith.constant 0 : i32
    return %c0_i32, %c0_i32_0 : i32, i32
  }
  func.func @transform_4(%arg0: i32) -> (i32, i32) {
    %c0_i32 = arith.constant 0 : i32
    %c0_i32_0 = arith.constant 0 : i32
    %c0_i32_1 = arith.constant 0 : i32
    return %c0_i32, %c0_i32_0 : i32, i32
  }
  func.func @transform_5(%arg0: i32) -> (i32, i32) {
    %c0_i32 = arith.constant 0 : i32
    %c0_i32_0 = arith.constant 0 : i32
    %c0_i32_1 = arith.constant 0 : i32
    return %c0_i32, %c0_i32_0 : i32, i32
  }
  func.func @transform_6(%arg0: i32) -> (i32, i32) {
    %c0_i32 = arith.constant 0 : i32
    %c0_i32_0 = arith.constant 0 : i32
    %c0_i32_1 = arith.constant 0 : i32
    return %c0_i32, %c0_i32_0 : i32, i32
  }
  func.func @transform_7(%arg0: i32) -> (i32, i32) {
    %c0_i32 = arith.constant 0 : i32
    %c0_i32_0 = arith.constant 0 : i32
    %c0_i32_1 = arith.constant 0 : i32
    return %c0_i32, %c0_i32_0 : i32, i32
  }
  func.func @transform_8(%arg0: i32) -> (i32, i32) {
    %c0_i32 = arith.constant 0 : i32
    %c0_i32_0 = arith.constant 0 : i32
    %c0_i32_1 = arith.constant 0 : i32
    return %c0_i32, %c0_i32_0 : i32, i32
  }
  func.func @transform_9(%arg0: i32) -> (i32, i32) {
    %c0_i32 = arith.constant 0 : i32
    %c0_i32_0 = arith.constant 0 : i32
    %c0_i32_1 = arith.constant 0 : i32
    return %c0_i32, %c0_i32_0 : i32, i32
  }
  func.func @transform_10(%arg0: i32) -> (i32, i32) {
    %c0_i32 = arith.constant 0 : i32
    %c0_i32_0 = arith.constant 0 : i32
    %c0_i32_1 = arith.constant 0 : i32
    return %c0_i32, %c0_i32_0 : i32, i32
  }
  func.func @transform_11(%arg0: i32) -> (i32, i32) {
    %c0_i32 = arith.constant 0 : i32
    %c0_i32_0 = arith.constant 0 : i32
    %c0_i32_1 = arith.constant 0 : i32
    return %c0_i32, %c0_i32_0 : i32, i32
  }
  func.func @transform_12(%arg0: i32) -> (i32, i32) {
    %c0_i32 = arith.constant 0 : i32
    %c0_i32_0 = arith.constant 0 : i32
    %c0_i32_1 = arith.constant 0 : i32
    return %c0_i32, %c0_i32_0 : i32, i32
  }
  func.func @transform_13(%arg0: i32) -> (i32, i32) {
    %c0_i32 = arith.constant 0 : i32
    %c0_i32_0 = arith.constant 0 : i32
    %c0_i32_1 = arith.constant 0 : i32
    return %c0_i32, %c0_i32_0 : i32, i32
  }
  func.func @transform_14(%arg0: i32) -> (i32, i32) {
    %c0_i32 = arith.constant 0 : i32
    %c0_i32_0 = arith.constant 0 : i32
    %c0_i32_1 = arith.constant 0 : i32
    return %c0_i32, %c0_i32_0 : i32, i32
  }
  func.func @transform_15(%arg0: i32) -> (i32, i32) {
    %c0_i32 = arith.constant 0 : i32
    %c0_i32_0 = arith.constant 0 : i32
    %c0_i32_1 = arith.constant 0 : i32
    return %c0_i32, %c0_i32_0 : i32, i32
  }
  func.func @transform_16(%arg0: i32) -> (i32, i32) {
    %c0_i32 = arith.constant 0 : i32
    %c0_i32_0 = arith.constant 0 : i32
    %c0_i32_1 = arith.constant 0 : i32
    return %c0_i32, %c0_i32_0 : i32, i32
  }
  func.func @transform_17(%arg0: i32) -> (i32, i32) {
    %c0_i32 = arith.constant 0 : i32
    %c0_i32_0 = arith.constant 0 : i32
    %c0_i32_1 = arith.constant 0 : i32
    return %c0_i32, %c0_i32_0 : i32, i32
  }
  func.func @transform_18(%arg0: i32) -> (i32, i32) {
    %c0_i32 = arith.constant 0 : i32
    %c0_i32_0 = arith.constant 0 : i32
    %c0_i32_1 = arith.constant 0 : i32
    return %c0_i32, %c0_i32_0 : i32, i32
  }
  func.func @transform_19(%arg0: i32) -> (i32, i32, i32) {
    %c0_i32 = arith.constant 0 : i32
    %c0_i32_0 = arith.constant 0 : i32
    %c0_i32_1 = arith.constant 0 : i32
    return %arg0, %c0_i32, %c0_i32_0 : i32, i32, i32
  }
}

module attributes {stable_mosaic.version = 11 : i64} {
  func.func @_ln_head_kernel(%arg0: i32, %arg1: memref<2x32xf32, #tpu.memory_space<vmem>>, %arg2: memref<1x32xf32, #tpu.memory_space<vmem>>, %arg3: memref<1x32xf32, #tpu.memory_space<vmem>>, %arg4: memref<32x10xbf16, #tpu.memory_space<vmem>>, %arg5: memref<1x10xf32, #tpu.memory_space<vmem>>, %arg6: memref<2x10xf32, #tpu.memory_space<vmem>>) attributes {dimension_semantics = [#tpu.dimension_semantics<arbitrary>], iteration_bounds = array<i64: 1>, scalar_prefetch = 0 : i64, scratch_operands = 0 : i64, tpu.core_type = #tpu.core_type<tc>, window_params = [{pipeline_mode = #tpu.pipeline_mode<synchronous>, transform_indices = @transform_0, window_bounds = array<i64: 2, 32>}, {pipeline_mode = #tpu.pipeline_mode<synchronous>, transform_indices = @transform_1, window_bounds = array<i64: 1, 32>}, {pipeline_mode = #tpu.pipeline_mode<synchronous>, transform_indices = @transform_2, window_bounds = array<i64: 1, 32>}, {pipeline_mode = #tpu.pipeline_mode<synchronous>, transform_indices = @transform_3, window_bounds = array<i64: 32, 10>}, {pipeline_mode = #tpu.pipeline_mode<synchronous>, transform_indices = @transform_4, window_bounds = array<i64: 1, 10>}, {pipeline_mode = #tpu.pipeline_mode<synchronous>, transform_indices = @transform_5, window_bounds = array<i64: 2, 10>}]} {
    %c0 = arith.constant 0 : index
    %c0_0 = arith.constant 0 : index
    %0 = vector.load %arg1[%c0, %c0_0] : memref<2x32xf32, #tpu.memory_space<vmem>>, vector<2x32xf32>
    %c0_1 = arith.constant 0 : index
    %c0_2 = arith.constant 0 : index
    %1 = vector.load %arg2[%c0_1, %c0_2] : memref<1x32xf32, #tpu.memory_space<vmem>>, vector<1x32xf32>
    %c0_3 = arith.constant 0 : index
    %c0_4 = arith.constant 0 : index
    %2 = vector.load %arg3[%c0_3, %c0_4] : memref<1x32xf32, #tpu.memory_space<vmem>>, vector<1x32xf32>
    %cst = arith.constant dense<0.000000e+00> : vector<2xf32>
    %3 = vector.multi_reduction <add>, %0, %cst [1] : vector<2x32xf32> to vector<2xf32>
    %4 = vector.shape_cast %3 : vector<2xf32> to vector<2x1xf32>
    %cst_5 = arith.constant 3.200000e+01 : f32
    %5 = vector.broadcast %cst_5 : f32 to vector<2x1xf32>
    %6 = arith.divf %4, %5 : vector<2x1xf32>
    %7 = vector.broadcast %6 : vector<2x1xf32> to vector<2x32xf32>
    %8 = arith.subf %0, %7 : vector<2x32xf32>
    %9 = arith.mulf %8, %8 : vector<2x32xf32>
    %cst_6 = arith.constant dense<0.000000e+00> : vector<2xf32>
    %10 = vector.multi_reduction <add>, %9, %cst_6 [1] : vector<2x32xf32> to vector<2xf32>
    %11 = vector.shape_cast %10 : vector<2xf32> to vector<2x1xf32>
    %cst_7 = arith.constant 3.200000e+01 : f32
    %12 = vector.broadcast %cst_7 : f32 to vector<2x1xf32>
    %13 = arith.divf %11, %12 : vector<2x1xf32>
    %cst_8 = arith.constant 9.99999974E-6 : f32
    %14 = vector.broadcast %cst_8 : f32 to vector<2x1xf32>
    %15 = arith.addf %13, %14 : vector<2x1xf32>
    %16 = math.rsqrt %15 : vector<2x1xf32>
    %17 = vector.broadcast %16 : vector<2x1xf32> to vector<2x32xf32>
    %18 = arith.mulf %8, %17 : vector<2x32xf32>
    %19 = vector.broadcast %1 : vector<1x32xf32> to vector<2x32xf32>
    %20 = arith.mulf %18, %19 : vector<2x32xf32>
    %21 = vector.broadcast %2 : vector<1x32xf32> to vector<2x32xf32>
    %22 = arith.addf %20, %21 : vector<2x32xf32>
    %23 = arith.truncf %22 : vector<2x32xf32> to vector<2x32xbf16>
    %c0_9 = arith.constant 0 : index
    %c0_10 = arith.constant 0 : index
    %24 = vector.load %arg4[%c0_9, %c0_10] : memref<32x10xbf16, #tpu.memory_space<vmem>>, vector<32x10xbf16>
    %cst_11 = arith.constant dense<0.000000e+00> : vector<2x10xf32>
    %25 = tpu.matmul %23, %24, %cst_11 {dimension_numbers = #tpu.dot_dimension_numbers<[1], [0], [0], [1], [0, 0, 1, 1], [], []>} : vector<2x32xbf16>, vector<32x10xbf16>, vector<2x10xf32> -> vector<2x10xf32>
    %c0_12 = arith.constant 0 : index
    %c0_13 = arith.constant 0 : index
    %26 = vector.load %arg5[%c0_12, %c0_13] : memref<1x10xf32, #tpu.memory_space<vmem>>, vector<1x10xf32>
    %27 = vector.broadcast %26 : vector<1x10xf32> to vector<2x10xf32>
    %28 = arith.addf %25, %27 : vector<2x10xf32>
    %c0_14 = arith.constant 0 : index
    %c0_15 = arith.constant 0 : index
    %29 = vector.load %arg6[%c0_14, %c0_15] : memref<2x10xf32, #tpu.memory_space<vmem>>, vector<2x10xf32>
    tpu.vector_store %arg6[%c0_14, %c0_15], %28 {strides = array<i32>} : memref<2x10xf32, #tpu.memory_space<vmem>>, vector<2x10xf32>,
    return
  }
  func.func @transform_0(%arg0: i32) -> (i32, i32) {
    %c0_i32 = arith.constant 0 : i32
    %c0_i32_0 = arith.constant 0 : i32
    %c0_i32_1 = arith.constant 0 : i32
    return %c0_i32, %c0_i32_0 : i32, i32
  }
  func.func @transform_1(%arg0: i32) -> (i32, i32) {
    %c0_i32 = arith.constant 0 : i32
    %c0_i32_0 = arith.constant 0 : i32
    %c0_i32_1 = arith.constant 0 : i32
    return %c0_i32, %c0_i32_0 : i32, i32
  }
  func.func @transform_2(%arg0: i32) -> (i32, i32) {
    %c0_i32 = arith.constant 0 : i32
    %c0_i32_0 = arith.constant 0 : i32
    %c0_i32_1 = arith.constant 0 : i32
    return %c0_i32, %c0_i32_0 : i32, i32
  }
  func.func @transform_3(%arg0: i32) -> (i32, i32) {
    %c0_i32 = arith.constant 0 : i32
    %c0_i32_0 = arith.constant 0 : i32
    %c0_i32_1 = arith.constant 0 : i32
    return %c0_i32, %c0_i32_0 : i32, i32
  }
  func.func @transform_4(%arg0: i32) -> (i32, i32) {
    %c0_i32 = arith.constant 0 : i32
    %c0_i32_0 = arith.constant 0 : i32
    %c0_i32_1 = arith.constant 0 : i32
    return %c0_i32, %c0_i32_0 : i32, i32
  }
  func.func @transform_5(%arg0: i32) -> (i32, i32) {
    %c0_i32 = arith.constant 0 : i32
    %c0_i32_0 = arith.constant 0 : i32
    %c0_i32_1 = arith.constant 0 : i32
    return %c0_i32, %c0_i32_0 : i32, i32
  }
}

</mosaic_0001>

<llo_original>
// kernel: adventurer_forward.6
$region0: #{adventurer_forward.6}
  #allocation0 [shape = 'u32[]', space=smem, size = 0x4, offset = 0x4, fixed_abs, tag = 'smem constant byte address 0x4 - core index']
  #allocation1 [shape = 'u32[144,128]{1,0:T(1,128)}', space=vmem, size = 0x12000, scoped, tag = 'internal scratch']
  %s0 = inlined_call_operand.vmem [shape: bf16[8,192], index: 0, kind: input, shape index: {}]
  %s1 = inlined_call_operand.vmem [shape: bf16[192,32], index: 1, kind: input, shape index: {}]
  %s2 = inlined_call_operand.vmem [shape: f32[1,32], index: 2, kind: input, shape index: {}]
  %s3 = inlined_call_operand.vmem [shape: f32[8,32], index: 3, kind: output, shape index: {}]
  %s4 = sld [smem:[#allocation0]]
  $region22: #{adventurer_forward.6} parent=0
    _
  %s6 = ssub.s32 1, %s4
  %s7 = scalar_select 0, %s6, %s4
  // Predicated region
  $region2: #{adventurer_forward.6} parent=0 // pred_check
    _
  $region3: #{adventurer_forward.6} parent=0 // pred_check_branch
    %9 = sbr.rel (0) target = $region5
  $region4: #{adventurer_forward.6} parent=0 // pred_region
    _
  $region5: #{adventurer_forward.6} parent=0 // pred_fallthru
    _
  // Predicated region
  $region6: #{adventurer_forward.6} parent=0 // pred_check
    _
  $region7: #{adventurer_forward.6} parent=0 // pred_check_branch
    %11 = sbr.rel (0) target = $region9
  $region8: #{adventurer_forward.6} parent=0 // pred_region
    _
  $region9: #{adventurer_forward.6} parent=0 // pred_fallthru
    _
  // Predicated region
  $region10: #{adventurer_forward.6} parent=0 // pred_check
    _
  $region11: #{adventurer_forward.6} parent=0 // pred_check_branch
    %13 = sbr.rel (0) target = $region13
  $region12: #{adventurer_forward.6} parent=0 // pred_region
    _
  $region13: #{adventurer_forward.6} parent=0 // pred_fallthru
    _
  %v15 = vld [vmem:[%s0] sm:$0xff]
  %v16 = vld [vmem:[%s1] sm:$0xf]
  %v17 = vld [vmem:[%s1 + $0x4] sm:$0xf]
  %v18 = vld [vmem:[%s1 + $0x8] sm:$0xf]
  %v19 = vld [vmem:[%s1 + $0xc] sm:$0xf]
  %v20 = vld [vmem:[%s1 + $0x10] sm:$0xf]
  %v21 = vld [vmem:[%s1 + $0x14] sm:$0xf]
  %v22 = vld [vmem:[%s1 + $0x18] sm:$0xf]
  %v23 = vld [vmem:[%s1 + $0x1c] sm:$0xf]
  %v24 = vld [vmem:[%s1 + $0x20] sm:$0xf]
  %v25 = vld [vmem:[%s1 + $0x24] sm:$0xf]
  %v26 = vld [vmem:[%s1 + $0x28] sm:$0xf]
  %v27 = vld [vmem:[%s1 + $0x2c] sm:$0xf]
  %v28 = vld [vmem:[%s1 + $0x30] sm:$0xf]
  %v29 = vld [vmem:[%s1 + $0x34] sm:$0xf]
  %v30 = vld [vmem:[%s1 + $0x38] sm:$0xf]
  %v31 = vld [vmem:[%s1 + $0x3c] sm:$0xf]
  %v32 = vld [vmem:[%s1 + $0x40] sm:$0xf]
  %v33 = vld [vmem:[%s1 + $0x44] sm:$0xf]
  %v34 = vld [vmem:[%s1 + $0x48] sm:$0xf]
  %v35 = vld [vmem:[%s1 + $0x4c] sm:$0xf]
  %v36 = vld [vmem:[%s1 + $0x50] sm:$0xf]
  %v37 = vld [vmem:[%s1 + $0x54] sm:$0xf]
  %v38 = vld [vmem:[%s1 + $0x58] sm:$0xf]
  %v39 = vld [vmem:[%s1 + $0x5c] sm:$0xf]
  %v40 = vld [vmem:[%s2] sm:$0x1]
  %v42 = vlaneseq
  %v43 = vshrl.u32 %v42, 7
  %v44 = vsub.s32 0, %v43
  %v45 = vrot.slane %v40, %v44
  %v48 = vunpack.c.l.b16 %v15
  %v49 = vunpack.c.h.b16 %v15
  %v50 = vpack.c.b16 %v48, %v48
  %v51 = vpack.c.b16 %v49, %v49
  %v77 = vunpack.c.l.b16 %v16
  %v78 = vunpack.c.l.b16 %v17
  %v79 = vunpack.c.l.b16 %v18
  %v80 = vunpack.c.l.b16 %v19
  %v81 = vunpack.c.l.b16 %v20
  %v82 = vunpack.c.l.b16 %v21
  %v83 = vunpack.c.l.b16 %v22
  %v84 = vunpack.c.l.b16 %v23
  %v85 = vunpack.c.l.b16 %v24
  %v86 = vunpack.c.l.b16 %v25
  %v87 = vunpack.c.l.b16 %v26
  %v88 = vunpack.c.l.b16 %v27
  %v89 = vunpack.c.l.b16 %v28
  %v90 = vunpack.c.l.b16 %v29
  %v91 = vunpack.c.l.b16 %v30
  %v92 = vunpack.c.l.b16 %v31
  %v93 = vunpack.c.l.b16 %v32
  %v94 = vunpack.c.l.b16 %v33
  %v95 = vunpack.c.l.b16 %v34
  %v96 = vunpack.c.l.b16 %v35
  %v97 = vunpack.c.l.b16 %v36
  %v98 = vunpack.c.l.b16 %v37
  %v99 = vunpack.c.l.b16 %v38
  %v100 = vunpack.c.l.b16 %v39
  %v101 = vpack.c.b16 %v78, %v77
  %v102 = vpack.c.b16 %v80, %v79
  %v103 = vpack.c.b16 %v82, %v81
  %v104 = vpack.c.b16 %v84, %v83
  %v105 = vpack.c.b16 %v86, %v85
  %v106 = vpack.c.b16 %v88, %v87
  %v107 = vpack.c.b16 %v90, %v89
  %v108 = vpack.c.b16 %v92, %v91
  %v109 = vpack.c.b16 %v94, %v93
  %v110 = vpack.c.b16 %v96, %v95
  %v111 = vpack.c.b16 %v98, %v97
  %v112 = vpack.c.b16 %v100, %v99
  %vm125 = vcmask 523264
  %v127 = vsel %vm125, %v51, 0
  %129 = vmatprep.subr.bf16.mxu0 0
  %130 = vmatpush1.bf16.msra.mxu0 %v101
  %131 = vmatprep.subr.bf16.mxu0 0
  %132 = vmatpush1.bf16.msra.mxu0 %v102
  %133 = vmatprep.subr.bf16.mxu0 0
  %134 = vmatpush1.bf16.msra.mxu0 %v103
  %135 = vmatprep.subr.bf16.mxu0 0
  %136 = vmatpush1.bf16.msra.mxu0 %v104
  %137 = vmatprep.subr.bf16.mxu0 0
  %138 = vmatpush1.bf16.msra.mxu0 %v105
  %139 = vmatprep.subr.bf16.mxu0 0
  %140 = vmatpush1.bf16.msra.mxu0 %v106
  %141 = vmatprep.subr.bf16.mxu0 0
  %142 = vmatpush1.bf16.msra.mxu0 %v107
  %143 = vmatprep.subr.bf16.mxu0 0
  %144 = vmatpush1.bf16.msra.mxu0 %v108
  %145 = vmatprep.subr.bf16.mxu0 0
  %146 = vmatpush1.bf16.msra.mxu0 %v109
  %147 = vmatprep.subr.bf16.mxu0 0
  %148 = vmatpush1.bf16.msra.mxu0 %v110
  %149 = vmatprep.subr.bf16.mxu0 0
  %150 = vmatpush1.bf16.msra.mxu0 %v111
  %151 = vmatprep.subr.bf16.mxu0 0
  %152 = vmatpush1.bf16.msra.mxu0 %v112
  %153 = vmatprep.subr.bf16.mxu0 0
  %154 = vmatpush1.bf16.msra.mxu0 0
  %155 = vmatprep.subr.bf16.mxu0 0
  %156 = vmatpush1.bf16.msra.mxu0 0
  %157 = vmatprep.subr.bf16.mxu0 0
  %158 = vmatpush1.bf16.msra.mxu0 0
  %159 = vmatprep.subr.bf16.mxu0 0
  %160 = vmatpush1.bf16.msra.mxu0 0
  %161 = vmatprep.mubr.bf16.mxu0 %v127
  %162 = vmatmul.mubr.bf16.gmra.mrb[0].mxu0 %v50
  %v163 = vpop.f32.mrb[0].mxu0
  %v164 = vadd.f32 %v45, %v163
  %v165 = vpop.f32.mrb[0].mxu0
  %v166 = vpop.f32.mrb[0].mxu0
  %v167 = vpop.f32.mrb[0].mxu0
  %168 = vdwg.mxu0
  %vm169 = vcmask 261120
  %170 = vst.msk [vmem:[%s3] sm:$0xff] %vm169, %v164
  // Predicated region
  $region14: #{adventurer_forward.6} parent=0 // pred_check
    _
  $region15: #{adventurer_forward.6} parent=0 // pred_check_branch
    %172 = sbr.rel (0) target = $region17
  $region16: #{adventurer_forward.6} parent=0 // pred_region
    _
  $region17: #{adventurer_forward.6} parent=0 // pred_fallthru
    _
  // Predicated region
  $region18: #{adventurer_forward.6} parent=0 // pred_check
    _
  $region19: #{adventurer_forward.6} parent=0 // pred_check_branch
    %174 = sbr.rel (0) target = $region21
  $region20: #{adventurer_forward.6} parent=0 // pred_region
    _
  $region21: #{adventurer_forward.6} parent=0 // pred_fallthru
    _

// kernel: adventurer_forward.11
$region0: #{adventurer_forward.11}
  #allocation0 [shape = 'u32[]', space=smem, size = 0x4, offset = 0x4, fixed_abs, tag = 'smem constant byte address 0x4 - core index']
  #allocation1 [shape = 'u32[144,128]{1,0:T(1,128)}', space=vmem, size = 0x12000, scoped, tag = 'internal scratch']
  %s0 = inlined_call_operand.vmem [shape: f32[2,32], index: 0, kind: input, shape index: {}]
  %s1 = inlined_call_operand.vmem [shape: f32[1,32], index: 1, kind: input, shape index: {}]
  %s2 = inlined_call_operand.vmem [shape: f32[1,32], index: 2, kind: input, shape index: {}]
  %s3 = inlined_call_operand.vmem [shape: bf16[32,10], index: 3, kind: input, shape index: {}]
  %s4 = inlined_call_operand.vmem [shape: f32[1,10], index: 4, kind: input, shape index: {}]
  %s5 = inlined_call_operand.hbm [shape: f32[2,10], index: 5, kind: output, shape index: {}]
  %s6 = sld [smem:[#allocation0]]
  $region30: #{adventurer_forward.11} parent=0
    _
  %s8 = ssub.s32 1, %s6
  %s9 = scalar_select 0, %s8, %s6
  $region1: #{adventurer_forward.11} parent=0
    #allocation2 [shape = 'u8[1024]{0}', space=vmem, size = 0x400, scoped, tag = 'output window, operand 0, single buffered']
    #allocation3 [shape = 's32[1]{0}', space=sflag, size = 0x4, scoped, tag = 'scoped memory for adventurer_forward.11']
    %10 = vsyncpa [#allocation3], 0
    // Predicated region
    $region2: #{adventurer_forward.11} parent=1 // pred_check
      _
    $region3: #{adventurer_forward.11} parent=1 // pred_check_branch
      %12 = sbr.rel (0) target = $region5
    $region4: #{adventurer_forward.11} parent=1 // pred_region
      _
    $region5: #{adventurer_forward.11} parent=1 // pred_fallthru
      _
    // Predicated region
    $region6: #{adventurer_forward.11} parent=1 // pred_check
      _
    $region7: #{adventurer_forward.11} parent=1 // pred_check_branch
      %14 = sbr.rel (0) target = $region9
    $region8: #{adventurer_forward.11} parent=1 // pred_region
      _
    $region9: #{adventurer_forward.11} parent=1 // pred_fallthru
      _
    // Predicated region
    $region10: #{adventurer_forward.11} parent=1 // pred_check
      _
    $region11: #{adventurer_forward.11} parent=1 // pred_check_branch
      %16 = sbr.rel (0) target = $region13
    $region12: #{adventurer_forward.11} parent=1 // pred_region
      _
    $region13: #{adventurer_forward.11} parent=1 // pred_fallthru
      _
    // Predicated region
    $region14: #{adventurer_forward.11} parent=1 // pred_check
      _
    $region15: #{adventurer_forward.11} parent=1 // pred_check_branch
      %18 = sbr.rel (0) target = $region17
    $region16: #{adventurer_forward.11} parent=1 // pred_region
      _
    $region17: #{adventurer_forward.11} parent=1 // pred_fallthru
      _
    // Predicated region
    $region18: #{adventurer_forward.11} parent=1 // pred_check
      _
    $region19: #{adventurer_forward.11} parent=1 // pred_check_branch
      %20 = sbr.rel (0) target = $region21
    $region20: #{adventurer_forward.11} parent=1 // pred_region
      _
    $region21: #{adventurer_forward.11} parent=1 // pred_fallthru
      _
    %v22 = vld [vmem:[%s0] sm:$0x3]
    %v23 = vld [vmem:[%s1] sm:$0x1]
    %v24 = vld [vmem:[%s2] sm:$0x1]
    %vm25 = vcmask 254976
    %v26 = vsel %vm25, %v22, 0.0
    %27 = vadd.xlane.f32.xlu0 %v26
    %v28 = vpop.xlane.xlu0 %27
    %v29 = vrcp.pop 32.0
    %v30 = vmul.f32 %v28, %v29
    %v31 = vsub.f32 %v22, %v30
    %v32 = vmul.f32 %v31, %v31
    %v33 = vsel %vm25, %v32, 0.0
    %34 = vadd.xlane.f32.xlu0 %v33
    %v35 = vpop.xlane.xlu0 %34
    %v36 = vmul.f32 %v35, %v29
    %v37 = vadd.f32 %v36, 1e-05
    %v38 = vrsqrt.pop %v37
    %v39 = vmul.f32 %v31, %v38
    %v41 = vlaneseq
    %v42 = vshrl.u32 %v41, 7
    %v43 = vsub.s32 0, %v42
    %v44 = vrot.slane %v23, %v43
    %v46 = vmul.f32 %v39, %v44
    %v48 = vlaneseq
    %v49 = vshrl.u32 %v48, 7
    %v50 = vsub.s32 0, %v49
    %v51 = vrot.slane %v24, %v50
    %v53 = vadd.f32 %v46, %v51
    %v54 = vpack.c.bf16 %v53, %v53
    %v55 = vld [vmem:[%s3] sm:$0xf]
    %v56 = vld [vmem:[%s3 + $0x4] sm:$0xf]
    %v57 = vld [vmem:[%s3 + $0x8] sm:$0xf]
    %v58 = vld [vmem:[%s3 + $0xc] sm:$0xf]
    %v59 = vld [vmem:[%s4] sm:$0x1]
    %v61 = vlaneseq
    %v62 = vshrl.u32 %v61, 7
    %v63 = vsub.s32 0, %v62
    %v64 = vrot.slane %v59, %v63
    %v70 = vunpack.c.l.b16 %v55
    %v71 = vunpack.c.l.b16 %v56
    %v72 = vunpack.c.l.b16 %v57
    %v73 = vunpack.c.l.b16 %v58
    %v74 = vpack.c.b16 %v71, %v70
    %v75 = vpack.c.b16 %v73, %v72
    %vm78 = vcmask 261120
    %v80 = vsel %vm78, %v54, 0
    %82 = vmatprep.subr.bf16.mxu0 0
    %83 = vmatpush1.bf16.msra.mxu0 %v74
    %84 = vmatprep.subr.bf16.mxu0 0
    %85 = vmatpush1.bf16.msra.mxu0 %v75
    %86 = vmatprep.subr.bf16.mxu0 0
    %87 = vmatpush1.bf16.msra.mxu0 0
    %88 = vmatprep.subr.bf16.mxu0 0
    %89 = vmatpush1.bf16.msra.mxu0 0
    %90 = vmatprep.subr.bf16.mxu0 0
    %91 = vmatpush1.bf16.msra.mxu0 0
    %92 = vmatprep.subr.bf16.mxu0 0
    %93 = vmatpush1.bf16.msra.mxu0 0
    %94 = vmatprep.subr.bf16.mxu0 0
    %95 = vmatpush1.bf16.msra.mxu0 0
    %96 = vmatprep.subr.bf16.mxu0 0
    %97 = vmatpush1.bf16.msra.mxu0 0
    %98 = vmatprep.subr.bf16.mxu0 0
    %99 = vmatpush1.bf16.msra.mxu0 0
    %100 = vmatprep.subr.bf16.mxu0 0
    %101 = vmatpush1.bf16.msra.mxu0 0
    %102 = vmatprep.subr.bf16.mxu0 0
    %103 = vmatpush1.bf16.msra.mxu0 0
    %104 = vmatprep.subr.bf16.mxu0 0
    %105 = vmatpush1.bf16.msra.mxu0 0
    %106 = vmatprep.subr.bf16.mxu0 0
    %107 = vmatpush1.bf16.msra.mxu0 0
    %108 = vmatprep.subr.bf16.mxu0 0
    %109 = vmatpush1.bf16.msra.mxu0 0
    %110 = vmatprep.subr.bf16.mxu0 0
    %111 = vmatpush1.bf16.msra.mxu0 0
    %112 = vmatprep.subr.bf16.mxu0 0
    %113 = vmatpush1.bf16.msra.mxu0 0
    %114 = vmatprep.mubr.bf16.mxu0 0
    %115 = vmatmul.mubr.bf16.gmra.mrb[0].mxu0 %v80
    %v116 = vpop.f32.mrb[0].mxu0
    %v117 = vadd.f32 %v64, %v116
    %v118 = vpop.f32.mrb[0].mxu0
    %v119 = vpop.f32.mrb[0].mxu0
    %v120 = vpop.f32.mrb[0].mxu0
    %121 = vdwg.mxu0
    %vm122 = vcmask 74752
    %123 = vst.msk [vmem:[#allocation2] sm:$0x3] %vm122, %v117
    // Predicated region
    $region22: #{adventurer_forward.11} parent=1 // pred_check
      _
    $region23: #{adventurer_forward.11} parent=1 // pred_check_branch
      %125 = sbr.rel (0) target = $region25
    $region24: #{adventurer_forward.11} parent=1 // pred_region
      %s127 = ssub.s32 32, 32
      %128 = vsyncadd [#allocation3], %s127
      %s130 = sshll.u32 [#allocation2], 4
      %s131 = int_to_ptr.vmem [resolvable:$true] %s130
      %133 = dma.vmem_to_hbm [thread:$0]  %s131, 32, %s5, [#allocation3]
    $region25: #{adventurer_forward.11} parent=1 // pred_fallthru
      _
    // Predicated region
    $region26: #{adventurer_forward.11} parent=1 // pred_check
      _
    $region27: #{adventurer_forward.11} parent=1 // pred_check_branch
      %135 = sbr.rel (0) target = $region29
    $region28: #{adventurer_forward.11} parent=1 // pred_region
      %136 = dma.done [#allocation3], 32
    $region29: #{adventurer_forward.11} parent=1 // pred_fallthru
      _
    %137 = vsyncpa [#allocation3], 1

// kernel: adventurer_forward.7
$region0: #{adventurer_forward.7}
  #allocation0 [shape = 'u32[]', space=smem, size = 0x4, offset = 0x4, fixed_abs, tag = 'smem constant byte address 0x4 - core index']
  #allocation1 [shape = 'u32[144,128]{1,0:T(1,128)}', space=vmem, size = 0x12000, scoped, tag = 'internal scratch']
  #allocation2 [shape = 'f32[8,32]{1,0:T(8,128)}', space=vmem, size = 0x1000, scoped, tag = 'scratch operand']
  #allocation3 [shape = 'f32[11,64]{1,0:T(8,128)}', space=vmem, size = 0x2000, scoped, tag = 'scratch operand']
  #allocation4 [shape = 'f32[8,64]{1,0:T(8,128)}', space=vmem, size = 0x1000, scoped, tag = 'scratch operand']
  #allocation5 [shape = 'f32[8,64]{1,0:T(8,128)}', space=vmem, size = 0x1000, scoped, tag = 'scratch operand']
  #allocation6 [shape = 'f32[1,8,8]{2,1,0:T(8,128)}', space=vmem, size = 0x1000, scoped, tag = 'scratch operand']
  #allocation7 [shape = 'f32[1,8,8]{2,1,0:T(8,128)}', space=vmem, size = 0x1000, scoped, tag = 'scratch operand']
  #allocation8 [shape = 'f32[8,64]{1,0:T(8,128)}', space=vmem, size = 0x1000, scoped, tag = 'scratch operand']
  %s0 = inlined_call_operand.hbm [shape: f32[2,5,32], index: 0, kind: input, shape index: {}]
  %s1 = inlined_call_operand.hbm [shape: f32[1,32], index: 1, kind: input, shape index: {}]
  %s2 = inlined_call_operand.hbm [shape: f32[1,32], index: 2, kind: input, shape index: {}]
  %s3 = inlined_call_operand.hbm [shape: bf16[32,128], index: 3, kind: input, shape index: {}]
  %s4 = inlined_call_operand.hbm [shape: f32[4,64], index: 4, kind: input, shape index: {}]
  %s5 = inlined_call_operand.hbm [shape: f32[1,64], index: 5, kind: input, shape index: {}]
  %s6 = inlined_call_operand.hbm [shape: bf16[64,2], index: 6, kind: input, shape index: {}]
  %s7 = inlined_call_operand.hbm [shape: bf16[16,64], index: 7, kind: input, shape index: {}]
  %s8 = inlined_call_operand.hbm [shape: f32[2,64], index: 8, kind: input, shape index: {}]
  %s9 = inlined_call_operand.hbm [shape: f32[1,64], index: 9, kind: input, shape index: {}]
  %s10 = inlined_call_operand.hbm [shape: f32[8,64], index: 10, kind: input, shape index: {}]
  %s11 = inlined_call_operand.hbm [shape: f32[1,64], index: 11, kind: input, shape index: {}]
  %s12 = inlined_call_operand.hbm [shape: bf16[64,32], index: 12, kind: input, shape index: {}]
  %s13 = inlined_call_operand.hbm [shape: f32[1,32], index: 13, kind: input, shape index: {}]
  %s14 = inlined_call_operand.hbm [shape: f32[1,32], index: 14, kind: input, shape index: {}]
  %s15 = inlined_call_operand.hbm [shape: bf16[32,160], index: 15, kind: input, shape index: {}]
  %s16 = inlined_call_operand.hbm [shape: f32[1,160], index: 16, kind: input, shape index: {}]
  %s17 = inlined_call_operand.hbm [shape: bf16[80,32], index: 17, kind: input, shape index: {}]
  %s18 = inlined_call_operand.hbm [shape: f32[1,32], index: 18, kind: input, shape index: {}]
  %s19 = inlined_call_operand.hbm [shape: f32[2,5,32], index: 19, kind: output, shape index: {}]
  %s20 = sld [smem:[#allocation0]]
  $region185: #{adventurer_forward.7} parent=0
    _
  %s22 = ssub.s32 1, %s20
  %s23 = scalar_select 0, %s22, %s20
  $region1: #{adventurer_forward.7} parent=0
    #allocation9 [shape = 'u8[8192]{0}', space=vmem, size = 0x2000, scoped, tag = 'input window, operand 0']
    #allocation10 [shape = 's32[2]{0}', space=sflag, size = 0x8, scoped, tag = 'scoped memory for adventurer_forward.7']
    #allocation11 [shape = 's32[2]{0}', space=sflag, size = 0x8, scoped, tag = 'scoped memory for adventurer_forward.7']
    #allocation12 [shape = 'u8[512]{0}', space=vmem, size = 0x400, scoped, tag = 'input window, operand 1, single buffered']
    #allocation13 [shape = 's32[1]{0}', space=sflag, size = 0x4, scoped, tag = 'scoped memory for adventurer_forward.7']
    #allocation14 [shape = 'u8[512]{0}', space=vmem, size = 0x400, scoped, tag = 'input window, operand 2, single buffered']
    #allocation15 [shape = 'u8[8192]{0}', space=vmem, size = 0x2000, scoped, tag = 'input window, operand 3, single buffered']
    #allocation16 [shape = 's32[1]{0}', space=sflag, size = 0x4, scoped, tag = 'scoped memory for adventurer_forward.7']
    #allocation17 [shape = 'u8[2048]{0}', space=vmem, size = 0x800, scoped, tag = 'input window, operand 4, single buffered']
    #allocation18 [shape = 'u8[512]{0}', space=vmem, size = 0x400, scoped, tag = 'input window, operand 5, single buffered']
    #allocation19 [shape = 's32[1]{0}', space=sflag, size = 0x4, scoped, tag = 'scoped memory for adventurer_forward.7']
    #allocation20 [shape = 'u8[16384]{0}', space=vmem, size = 0x4000, scoped, tag = 'input window, operand 6, single buffered']
    #allocation21 [shape = 'u8[4096]{0}', space=vmem, size = 0x1000, scoped, tag = 'input window, operand 7, single buffered']
    #allocation22 [shape = 's32[1]{0}', space=sflag, size = 0x4, scoped, tag = 'scoped memory for adventurer_forward.7']
    #allocation23 [shape = 'u8[1024]{0}', space=vmem, size = 0x400, scoped, tag = 'input window, operand 8, single buffered']
    #allocation24 [shape = 'u8[512]{0}', space=vmem, size = 0x400, scoped, tag = 'input window, operand 9, single buffered']
    #allocation25 [shape = 's32[1]{0}', space=sflag, size = 0x4, scoped, tag = 'scoped memory for adventurer_forward.7']
    #allocation26 [shape = 'u8[4096]{0}', space=vmem, size = 0x1000, scoped, tag = 'input window, operand 10, single buffered']
    #allocation27 [shape = 'u8[512]{0}', space=vmem, size = 0x400, scoped, tag = 'input window, operand 11, single buffered']
    #allocation28 [shape = 's32[1]{0}', space=sflag, size = 0x4, scoped, tag = 'scoped memory for adventurer_forward.7']
    #allocation29 [shape = 'u8[16384]{0}', space=vmem, size = 0x4000, scoped, tag = 'input window, operand 12, single buffered']
    #allocation30 [shape = 'u8[512]{0}', space=vmem, size = 0x400, scoped, tag = 'input window, operand 13, single buffered']
    #allocation31 [shape = 's32[1]{0}', space=sflag, size = 0x4, scoped, tag = 'scoped memory for adventurer_forward.7']
    #allocation32 [shape = 'u8[512]{0}', space=vmem, size = 0x400, scoped, tag = 'input window, operand 14, single buffered']
    #allocation33 [shape = 'u8[16384]{0}', space=vmem, size = 0x4000, scoped, tag = 'input window, operand 15, single buffered']
    #allocation34 [shape = 's32[1]{0}', space=sflag, size = 0x4, scoped, tag = 'scoped memory for adventurer_forward.7']
    #allocation35 [shape = 'u8[1024]{0}', space=vmem, size = 0x400, scoped, tag = 'input window, operand 16, single buffered']
    #allocation36 [shape = 'u8[20480]{0}', space=vmem, size = 0x5000, scoped, tag = 'input window, operand 17, single buffered']
    #allocation37 [shape = 's32[1]{0}', space=sflag, size = 0x4, scoped, tag = 'scoped memory for adventurer_forward.7']
    #allocation38 [shape = 'u8[512]{0}', space=vmem, size = 0x400, scoped, tag = 'input window, operand 18, single buffered']
    #allocation39 [shape = 'u8[8192]{0}', space=vmem, size = 0x2000, scoped, tag = 'output window, operand 0']
    %24 = vsyncpa [#allocation10], 0
    %s25 = scalar_lea.sflag [#allocation10], 1
    %26 = vsyncpa %s25, 0
    %27 = vsyncpa [#allocation13], 0
    %28 = vsyncpa [#allocation16], 0
    %29 = vsyncpa [#allocation19], 0
    %30 = vsyncpa [#allocation22], 0
    %31 = vsyncpa [#allocation25], 0
    %32 = vsyncpa [#allocation28], 0
    %33 = vsyncpa [#allocation31], 0
    %34 = vsyncpa [#allocation34], 0
    %35 = vsyncpa [#allocation37], 0
    %36 = vsyncpa [#allocation11], 0
    %s37 = scalar_lea.sflag [#allocation11], 1
    %38 = vsyncpa %s37, 0
    loop: start=0, step=1, limit=4
    $region2: #{adventurer_forward.7} parent=1 // loop_pre_header
      _
    $region3: #{adventurer_forward.7} parent=1 // loop_header
      %s40 = sphi 0, %s44
      %p41 = scmp.ge.s32.totalorder %s40, 4
      %s50 = sphi 0, %s52
      %s53 = sphi 0, %s50
      %s54 = sphi 0, %s53
      %s70 = sphi 0, %s54
      %s74 = sphi 0, %s74
      %s76 = sphi 0, %s74
      %s77 = sphi 0, %s76
      %s91 = sphi 0, %s77
      %s95 = sphi 0, %s95
      %s97 = sphi 0, %s95
      %s98 = sphi 0, %s97
      %s112 = sphi 0, %s98
      %s116 = sphi 0, %s116
      %s118 = sphi 0, %s116
      %s119 = sphi 0, %s118
      %s133 = sphi 0, %s119
      %s137 = sphi 0, %s137
      %s139 = sphi 0, %s137
      %s140 = sphi 0, %s139
      %s154 = sphi 0, %s140
      %s158 = sphi 0, %s158
      %s160 = sphi 0, %s158
      %s161 = sphi 0, %s160
      %s175 = sphi 0, %s161
      %s179 = sphi 0, %s179
      %s181 = sphi 0, %s179
      %s182 = sphi 0, %s181
      %s196 = sphi 0, %s182
      %s200 = sphi 0, %s200
      %s202 = sphi 0, %s200
      %s203 = sphi 0, %s202
      %s217 = sphi 0, %s203
      %s221 = sphi 0, %s221
      %s223 = sphi 0, %s221
      %s224 = sphi 0, %s223
      %s238 = sphi 0, %s224
      %s242 = sphi 0, %s242
      %s244 = sphi 0, %s242
      %s245 = sphi 0, %s244
      %s259 = sphi 0, %s245
      %s263 = sphi 0, %s263
      %s265 = sphi 0, %s263
      %s266 = sphi 0, %s265
      %s280 = sphi 0, %s266
      %s284 = sphi 0, %s284
      %s286 = sphi 0, %s284
      %s287 = sphi 0, %s286
      %s301 = sphi 0, %s287
      %s305 = sphi 0, %s305
      %s307 = sphi 0, %s305
      %s308 = sphi 0, %s307
      %s322 = sphi 0, %s308
      %s326 = sphi 0, %s326
      %s328 = sphi 0, %s326
      %s329 = sphi 0, %s328
      %s343 = sphi 0, %s329
      %s347 = sphi 0, %s347
      %s349 = sphi 0, %s347
      %s350 = sphi 0, %s349
      %s364 = sphi 0, %s350
      %s368 = sphi 0, %s368
      %s370 = sphi 0, %s368
      %s371 = sphi 0, %s370
      %s385 = sphi 0, %s371
      %s389 = sphi 0, %s389
      %s391 = sphi 0, %s389
      %s392 = sphi 0, %s391
      %s406 = sphi 0, %s392
      %s410 = sphi 0, %s410
      %s412 = sphi 0, %s410
      %s413 = sphi 0, %s412
      %s427 = sphi 0, %s413
      %s431 = sphi 0, %s431
      %s433 = sphi 0, %s431
      %s434 = sphi 0, %s433
      %s448 = sphi 0, %s434
      %s454 = sphi 0, %s456
      %s457 = sphi 0, %s454
      %s458 = sphi 0, %s457
      %s474 = sphi 0, %s458
    $region4: #{adventurer_forward.7} parent=1 // loop_header_branch
      %43 = sbr.rel (%p41) target = $region8
    $region5: #{adventurer_forward.7} parent=1 // loop_body
      %s45 = ssub.s32 %s40, 1
      %s46 = ssub.s32 %s40, 2
      %s47 = sadd.s32 %s40, 1
      %s48 = ssub.s32 %s40, %s47
      %p49 = scmp.eq.s32.totalorder %s48, 0
      %s51 = sadd.s32 %s50, 1
      %s52 = scalar_select %p49, %s50, %s51
      %p55 = pneg %p49
      %p56 = scmp.eq.s32.totalorder %s40, 1
      %p57 = por %p55, %p56
      %p58 = scmp.ne.s32.totalorder %s50, %s53
      %p59 = scmp.eq.s32.totalorder %s40, 0
      %p60 = por %p58, %p59
      %p61 = scmp.ne.s32.totalorder %s50, %s53
      %p62 = scmp.eq.s32.totalorder %s45, 1
      %p63 = por %p61, %p62
      %p64 = scmp.ne.s32.totalorder %s53, %s54
      %p65 = scmp.eq.s32.totalorder %s45, 0
      %p66 = por %p64, %p65
      %p67 = scmp.ne.s32.totalorder %s53, %s54
      %p68 = scmp.eq.s32.totalorder %s46, 1
      %p69 = por %p67, %p68
      %p71 = scmp.ne.s32.totalorder %s54, %s70
      %p72 = scmp.eq.s32.totalorder %s46, 0
      %p73 = por %p71, %p72
      %s75 = sadd.s32 %s74, 1
      %p78 = scmp.eq.s32.totalorder %s40, 1
      %p79 = scmp.ne.s32.totalorder %s74, %s76
      %p80 = scmp.eq.s32.totalorder %s40, 0
      %p81 = por %p79, %p80
      %p82 = scmp.ne.s32.totalorder %s74, %s76
      %p83 = scmp.eq.s32.totalorder %s45, 1
      %p84 = por %p82, %p83
      %p85 = scmp.ne.s32.totalorder %s76, %s77
      %p86 = scmp.eq.s32.totalorder %s45, 0
      %p87 = por %p85, %p86
      %p88 = scmp.ne.s32.totalorder %s76, %s77
      %p89 = scmp.eq.s32.totalorder %s46, 1
      %p90 = por %p88, %p89
      %p92 = scmp.ne.s32.totalorder %s77, %s91
      %p93 = scmp.eq.s32.totalorder %s46, 0
      %p94 = por %p92, %p93
      %s96 = sadd.s32 %s95, 1
      %p99 = scmp.eq.s32.totalorder %s40, 1
      %p100 = scmp.ne.s32.totalorder %s95, %s97
      %p101 = scmp.eq.s32.totalorder %s40, 0
      %p102 = por %p100, %p101
      %p103 = scmp.ne.s32.totalorder %s95, %s97
      %p104 = scmp.eq.s32.totalorder %s45, 1
      %p105 = por %p103, %p104
      %p106 = scmp.ne.s32.totalorder %s97, %s98
      %p107 = scmp.eq.s32.totalorder %s45, 0
      %p108 = por %p106, %p107
      %p109 = scmp.ne.s32.totalorder %s97, %s98
      %p110 = scmp.eq.s32.totalorder %s46, 1
      %p111 = por %p109, %p110
      %p113 = scmp.ne.s32.totalorder %s98, %s112
      %p114 = scmp.eq.s32.totalorder %s46, 0
      %p115 = por %p113, %p114
      %s117 = sadd.s32 %s116, 1
      %p120 = scmp.eq.s32.totalorder %s40, 1
      %p121 = scmp.ne.s32.totalorder %s116, %s118
      %p122 = scmp.eq.s32.totalorder %s40, 0
      %p123 = por %p121, %p122
      %p124 = scmp.ne.s32.totalorder %s116, %s118
      %p125 = scmp.eq.s32.totalorder %s45, 1
      %p126 = por %p124, %p125
      %p127 = scmp.ne.s32.totalorder %s118, %s119
      %p128 = scmp.eq.s32.totalorder %s45, 0
      %p129 = por %p127, %p128
      %p130 = scmp.ne.s32.totalorder %s118, %s119
      %p131 = scmp.eq.s32.totalorder %s46, 1
      %p132 = por %p130, %p131
      %p134 = scmp.ne.s32.totalorder %s119, %s133
      %p135 = scmp.eq.s32.totalorder %s46, 0
      %p136 = por %p134, %p135
      %s138 = sadd.s32 %s137, 1
      %p141 = scmp.eq.s32.totalorder %s40, 1
      %p142 = scmp.ne.s32.totalorder %s137, %s139
      %p143 = scmp.eq.s32.totalorder %s40, 0
      %p144 = por %p142, %p143
      %p145 = scmp.ne.s32.totalorder %s137, %s139
      %p146 = scmp.eq.s32.totalorder %s45, 1
      %p147 = por %p145, %p146
      %p148 = scmp.ne.s32.totalorder %s139, %s140
      %p149 = scmp.eq.s32.totalorder %s45, 0
      %p150 = por %p148, %p149
      %p151 = scmp.ne.s32.totalorder %s139, %s140
      %p152 = scmp.eq.s32.totalorder %s46, 1
      %p153 = por %p151, %p152
      %p155 = scmp.ne.s32.totalorder %s140, %s154
      %p156 = scmp.eq.s32.totalorder %s46, 0
      %p157 = por %p155, %p156
      %s159 = sadd.s32 %s158, 1
      %p162 = scmp.eq.s32.totalorder %s40, 1
      %p163 = scmp.ne.s32.totalorder %s158, %s160
      %p164 = scmp.eq.s32.totalorder %s40, 0
      %p165 = por %p163, %p164
      %p166 = scmp.ne.s32.totalorder %s158, %s160
      %p167 = scmp.eq.s32.totalorder %s45, 1
      %p168 = por %p166, %p167
      %p169 = scmp.ne.s32.totalorder %s160, %s161
      %p170 = scmp.eq.s32.totalorder %s45, 0
      %p171 = por %p169, %p170
      %p172 = scmp.ne.s32.totalorder %s160, %s161
      %p173 = scmp.eq.s32.totalorder %s46, 1
      %p174 = por %p172, %p173
      %p176 = scmp.ne.s32.totalorder %s161, %s175
      %p177 = scmp.eq.s32.totalorder %s46, 0
      %p178 = por %p176, %p177
      %s180 = sadd.s32 %s179, 1
      %p183 = scmp.eq.s32.totalorder %s40, 1
      %p184 = scmp.ne.s32.totalorder %s179, %s181
      %p185 = scmp.eq.s32.totalorder %s40, 0
      %p186 = por %p184, %p185
      %p187 = scmp.ne.s32.totalorder %s179, %s181
      %p188 = scmp.eq.s32.totalorder %s45, 1
      %p189 = por %p187, %p188
      %p190 = scmp.ne.s32.totalorder %s181, %s182
      %p191 = scmp.eq.s32.totalorder %s45, 0
      %p192 = por %p190, %p191
      %p193 = scmp.ne.s32.totalorder %s181, %s182
      %p194 = scmp.eq.s32.totalorder %s46, 1
      %p195 = por %p193, %p194
      %p197 = scmp.ne.s32.totalorder %s182, %s196
      %p198 = scmp.eq.s32.totalorder %s46, 0
      %p199 = por %p197, %p198
      %s201 = sadd.s32 %s200, 1
      %p204 = scmp.eq.s32.totalorder %s40, 1
      %p205 = scmp.ne.s32.totalorder %s200, %s202
      %p206 = scmp.eq.s32.totalorder %s40, 0
      %p207 = por %p205, %p206
      %p208 = scmp.ne.s32.totalorder %s200, %s202
      %p209 = scmp.eq.s32.totalorder %s45, 1
      %p210 = por %p208, %p209
      %p211 = scmp.ne.s32.totalorder %s202, %s203
      %p212 = scmp.eq.s32.totalorder %s45, 0
      %p213 = por %p211, %p212
      %p214 = scmp.ne.s32.totalorder %s202, %s203
      %p215 = scmp.eq.s32.totalorder %s46, 1
      %p216 = por %p214, %p215
      %p218 = scmp.ne.s32.totalorder %s203, %s217
      %p219 = scmp.eq.s32.totalorder %s46, 0
      %p220 = por %p218, %p219
      %s222 = sadd.s32 %s221, 1
      %p225 = scmp.eq.s32.totalorder %s40, 1
      %p226 = scmp.ne.s32.totalorder %s221, %s223
      %p227 = scmp.eq.s32.totalorder %s40, 0
      %p228 = por %p226, %p227
      %p229 = scmp.ne.s32.totalorder %s221, %s223
      %p230 = scmp.eq.s32.totalorder %s45, 1
      %p231 = por %p229, %p230
      %p232 = scmp.ne.s32.totalorder %s223, %s224
      %p233 = scmp.eq.s32.totalorder %s45, 0
      %p234 = por %p232, %p233
      %p235 = scmp.ne.s32.totalorder %s223, %s224
      %p236 = scmp.eq.s32.totalorder %s46, 1
      %p237 = por %p235, %p236
      %p239 = scmp.ne.s32.totalorder %s224, %s238
      %p240 = scmp.eq.s32.totalorder %s46, 0
      %p241 = por %p239, %p240
      %s243 = sadd.s32 %s242, 1
      %p246 = scmp.eq.s32.totalorder %s40, 1
      %p247 = scmp.ne.s32.totalorder %s242, %s244
      %p248 = scmp.eq.s32.totalorder %s40, 0
      %p249 = por %p247, %p248
      %p250 = scmp.ne.s32.totalorder %s242, %s244
      %p251 = scmp.eq.s32.totalorder %s45, 1
      %p252 = por %p250, %p251
      %p253 = scmp.ne.s32.totalorder %s244, %s245
      %p254 = scmp.eq.s32.totalorder %s45, 0
      %p255 = por %p253, %p254
      %p256 = scmp.ne.s32.totalorder %s244, %s245
      %p257 = scmp.eq.s32.totalorder %s46, 1
      %p258 = por %p256, %p257
      %p260 = scmp.ne.s32.totalorder %s245, %s259
      %p261 = scmp.eq.s32.totalorder %s46, 0
      %p262 = por %p260, %p261
      %s264 = sadd.s32 %s263, 1
      %p267 = scmp.eq.s32.totalorder %s40, 1
      %p268 = scmp.ne.s32.totalorder %s263, %s265
      %p269 = scmp.eq.s32.totalorder %s40, 0
      %p270 = por %p268, %p269
      %p271 = scmp.ne.s32.totalorder %s263, %s265
      %p272 = scmp.eq.s32.totalorder %s45, 1
      %p273 = por %p271, %p272
      %p274 = scmp.ne.s32.totalorder %s265, %s266
      %p275 = scmp.eq.s32.totalorder %s45, 0
      %p276 = por %p274, %p275
      %p277 = scmp.ne.s32.totalorder %s265, %s266
      %p278 = scmp.eq.s32.totalorder %s46, 1
      %p279 = por %p277, %p278
      %p281 = scmp.ne.s32.totalorder %s266, %s280
      %p282 = scmp.eq.s32.totalorder %s46, 0
      %p283 = por %p281, %p282
      %s285 = sadd.s32 %s284, 1
      %p288 = scmp.eq.s32.totalorder %s40, 1
      %p289 = scmp.ne.s32.totalorder %s284, %s286
      %p290 = scmp.eq.s32.totalorder %s40, 0
      %p291 = por %p289, %p290
      %p292 = scmp.ne.s32.totalorder %s284, %s286
      %p293 = scmp.eq.s32.totalorder %s45, 1
      %p294 = por %p292, %p293
      %p295 = scmp.ne.s32.totalorder %s286, %s287
      %p296 = scmp.eq.s32.totalorder %s45, 0
      %p297 = por %p295, %p296
      %p298 = scmp.ne.s32.totalorder %s286, %s287
      %p299 = scmp.eq.s32.totalorder %s46, 1
      %p300 = por %p298, %p299
      %p302 = scmp.ne.s32.totalorder %s287, %s301
      %p303 = scmp.eq.s32.totalorder %s46, 0
      %p304 = por %p302, %p303
      %s306 = sadd.s32 %s305, 1
      %p309 = scmp.eq.s32.totalorder %s40, 1
      %p310 = scmp.ne.s32.totalorder %s305, %s307
      %p311 = scmp.eq.s32.totalorder %s40, 0
      %p312 = por %p310, %p311
      %p313 = scmp.ne.s32.totalorder %s305, %s307
      %p314 = scmp.eq.s32.totalorder %s45, 1
      %p315 = por %p313, %p314
      %p316 = scmp.ne.s32.totalorder %s307, %s308
      %p317 = scmp.eq.s32.totalorder %s45, 0
      %p318 = por %p316, %p317
      %p319 = scmp.ne.s32.totalorder %s307, %s308
      %p320 = scmp.eq.s32.totalorder %s46, 1
      %p321 = por %p319, %p320
      %p323 = scmp.ne.s32.totalorder %s308, %s322
      %p324 = scmp.eq.s32.totalorder %s46, 0
      %p325 = por %p323, %p324
      %s327 = sadd.s32 %s326, 1
      %p330 = scmp.eq.s32.totalorder %s40, 1
      %p331 = scmp.ne.s32.totalorder %s326, %s328
      %p332 = scmp.eq.s32.totalorder %s40, 0
      %p333 = por %p331, %p332
      %p334 = scmp.ne.s32.totalorder %s326, %s328
      %p335 = scmp.eq.s32.totalorder %s45, 1
      %p336 = por %p334, %p335
      %p337 = scmp.ne.s32.totalorder %s328, %s329
      %p338 = scmp.eq.s32.totalorder %s45, 0
      %p339 = por %p337, %p338
      %p340 = scmp.ne.s32.totalorder %s328, %s329
      %p341 = scmp.eq.s32.totalorder %s46, 1
      %p342 = por %p340, %p341
      %p344 = scmp.ne.s32.totalorder %s329, %s343
      %p345 = scmp.eq.s32.totalorder %s46, 0
      %p346 = por %p344, %p345
      %s348 = sadd.s32 %s347, 1
      %p351 = scmp.eq.s32.totalorder %s40, 1
      %p352 = scmp.ne.s32.totalorder %s347, %s349
      %p353 = scmp.eq.s32.totalorder %s40, 0
      %p354 = por %p352, %p353
      %p355 = scmp.ne.s32.totalorder %s347, %s349
      %p356 = scmp.eq.s32.totalorder %s45, 1
      %p357 = por %p355, %p356
      %p358 = scmp.ne.s32.totalorder %s349, %s350
      %p359 = scmp.eq.s32.totalorder %s45, 0
      %p360 = por %p358, %p359
      %p361 = scmp.ne.s32.totalorder %s349, %s350
      %p362 = scmp.eq.s32.totalorder %s46, 1
      %p363 = por %p361, %p362
      %p365 = scmp.ne.s32.totalorder %s350, %s364
      %p366 = scmp.eq.s32.totalorder %s46, 0
      %p367 = por %p365, %p366
      %s369 = sadd.s32 %s368, 1
      %p372 = scmp.eq.s32.totalorder %s40, 1
      %p373 = scmp.ne.s32.totalorder %s368, %s370
      %p374 = scmp.eq.s32.totalorder %s40, 0
      %p375 = por %p373, %p374
      %p376 = scmp.ne.s32.totalorder %s368, %s370
      %p377 = scmp.eq.s32.totalorder %s45, 1
      %p378 = por %p376, %p377
      %p379 = scmp.ne.s32.totalorder %s370, %s371
      %p380 = scmp.eq.s32.totalorder %s45, 0
      %p381 = por %p379, %p380
      %p382 = scmp.ne.s32.totalorder %s370, %s371
      %p383 = scmp.eq.s32.totalorder %s46, 1
      %p384 = por %p382, %p383
      %p386 = scmp.ne.s32.totalorder %s371, %s385
      %p387 = scmp.eq.s32.totalorder %s46, 0
      %p388 = por %p386, %p387
      %s390 = sadd.s32 %s389, 1
      %p393 = scmp.eq.s32.totalorder %s40, 1
      %p394 = scmp.ne.s32.totalorder %s389, %s391
      %p395 = scmp.eq.s32.totalorder %s40, 0
      %p396 = por %p394, %p395
      %p397 = scmp.ne.s32.totalorder %s389, %s391
      %p398 = scmp.eq.s32.totalorder %s45, 1
      %p399 = por %p397, %p398
      %p400 = scmp.ne.s32.totalorder %s391, %s392
      %p401 = scmp.eq.s32.totalorder %s45, 0
      %p402 = por %p400, %p401
      %p403 = scmp.ne.s32.totalorder %s391, %s392
      %p404 = scmp.eq.s32.totalorder %s46, 1
      %p405 = por %p403, %p404
      %p407 = scmp.ne.s32.totalorder %s392, %s406
      %p408 = scmp.eq.s32.totalorder %s46, 0
      %p409 = por %p407, %p408
      %s411 = sadd.s32 %s410, 1
      %p414 = scmp.eq.s32.totalorder %s40, 1
      %p415 = scmp.ne.s32.totalorder %s410, %s412
      %p416 = scmp.eq.s32.totalorder %s40, 0
      %p417 = por %p415, %p416
      %p418 = scmp.ne.s32.totalorder %s410, %s412
      %p419 = scmp.eq.s32.totalorder %s45, 1
      %p420 = por %p418, %p419
      %p421 = scmp.ne.s32.totalorder %s412, %s413
      %p422 = scmp.eq.s32.totalorder %s45, 0
      %p423 = por %p421, %p422
      %p424 = scmp.ne.s32.totalorder %s412, %s413
      %p425 = scmp.eq.s32.totalorder %s46, 1
      %p426 = por %p424, %p425
      %p428 = scmp.ne.s32.totalorder %s413, %s427
      %p429 = scmp.eq.s32.totalorder %s46, 0
      %p430 = por %p428, %p429
      %s432 = sadd.s32 %s431, 1
      %p435 = scmp.eq.s32.totalorder %s40, 1
      %p436 = scmp.ne.s32.totalorder %s431, %s433
      %p437 = scmp.eq.s32.totalorder %s40, 0
      %p438 = por %p436, %p437
      %p439 = scmp.ne.s32.totalorder %s431, %s433
      %p440 = scmp.eq.s32.totalorder %s45, 1
      %p441 = por %p439, %p440
      %p442 = scmp.ne.s32.totalorder %s433, %s434
      %p443 = scmp.eq.s32.totalorder %s45, 0
      %p444 = por %p442, %p443
      %p445 = scmp.ne.s32.totalorder %s433, %s434
      %p446 = scmp.eq.s32.totalorder %s46, 1
      %p447 = por %p445, %p446
      %p449 = scmp.ne.s32.totalorder %s434, %s448
      %p450 = scmp.eq.s32.totalorder %s46, 0
      %p451 = por %p449, %p450
      %s452 = ssub.s32 %s40, %s47
      %p453 = scmp.eq.s32.totalorder %s452, 0
      %s455 = sadd.s32 %s454, 1
      %s456 = scalar_select %p453, %s454, %s455
      %p459 = pneg %p453
      %p460 = scmp.eq.s32.totalorder %s40, 1
      %p461 = por %p459, %p460
      %p462 = scmp.ne.s32.totalorder %s454, %s457
      %p463 = scmp.eq.s32.totalorder %s40, 0
      %p464 = por %p462, %p463
      %p465 = scmp.ne.s32.totalorder %s454, %s457
      %p466 = scmp.eq.s32.totalorder %s45, 1
      %p467 = por %p465, %p466
      %p468 = scmp.ne.s32.totalorder %s457, %s458
      %p469 = scmp.eq.s32.totalorder %s45, 0
      %p470 = por %p468, %p469
      %p471 = scmp.ne.s32.totalorder %s457, %s458
      %p472 = scmp.eq.s32.totalorder %s46, 1
      %p473 = por %p471, %p472
      %p475 = scmp.ne.s32.totalorder %s458, %s474
      %p476 = scmp.eq.s32.totalorder %s46, 0
      %p477 = por %p475, %p476
      %p478 = scmp.le.s32.totalorder 1, %s40
      %p479 = scmp.lt.s32.totalorder %s40, 3
      %p480 = pnand %p478, %p479
      %p481 = pneg %p480
      // Predicated region
      $region9: #{adventurer_forward.7} parent=5 // pred_check
        _
      $region10: #{adventurer_forward.7} parent=5 // pred_check_branch
        %483 = sbr.rel (%p480) target = $region12
      $region11: #{adventurer_forward.7} parent=5 // pred_region
        %s484 = ssub.s32 %s40, 1
        // Predicated region
        $region13: #{adventurer_forward.7} parent=11 // pred_check
          %p485 = pneg %p87
        $region14: #{adventurer_forward.7} parent=11 // pred_check_branch
          %487 = sbr.rel (%p485) target = $region16
        $region15: #{adventurer_forward.7} parent=11 // pred_region
          %s489 = ssub.s32 16, 16
          %490 = vsyncadd [#allocation13], %s489
          %s492 = sshll.u32 [#allocation12], 4
          %s493 = int_to_ptr.vmem [resolvable:$true] %s492
          %495 = dma.hbm_to_vmem [thread:$0]  %s1, 16, %s493, [#allocation13]
        $region16: #{adventurer_forward.7} parent=11 // pred_fallthru
          _
        // Predicated region
        $region17: #{adventurer_forward.7} parent=11 // pred_check
          %p496 = pneg %p108
        $region18: #{adventurer_forward.7} parent=11 // pred_check_branch
          %498 = sbr.rel (%p496) target = $region20
        $region19: #{adventurer_forward.7} parent=11 // pred_region
          %s500 = ssub.s32 16, 16
          %501 = vsyncadd [#allocation13], %s500
          %s503 = sshll.u32 [#allocation14], 4
          %s504 = int_to_ptr.vmem [resolvable:$true] %s503
          %506 = dma.hbm_to_vmem [thread:$0]  %s2, 16, %s504, [#allocation13]
        $region20: #{adventurer_forward.7} parent=11 // pred_fallthru
          _
        // Predicated region
        $region21: #{adventurer_forward.7} parent=11 // pred_check
          %p507 = pneg %p129
        $region22: #{adventurer_forward.7} parent=11 // pred_check_branch
          %509 = sbr.rel (%p507) target = $region24
        $region23: #{adventurer_forward.7} parent=11 // pred_region
          %s511 = ssub.s32 256, 256
          %512 = vsyncadd [#allocation16], %s511
          %s513 = sshll.u32 [#allocation15], 4
          %s514 = int_to_ptr.vmem [resolvable:$true] %s513
          %519 = dma.hbm_to_vmem [thread:$0]  %s3, 256, %s514, [#allocation16], 64, 64, 4
        $region24: #{adventurer_forward.7} parent=11 // pred_fallthru
          _
        // Predicated region
        $region25: #{adventurer_forward.7} parent=11 // pred_check
          %p520 = pneg %p150
        $region26: #{adventurer_forward.7} parent=11 // pred_check_branch
          %522 = sbr.rel (%p520) target = $region28
        $region27: #{adventurer_forward.7} parent=11 // pred_region
          %s524 = ssub.s32 64, 64
          %525 = vsyncadd [#allocation16], %s524
          %s527 = sshll.u32 [#allocation17], 4
          %s528 = int_to_ptr.vmem [resolvable:$true] %s527
          %530 = dma.hbm_to_vmem [thread:$0]  %s4, 64, %s528, [#allocation16]
        $region28: #{adventurer_forward.7} parent=11 // pred_fallthru
          _
        // Predicated region
        $region29: #{adventurer_forward.7} parent=11 // pred_check
          %p531 = pneg %p171
        $region30: #{adventurer_forward.7} parent=11 // pred_check_branch
          %533 = sbr.rel (%p531) target = $region32
        $region31: #{adventurer_forward.7} parent=11 // pred_region
          %s535 = ssub.s32 16, 16
          %536 = vsyncadd [#allocation19], %s535
          %s538 = sshll.u32 [#allocation18], 4
          %s539 = int_to_ptr.vmem [resolvable:$true] %s538
          %541 = dma.hbm_to_vmem [thread:$0]  %s5, 16, %s539, [#allocation19]
        $region32: #{adventurer_forward.7} parent=11 // pred_fallthru
          _
        // Predicated region
        $region33: #{adventurer_forward.7} parent=11 // pred_check
          %p542 = pneg %p192
        $region34: #{adventurer_forward.7} parent=11 // pred_check_branch
          %544 = sbr.rel (%p542) target = $region36
        $region35: #{adventurer_forward.7} parent=11 // pred_region
          %s546 = ssub.s32 512, 512
          %547 = vsyncadd [#allocation19], %s546
          %s548 = sshll.u32 [#allocation20], 4
          %s549 = int_to_ptr.vmem [resolvable:$true] %s548
          %554 = dma.hbm_to_vmem [thread:$0]  %s6, 512, %s549, [#allocation19], 64, 64, 4
        $region36: #{adventurer_forward.7} parent=11 // pred_fallthru
          _
        // Predicated region
        $region37: #{adventurer_forward.7} parent=11 // pred_check
          %p555 = pneg %p213
        $region38: #{adventurer_forward.7} parent=11 // pred_check_branch
          %557 = sbr.rel (%p555) target = $region40
        $region39: #{adventurer_forward.7} parent=11 // pred_region
          %s559 = ssub.s32 128, 128
          %560 = vsyncadd [#allocation22], %s559
          %s561 = sshll.u32 [#allocation21], 4
          %s562 = int_to_ptr.vmem [resolvable:$true] %s561
          %567 = dma.hbm_to_vmem [thread:$0]  %s7, 128, %s562, [#allocation22], 64, 64, 4
        $region40: #{adventurer_forward.7} parent=11 // pred_fallthru
          _
        // Predicated region
        $region41: #{adventurer_forward.7} parent=11 // pred_check
          %p568 = pneg %p234
        $region42: #{adventurer_forward.7} parent=11 // pred_check_branch
          %570 = sbr.rel (%p568) target = $region44
        $region43: #{adventurer_forward.7} parent=11 // pred_region
          %s572 = ssub.s32 32, 32
          %573 = vsyncadd [#allocation22], %s572
          %s575 = sshll.u32 [#allocation23], 4
          %s576 = int_to_ptr.vmem [resolvable:$true] %s575
          %578 = dma.hbm_to_vmem [thread:$0]  %s8, 32, %s576, [#allocation22]
        $region44: #{adventurer_forward.7} parent=11 // pred_fallthru
          _
        // Predicated region
        $region45: #{adventurer_forward.7} parent=11 // pred_check
          %p579 = pneg %p255
        $region46: #{adventurer_forward.7} parent=11 // pred_check_branch
          %581 = sbr.rel (%p579) target = $region48
        $region47: #{adventurer_forward.7} parent=11 // pred_region
          %s583 = ssub.s32 16, 16
          %584 = vsyncadd [#allocation25], %s583
          %s586 = sshll.u32 [#allocation24], 4
          %s587 = int_to_ptr.vmem [resolvable:$true] %s586
          %589 = dma.hbm_to_vmem [thread:$0]  %s9, 16, %s587, [#allocation25]
        $region48: #{adventurer_forward.7} parent=11 // pred_fallthru
          _
        // Predicated region
        $region49: #{adventurer_forward.7} parent=11 // pred_check
          %p590 = pneg %p276
        $region50: #{adventurer_forward.7} parent=11 // pred_check_branch
          %592 = sbr.rel (%p590) target = $region52
        $region51: #{adventurer_forward.7} parent=11 // pred_region
          %s594 = ssub.s32 128, 128
          %595 = vsyncadd [#allocation25], %s594
          %s597 = sshll.u32 [#allocation26], 4
          %s598 = int_to_ptr.vmem [resolvable:$true] %s597
          %600 = dma.hbm_to_vmem [thread:$0]  %s10, 128, %s598, [#allocation25]
        $region52: #{adventurer_forward.7} parent=11 // pred_fallthru
          _
        // Predicated region
        $region53: #{adventurer_forward.7} parent=11 // pred_check
          %p601 = pneg %p297
        $region54: #{adventurer_forward.7} parent=11 // pred_check_branch
          %603 = sbr.rel (%p601) target = $region56
        $region55: #{adventurer_forward.7} parent=11 // pred_region
          %s605 = ssub.s32 16, 16
          %606 = vsyncadd [#allocation28], %s605
          %s608 = sshll.u32 [#allocation27], 4
          %s609 = int_to_ptr.vmem [resolvable:$true] %s608
          %611 = dma.hbm_to_vmem [thread:$0]  %s11, 16, %s609, [#allocation28]
        $region56: #{adventurer_forward.7} parent=11 // pred_fallthru
          _
        // Predicated region
        $region57: #{adventurer_forward.7} parent=11 // pred_check
          %p612 = pneg %p318
        $region58: #{adventurer_forward.7} parent=11 // pred_check_branch
          %614 = sbr.rel (%p612) target = $region60
        $region59: #{adventurer_forward.7} parent=11 // pred_region
          %s616 = ssub.s32 512, 512
          %617 = vsyncadd [#allocation28], %s616
          %s618 = sshll.u32 [#allocation29], 4
          %s619 = int_to_ptr.vmem [resolvable:$true] %s618
          %624 = dma.hbm_to_vmem [thread:$0]  %s12, 512, %s619, [#allocation28], 64, 64, 4
        $region60: #{adventurer_forward.7} parent=11 // pred_fallthru
          _
        // Predicated region
        $region61: #{adventurer_forward.7} parent=11 // pred_check
          %p625 = pneg %p339
        $region62: #{adventurer_forward.7} parent=11 // pred_check_branch
          %627 = sbr.rel (%p625) target = $region64
        $region63: #{adventurer_forward.7} parent=11 // pred_region
          %s629 = ssub.s32 16, 16
          %630 = vsyncadd [#allocation31], %s629
          %s632 = sshll.u32 [#allocation30], 4
          %s633 = int_to_ptr.vmem [resolvable:$true] %s632
          %635 = dma.hbm_to_vmem [thread:$0]  %s13, 16, %s633, [#allocation31]
        $region64: #{adventurer_forward.7} parent=11 // pred_fallthru
          _
        // Predicated region
        $region65: #{adventurer_forward.7} parent=11 // pred_check
          %p636 = pneg %p360
        $region66: #{adventurer_forward.7} parent=11 // pred_check_branch
          %638 = sbr.rel (%p636) target = $region68
        $region67: #{adventurer_forward.7} parent=11 // pred_region
          %s640 = ssub.s32 16, 16
          %641 = vsyncadd [#allocation31], %s640
          %s643 = sshll.u32 [#allocation32], 4
          %s644 = int_to_ptr.vmem [resolvable:$true] %s643
          %646 = dma.hbm_to_vmem [thread:$0]  %s14, 16, %s644, [#allocation31]
        $region68: #{adventurer_forward.7} parent=11 // pred_fallthru
          _
        // Predicated region
        $region69: #{adventurer_forward.7} parent=11 // pred_check
          %p647 = pneg %p381
        $region70: #{adventurer_forward.7} parent=11 // pred_check_branch
          %649 = sbr.rel (%p647) target = $region72
        $region71: #{adventurer_forward.7} parent=11 // pred_region
          %s651 = ssub.s32 512, 512
          %652 = vsyncadd [#allocation34], %s651
          %s653 = sshll.u32 [#allocation33], 4
          %s654 = int_to_ptr.vmem [resolvable:$true] %s653
          %659 = dma.hbm_to_vmem [thread:$0]  %s15, 512, %s654, [#allocation34], 128, 128, 8
        $region72: #{adventurer_forward.7} parent=11 // pred_fallthru
          _
        // Predicated region
        $region73: #{adventurer_forward.7} parent=11 // pred_check
          %p660 = pneg %p402
        $region74: #{adventurer_forward.7} parent=11 // pred_check_branch
          %662 = sbr.rel (%p660) target = $region76
        $region75: #{adventurer_forward.7} parent=11 // pred_region
          %s664 = ssub.s32 32, 32
          %665 = vsyncadd [#allocation34], %s664
          %s667 = sshll.u32 [#allocation35], 4
          %s668 = int_to_ptr.vmem [resolvable:$true] %s667
          %670 = dma.hbm_to_vmem [thread:$0]  %s16, 32, %s668, [#allocation34]
        $region76: #{adventurer_forward.7} parent=11 // pred_fallthru
          _
        // Predicated region
        $region77: #{adventurer_forward.7} parent=11 // pred_check
          %p671 = pneg %p423
        $region78: #{adventurer_forward.7} parent=11 // pred_check_branch
          %673 = sbr.rel (%p671) target = $region80
        $region79: #{adventurer_forward.7} parent=11 // pred_region
          %s675 = ssub.s32 640, 640
          %676 = vsyncadd [#allocation37], %s675
          %s677 = sshll.u32 [#allocation36], 4
          %s678 = int_to_ptr.vmem [resolvable:$true] %s677
          %683 = dma.hbm_to_vmem [thread:$0]  %s17, 640, %s678, [#allocation37], 64, 64, 4
        $region80: #{adventurer_forward.7} parent=11 // pred_fallthru
          _
        // Predicated region
        $region81: #{adventurer_forward.7} parent=11 // pred_check
          %p684 = pneg %p444
        $region82: #{adventurer_forward.7} parent=11 // pred_check_branch
          %686 = sbr.rel (%p684) target = $region84
        $region83: #{adventurer_forward.7} parent=11 // pred_region
          %s688 = ssub.s32 16, 16
          %689 = vsyncadd [#allocation37], %s688
          %s691 = sshll.u32 [#allocation38], 4
          %s692 = int_to_ptr.vmem [resolvable:$true] %s691
          %694 = dma.hbm_to_vmem [thread:$0]  %s18, 16, %s692, [#allocation37]
        $region84: #{adventurer_forward.7} parent=11 // pred_fallthru
          _
      $region12: #{adventurer_forward.7} parent=5 // pred_fallthru
        _
      %p695 = scmp.lt.s32.totalorder %s40, 2
      // Predicated region
      $region85: #{adventurer_forward.7} parent=5 // pred_check
        %p696 = pneg %p695
      $region86: #{adventurer_forward.7} parent=5 // pred_check_branch
        %698 = sbr.rel (%p696) target = $region88
      $region87: #{adventurer_forward.7} parent=5 // pred_region
        // Predicated region
        $region89: #{adventurer_forward.7} parent=87 // pred_check
          %p699 = pneg %p60
        $region90: #{adventurer_forward.7} parent=87 // pred_check_branch
          %701 = sbr.rel (%p699) target = $region92
        $region91: #{adventurer_forward.7} parent=87 // pred_region
          %s702 = sand.u32 %s50, 1
          %s703 = scalar_lea.sflag [#allocation10], %s702
          %s704 = sand.u32 %s50, 1
          %s705 = smul.addr %s704, 8
          %s706 = scalar_lea.vmem [#allocation9], %s705
          %s708 = ssub.s32 128, 128
          %709 = vsyncadd %s703, %s708
          %s710 = smul.addr %s40, 128
          %s711 = scalar_lea.hbm %s0, %s710
          %s713 = sshll.u32 %s706, 4
          %s714 = int_to_ptr.vmem [resolvable:$true] %s713
          %716 = dma.hbm_to_vmem [thread:$0]  %s711, 128, %s714, %s703
        $region92: #{adventurer_forward.7} parent=87 // pred_fallthru
          _
      $region88: #{adventurer_forward.7} parent=5 // pred_fallthru
        _
      %p717 = scmp.le.s32.totalorder 1, %s40
      %p718 = scmp.lt.s32.totalorder %s40, 3
      %p719 = pnand %p717, %p718
      %p720 = pneg %p719
      // Predicated region
      $region93: #{adventurer_forward.7} parent=5 // pred_check
        _
      $region94: #{adventurer_forward.7} parent=5 // pred_check_branch
        %722 = sbr.rel (%p719) target = $region96
      $region95: #{adventurer_forward.7} parent=5 // pred_region
        %s723 = ssub.s32 %s40, 1
        %s724 = sand.u32 %s53, 1
        %s725 = scalar_lea.sflag [#allocation10], %s724
        %s726 = sand.u32 %s53, 1
        %s727 = smul.addr %s726, 8
        %s728 = scalar_lea.vmem [#allocation9], %s727
        // Predicated region
        $region97: #{adventurer_forward.7} parent=95 // pred_check
          %p729 = pneg %p66
        $region98: #{adventurer_forward.7} parent=95 // pred_check_branch
          %731 = sbr.rel (%p729) target = $region100
        $region99: #{adventurer_forward.7} parent=95 // pred_region
          %732 = dma.done %s725, 128
        $region100: #{adventurer_forward.7} parent=95 // pred_fallthru
          _
        // Predicated region
        $region101: #{adventurer_forward.7} parent=95 // pred_check
          %p733 = pneg %p87
        $region102: #{adventurer_forward.7} parent=95 // pred_check_branch
          %735 = sbr.rel (%p733) target = $region104
        $region103: #{adventurer_forward.7} parent=95 // pred_region
          %736 = dma.done [#allocation13], 16
        $region104: #{adventurer_forward.7} parent=95 // pred_fallthru
          _
        // Predicated region
        $region105: #{adventurer_forward.7} parent=95 // pred_check
          %p737 = pneg %p108
        $region106: #{adventurer_forward.7} parent=95 // pred_check_branch
          %739 = sbr.rel (%p737) target = $region108
        $region107: #{adventurer_forward.7} parent=95 // pred_region
          %740 = dma.done [#allocation13], 16
        $region108: #{adventurer_forward.7} parent=95 // pred_fallthru
          _
        // Predicated region
        $region109: #{adventurer_forward.7} parent=95 // pred_check
          %p741 = pneg %p129
        $region110: #{adventurer_forward.7} parent=95 // pred_check_branch
          %743 = sbr.rel (%p741) target = $region112
        $region111: #{adventurer_forward.7} parent=95 // pred_region
          %744 = dma.done [#allocation16], 256
        $region112: #{adventurer_forward.7} parent=95 // pred_fallthru
          _
        // Predicated region
        $region113: #{adventurer_forward.7} parent=95 // pred_check
          %p745 = pneg %p150
        $region114: #{adventurer_forward.7} parent=95 // pred_check_branch
          %747 = sbr.rel (%p745) target = $region116
        $region115: #{adventurer_forward.7} parent=95 // pred_region
          %748 = dma.done [#allocation16], 64
        $region116: #{adventurer_forward.7} parent=95 // pred_fallthru
          _
        // Predicated region
        $region117: #{adventurer_forward.7} parent=95 // pred_check
          %p749 = pneg %p171
        $region118: #{adventurer_forward.7} parent=95 // pred_check_branch
          %751 = sbr.rel (%p749) target = $region120
        $region119: #{adventurer_forward.7} parent=95 // pred_region
          %752 = dma.done [#allocation19], 16
        $region120: #{adventurer_forward.7} parent=95 // pred_fallthru
          _
        // Predicated region
        $region121: #{adventurer_forward.7} parent=95 // pred_check
          %p753 = pneg %p192
        $region122: #{adventurer_forward.7} parent=95 // pred_check_branch
          %755 = sbr.rel (%p753) target = $region124
        $region123: #{adventurer_forward.7} parent=95 // pred_region
          %756 = dma.done [#allocation19], 512
        $region124: #{adventurer_forward.7} parent=95 // pred_fallthru
          _
        // Predicated region
        $region125: #{adventurer_forward.7} parent=95 // pred_check
          %p757 = pneg %p213
        $region126: #{adventurer_forward.7} parent=95 // pred_check_branch
          %759 = sbr.rel (%p757) target = $region128
        $region127: #{adventurer_forward.7} parent=95 // pred_region
          %760 = dma.done [#allocation22], 128
        $region128: #{adventurer_forward.7} parent=95 // pred_fallthru
          _
        // Predicated region
        $region129: #{adventurer_forward.7} parent=95 // pred_check
          %p761 = pneg %p234
        $region130: #{adventurer_forward.7} parent=95 // pred_check_branch
          %763 = sbr.rel (%p761) target = $region132
        $region131: #{adventurer_forward.7} parent=95 // pred_region
          %764 = dma.done [#allocation22], 32
        $region132: #{adventurer_forward.7} parent=95 // pred_fallthru
          _
        // Predicated region
        $region133: #{adventurer_forward.7} parent=95 // pred_check
          %p765 = pneg %p255
        $region134: #{adventurer_forward.7} parent=95 // pred_check_branch
          %767 = sbr.rel (%p765) target = $region136
        $region135: #{adventurer_forward.7} parent=95 // pred_region
          %768 = dma.done [#allocation25], 16
        $region136: #{adventurer_forward.7} parent=95 // pred_fallthru
          _
        // Predicated region
        $region137: #{adventurer_forward.7} parent=95 // pred_check
          %p769 = pneg %p276
        $region138: #{adventurer_forward.7} parent=95 // pred_check_branch
          %771 = sbr.rel (%p769) target = $region140
        $region139: #{adventurer_forward.7} parent=95 // pred_region
          %772 = dma.done [#allocation25], 128
        $region140: #{adventurer_forward.7} parent=95 // pred_fallthru
          _
        // Predicated region
        $region141: #{adventurer_forward.7} parent=95 // pred_check
          %p773 = pneg %p297
        $region142: #{adventurer_forward.7} parent=95 // pred_check_branch
          %775 = sbr.rel (%p773) target = $region144
        $region143: #{adventurer_forward.7} parent=95 // pred_region
          %776 = dma.done [#allocation28], 16
        $region144: #{adventurer_forward.7} parent=95 // pred_fallthru
          _
        // Predicated region
        $region145: #{adventurer_forward.7} parent=95 // pred_check
          %p777 = pneg %p318
        $region146: #{adventurer_forward.7} parent=95 // pred_check_branch
          %779 = sbr.rel (%p777) target = $region148
        $region147: #{adventurer_forward.7} parent=95 // pred_region
          %780 = dma.done [#allocation28], 512
        $region148: #{adventurer_forward.7} parent=95 // pred_fallthru
          _
        // Predicated region
        $region149: #{adventurer_forward.7} parent=95 // pred_check
          %p781 = pneg %p339
        $region150: #{adventurer_forward.7} parent=95 // pred_check_branch
          %783 = sbr.rel (%p781) target = $region152
        $region151: #{adventurer_forward.7} parent=95 // pred_region
          %784 = dma.done [#allocation31], 16
        $region152: #{adventurer_forward.7} parent=95 // pred_fallthru
          _
        // Predicated region
        $region153: #{adventurer_forward.7} parent=95 // pred_check
          %p785 = pneg %p360
        $region154: #{adventurer_forward.7} parent=95 // pred_check_branch
          %787 = sbr.rel (%p785) target = $region156
        $region155: #{adventurer_forward.7} parent=95 // pred_region
          %788 = dma.done [#allocation31], 16
        $region156: #{adventurer_forward.7} parent=95 // pred_fallthru
          _
        // Predicated region
        $region157: #{adventurer_forward.7} parent=95 // pred_check
          %p789 = pneg %p381
        $region158: #{adventurer_forward.7} parent=95 // pred_check_branch
          %791 = sbr.rel (%p789) target = $region160
        $region159: #{adventurer_forward.7} parent=95 // pred_region
          %792 = dma.done [#allocation34], 512
        $region160: #{adventurer_forward.7} parent=95 // pred_fallthru
          _
        // Predicated region
        $region161: #{adventurer_forward.7} parent=95 // pred_check
          %p793 = pneg %p402
        $region162: #{adventurer_forward.7} parent=95 // pred_check_branch
          %795 = sbr.rel (%p793) target = $region164
        $region163: #{adventurer_forward.7} parent=95 // pred_region
          %796 = dma.done [#allocation34], 32
        $region164: #{adventurer_forward.7} parent=95 // pred_fallthru
          _
        // Predicated region
        $region165: #{adventurer_forward.7} parent=95 // pred_check
          %p797 = pneg %p423
        $region166: #{adventurer_forward.7} parent=95 // pred_check_branch
          %799 = sbr.rel (%p797) target = $region168
        $region167: #{adventurer_forward.7} parent=95 // pred_region
          %800 = dma.done [#allocation37], 640
        $region168: #{adventurer_forward.7} parent=95 // pred_fallthru
          _
        // Predicated region
        $region169: #{adventurer_forward.7} parent=95 // pred_check
          %p801 = pneg %p444
        $region170: #{adventurer_forward.7} parent=95 // pred_check_branch
          %803 = sbr.rel (%p801) target = $region172
        $region171: #{adventurer_forward.7} parent=95 // pred_region
          %804 = dma.done [#allocation37], 16
        $region172: #{adventurer_forward.7} parent=95 // pred_fallthru
          _
        %s805 = sand.u32 %s53, 1
        %s806 = scalar_lea.sflag [#allocation10], %s805
        %s807 = sand.u32 %s53, 1
        %s808 = smul.addr %s807, 8
        %s809 = scalar_lea.vmem [#allocation9], %s808
        %p810 = pneg %p66
        %p811 = pneg %p63
        %p812 = pneg %p87
        %p813 = pneg %p84
        %p814 = pneg %p108
        %p815 = pneg %p105
        %p816 = pneg %p129
        %p817 = pneg %p126
        %p818 = pneg %p150
        %p819 = pneg %p147
        %p820 = pneg %p171
        %p821 = pneg %p168
        %p822 = pneg %p192
        %p823 = pneg %p189
        %p824 = pneg %p213
        %p825 = pneg %p210
        %p826 = pneg %p234
        %p827 = pneg %p231
        %p828 = pneg %p255
        %p829 = pneg %p252
        %p830 = pneg %p276
        %p831 = pneg %p273
        %p832 = pneg %p297
        %p833 = pneg %p294
        %p834 = pneg %p318
        %p835 = pneg %p315
        %p836 = pneg %p339
        %p837 = pneg %p336
        %p838 = pneg %p360
        %p839 = pneg %p357
        %p840 = pneg %p381
        %p841 = pneg %p378
        %p842 = pneg %p402
        %p843 = pneg %p399
        %p844 = pneg %p423
        %p845 = pneg %p420
        %p846 = pneg %p444
        %p847 = pneg %p441
        %p848 = pneg %p470
        %p849 = pneg %p467
        %s850 = sand.u32 %s457, 1
        %s851 = scalar_lea.sflag [#allocation11], %s850
        %s852 = sand.u32 %s457, 1
        %s853 = smul.addr %s852, 8
        %s854 = scalar_lea.vmem [#allocation39], %s853
        %v856 = vld [vmem:[%s728] sm:$0x1f]
        %v857 = vld [vmem:[#allocation12] sm:$0x1]
        %v858 = vld [vmem:[#allocation14] sm:$0x1]
        %vm859 = vcmask 258048
        %v860 = vsel %vm859, %v856, 0.0
        %861 = vadd.xlane.f32.xlu0 %v860
        %v862 = vpop.xlane.xlu0 %861
        %v863 = vrcp.pop 32.0
        %v864 = vmul.f32 %v862, %v863
        %v865 = vsub.f32 %v856, %v864
        %v866 = vmul.f32 %v865, %v865
        %v867 = vsel %vm859, %v866, 0.0
        %868 = vadd.xlane.f32.xlu0 %v867
        %v869 = vpop.xlane.xlu0 %868
        %v870 = vmul.f32 %v869, %v863
        %v871 = vadd.f32 %v870, 1e-05
        %v872 = vrsqrt.pop %v871
        %v873 = vmul.f32 %v865, %v872
        %v875 = vlaneseq
        %v876 = vshrl.u32 %v875, 7
        %v877 = vsub.s32 0, %v876
        %v878 = vrot.slane %v857, %v877
        %v880 = vmul.f32 %v873, %v878
        %v882 = vlaneseq
        %v883 = vshrl.u32 %v882, 7
        %v884 = vsub.s32 0, %v883
        %v885 = vrot.slane %v858, %v884
        %v887 = vadd.f32 %v880, %v885
        %v888 = vsel %vm859, %v887, 0.0
        %v889 = vrot.slane %v888, 4
        %v890 = vadd.f32 %v888, %v889
        %v891 = vrot.slane %v890, 2
        %v892 = vadd.f32 %v890, %v891
        %v893 = vrot.slane %v892, 1
        %v894 = vadd.f32 %v892, %v893
        %v895 = vrcp.pop 5.0
        %v896 = vmul.f32 %v894, %v895
        %vm897 = vcmask 253952
        %898 = vst.msk [vmem:[#allocation2] sm:$0x1] %vm897, %v896
        %899 = vst.msk [vmem:[#allocation2 + $0x1] sm:$0x1f] %vm859, %v887
        %vm900 = vcmask 254976
        %901 = vst.msk [vmem:[#allocation2 + $0x6] sm:$0x3] %vm900, 0.0
        %v902 = vld [vmem:[#allocation2] sm:$0xff]
        %v903 = vpack.c.bf16 %v902, %v902
        %v904 = vld [vmem:[#allocation15] sm:$0xf]
        %v905 = vld [vmem:[#allocation15 + $0x4] sm:$0xf]
        %v906 = vld [vmem:[#allocation15 + $0x8] sm:$0xf]
        %v907 = vld [vmem:[#allocation15 + $0xc] sm:$0xf]
        %v912 = vunpack.c.l.b16 %v904
        %v913 = vunpack.c.l.b16 %v905
        %v914 = vunpack.c.l.b16 %v906
        %v915 = vunpack.c.l.b16 %v907
        %v916 = vpack.c.b16 %v913, %v912
        %v917 = vpack.c.b16 %v915, %v914
        %vm920 = vcmask 261120
        %v922 = vsel %vm920, %v903, 0
        %924 = vmatprep.subr.bf16.mxu0 0
        %925 = vmatpush1.bf16.msra.mxu0 %v916
        %926 = vmatprep.subr.bf16.mxu0 0
        %927 = vmatpush1.bf16.msra.mxu0 %v917
        %928 = vmatprep.subr.bf16.mxu0 0
        %929 = vmatpush1.bf16.msra.mxu0 0
        %930 = vmatprep.subr.bf16.mxu0 0
        %931 = vmatpush1.bf16.msra.mxu0 0
        %932 = vmatprep.subr.bf16.mxu0 0
        %933 = vmatpush1.bf16.msra.mxu0 0
        %934 = vmatprep.subr.bf16.mxu0 0
        %935 = vmatpush1.bf16.msra.mxu0 0
        %936 = vmatprep.subr.bf16.mxu0 0
        %937 = vmatpush1.bf16.msra.mxu0 0
        %938 = vmatprep.subr.bf16.mxu0 0
        %939 = vmatpush1.bf16.msra.mxu0 0
        %940 = vmatprep.subr.bf16.mxu0 0
        %941 = vmatpush1.bf16.msra.mxu0 0
        %942 = vmatprep.subr.bf16.mxu0 0
        %943 = vmatpush1.bf16.msra.mxu0 0
        %944 = vmatprep.subr.bf16.mxu0 0
        %945 = vmatpush1.bf16.msra.mxu0 0
        %946 = vmatprep.subr.bf16.mxu0 0
        %947 = vmatpush1.bf16.msra.mxu0 0
        %948 = vmatprep.subr.bf16.mxu0 0
        %949 = vmatpush1.bf16.msra.mxu0 0
        %950 = vmatprep.subr.bf16.mxu0 0
        %951 = vmatpush1.bf16.msra.mxu0 0
        %952 = vmatprep.subr.bf16.mxu0 0
        %953 = vmatpush1.bf16.msra.mxu0 0
        %954 = vmatprep.subr.bf16.mxu0 0
        %955 = vmatpush1.bf16.msra.mxu0 0
        %956 = vmatprep.mubr.bf16.mxu0 0
        %957 = vmatmul.mubr.bf16.gmra.mrb[0].mxu0 %v922
        %v958 = vpop.f32.mrb[0].mxu0
        %v959 = vadd.f32 0.0, %v958
        %v960 = vpop.f32.mrb[0].mxu0
        %v961 = vpop.f32.mrb[0].mxu0
        %v962 = vpop.f32.mrb[0].mxu0
        %963 = vdwg.mxu0
        %vm964 = vcmask 518144
        %965 = vst.msk [vmem:[#allocation3] sm:$0x7] %vm964, 0.0
        %vm966 = vcmask 523264
        %967 = vst.msk [vmem:[#allocation3 + $0x3] sm:$0xff] %vm966, %v959
        %v968 = vld [vmem:[#allocation3] sm:$0xff]
        %v969 = vld [vmem:[#allocation17] sm:$0x1]
        %v970 = vlaneseq
        %v971 = vshrl.u32 %v970, 7
        %v972 = vsub.s32 0, %v971
        %v973 = vrot.slane %v969, %v972
        %v974 = vmul.f32 %v968, %v973
        %v975 = vadd.f32 %v974, 0.0
        %v976 = vld [vmem:[#allocation3 + $0x1] sm:$0xff]
        %v977 = vld [vmem:[#allocation17 + $0x1] sm:$0x1]
        %v978 = vlaneseq
        %v979 = vshrl.u32 %v978, 7
        %v980 = vsub.s32 0, %v979
        %v981 = vrot.slane %v977, %v980
        %v982 = vmul.f32 %v976, %v981
        %v983 = vadd.f32 %v975, %v982
        %v984 = vld [vmem:[#allocation3 + $0x2] sm:$0xff]
        %v985 = vld [vmem:[#allocation17 + $0x2] sm:$0x1]
        %v986 = vlaneseq
        %v987 = vshrl.u32 %v986, 7
        %v988 = vsub.s32 0, %v987
        %v989 = vrot.slane %v985, %v988
        %v990 = vmul.f32 %v984, %v989
        %v991 = vadd.f32 %v983, %v990
        %v992 = vld [vmem:[#allocation3 + $0x3] sm:$0xff]
        %v993 = vld [vmem:[#allocation17 + $0x3] sm:$0x1]
        %v994 = vlaneseq
        %v995 = vshrl.u32 %v994, 7
        %v996 = vsub.s32 0, %v995
        %v997 = vrot.slane %v993, %v996
        %v998 = vmul.f32 %v992, %v997
        %v999 = vadd.f32 %v991, %v998
        %v1000 = vld [vmem:[#allocation18] sm:$0x1]
        %v1002 = vlaneseq
        %v1003 = vshrl.u32 %v1002, 7
        %v1004 = vsub.s32 0, %v1003
        %v1005 = vrot.slane %v1000, %v1004
        %v1007 = vadd.f32 %v999, %v1005
        %v1008 = vsub.f32 0.0, %v1007
        %v1009 = vmul.f32 %v1008, 1.442695
        %v1010 = vpow.pop %v1009
        %v1011 = vadd.f32 %v1010, 1.0
        %v1012 = vrcp.pop %v1011
        %v1013 = vmul.f32 1.0, %v1012
        %v1014 = vmul.f32 %v1007, %v1013
        %v1015 = vpack.c.bf16 %v1014, %v1014
        %v1016 = vld [vmem:[#allocation20] sm:$0xf]
        %v1017 = vld [vmem:[#allocation20 + $0x4] sm:$0xf]
        %v1018 = vld [vmem:[#allocation20 + $0x8] sm:$0xf]
        %v1019 = vld [vmem:[#allocation20 + $0xc] sm:$0xf]
        %v1020 = vld [vmem:[#allocation20 + $0x10] sm:$0xf]
        %v1021 = vld [vmem:[#allocation20 + $0x14] sm:$0xf]
        %v1022 = vld [vmem:[#allocation20 + $0x18] sm:$0xf]
        %v1023 = vld [vmem:[#allocation20 + $0x1c] sm:$0xf]
        %v1032 = vunpack.c.l.b16 %v1016
        %v1033 = vunpack.c.l.b16 %v1017
        %v1034 = vunpack.c.l.b16 %v1018
        %v1035 = vunpack.c.l.b16 %v1019
        %v1036 = vunpack.c.l.b16 %v1020
        %v1037 = vunpack.c.l.b16 %v1021
        %v1038 = vunpack.c.l.b16 %v1022
        %v1039 = vunpack.c.l.b16 %v1023
        %v1040 = vpack.c.b16 %v1033, %v1032
        %v1041 = vpack.c.b16 %v1035, %v1034
        %v1042 = vpack.c.b16 %v1037, %v1036
        %v1043 = vpack.c.b16 %v1039, %v1038
        %v1049 = vsel %vm966, %v1015, 0
        %1051 = vmatprep.subr.bf16.mxu0 0
        %1052 = vmatpush1.bf16.msra.mxu0 %v1040
        %1053 = vmatprep.subr.bf16.mxu0 0
        %1054 = vmatpush1.bf16.msra.mxu0 %v1041
        %1055 = vmatprep.subr.bf16.mxu0 0
        %1056 = vmatpush1.bf16.msra.mxu0 %v1042
        %1057 = vmatprep.subr.bf16.mxu0 0
        %1058 = vmatpush1.bf16.msra.mxu0 %v1043
        %1059 = vmatprep.subr.bf16.mxu0 0
        %1060 = vmatpush1.bf16.msra.mxu0 0
        %1061 = vmatprep.subr.bf16.mxu0 0
        %1062 = vmatpush1.bf16.msra.mxu0 0
        %1063 = vmatprep.subr.bf16.mxu0 0
        %1064 = vmatpush1.bf16.msra.mxu0 0
        %1065 = vmatprep.subr.bf16.mxu0 0
        %1066 = vmatpush1.bf16.msra.mxu0 0
        %1067 = vmatprep.subr.bf16.mxu0 0
        %1068 = vmatpush1.bf16.msra.mxu0 0
        %1069 = vmatprep.subr.bf16.mxu0 0
        %1070 = vmatpush1.bf16.msra.mxu0 0
        %1071 = vmatprep.subr.bf16.mxu0 0
        %1072 = vmatpush1.bf16.msra.mxu0 0
        %1073 = vmatprep.subr.bf16.mxu0 0
        %1074 = vmatpush1.bf16.msra.mxu0 0
        %1075 = vmatprep.subr.bf16.mxu0 0
        %1076 = vmatpush1.bf16.msra.mxu0 0
        %1077 = vmatprep.subr.bf16.mxu0 0
        %1078 = vmatpush1.bf16.msra.mxu0 0
        %1079 = vmatprep.subr.bf16.mxu0 0
        %1080 = vmatpush1.bf16.msra.mxu0 0
        %1081 = vmatprep.subr.bf16.mxu0 0
        %1082 = vmatpush1.bf16.msra.mxu0 0
        %1083 = vmatprep.mubr.bf16.mxu0 0
        %1084 = vmatmul.mubr.bf16.gmra.mrb[0].mxu0 %v1049
        %v1085 = vpop.f32.mrb[0].mxu0
        %v1086 = vadd.f32 0.0, %v1085
        %v1087 = vpop.f32.mrb[0].mxu0
        %v1088 = vpop.f32.mrb[0].mxu0
        %v1089 = vpop.f32.mrb[0].mxu0
        %1090 = vdwg.mxu0
        %v1091 = vld [vmem:[#allocation23] sm:$0x3]
        %v1092 = vld [vmem:[#allocation24] sm:$0x1]
        %v1094 = vlaneseq
        %v1095 = vshrl.u32 %v1094, 7
        %v1096 = vsub.s32 0, %v1095
        %v1097 = vrot.slane %v1092, %v1096
        %vm1099 = vcmask 15360
        %v1101 = vsel %vm1099, %v1086, 0
        %vm1103 = vcmask 1041408
        %v1105 = vsel %vm1103, %v1091, 0
        %1107 = vmatprep.subr.mxu0 0.0
        %1108 = vmatpush1.msra.mxu0 %v1105
        %1109 = vmatprep.subr.mxu0 0.0
        %1110 = vmatpush1.msra.mxu0 0.0
        %1111 = vmatprep.subr.mxu0 0.0
        %1112 = vmatpush1.msra.mxu0 0.0
        %1113 = vmatprep.subr.mxu0 0.0
        %1114 = vmatpush1.msra.mxu0 0.0
        %1115 = vmatprep.subr.mxu0 0.0
        %1116 = vmatpush1.msra.mxu0 0.0
        %1117 = vmatprep.subr.mxu0 0.0
        %1118 = vmatpush1.msra.mxu0 0.0
        %1119 = vmatprep.subr.mxu0 0.0
        %1120 = vmatpush1.msra.mxu0 0.0
        %1121 = vmatprep.subr.mxu0 0.0
        %1122 = vmatpush1.msra.mxu0 0.0
        %1123 = vmatprep.subr.mxu0 0.0
        %1124 = vmatpush1.msra.mxu0 0.0
        %1125 = vmatprep.subr.mxu0 0.0
        %1126 = vmatpush1.msra.mxu0 0.0
        %1127 = vmatprep.subr.mxu0 0.0
        %1128 = vmatpush1.msra.mxu0 0.0
        %1129 = vmatprep.subr.mxu0 0.0
        %1130 = vmatpush1.msra.mxu0 0.0
        %1131 = vmatprep.subr.mxu0 0.0
        %1132 = vmatpush1.msra.mxu0 0.0
        %1133 = vmatprep.subr.mxu0 0.0
        %1134 = vmatpush1.msra.mxu0 0.0
        %1135 = vmatprep.subr.mxu0 0.0
        %1136 = vmatpush1.msra.mxu0 0.0
        %1137 = vmatprep.subr.mxu0 0.0
        %1138 = vmatpush1.msra.mxu0 0.0
        %1139 = vmatprep.subr.mxu0 0.0
        %1140 = vmatpush1.msra.mxu0 0.0
        %1141 = vmatprep.subr.mxu0 0.0
        %1142 = vmatpush1.msra.mxu0 0.0
        %1143 = vmatprep.subr.mxu0 0.0
        %1144 = vmatpush1.msra.mxu0 0.0
        %1145 = vmatprep.subr.mxu0 0.0
        %1146 = vmatpush1.msra.mxu0 0.0
        %1147 = vmatprep.subr.mxu0 0.0
        %1148 = vmatpush1.msra.mxu0 0.0
        %1149 = vmatprep.subr.mxu0 0.0
        %1150 = vmatpush1.msra.mxu0 0.0
        %1151 = vmatprep.subr.mxu0 0.0
        %1152 = vmatpush1.msra.mxu0 0.0
        %1153 = vmatprep.subr.mxu0 0.0
        %1154 = vmatpush1.msra.mxu0 0.0
        %1155 = vmatprep.subr.mxu0 0.0
        %1156 = vmatpush1.msra.mxu0 0.0
        %1157 = vmatprep.subr.mxu0 0.0
        %1158 = vmatpush1.msra.mxu0 0.0
        %1159 = vmatprep.subr.mxu0 0.0
        %1160 = vmatpush1.msra.mxu0 0.0
        %1161 = vmatprep.subr.mxu0 0.0
        %1162 = vmatpush1.msra.mxu0 0.0
        %1163 = vmatprep.subr.mxu0 0.0
        %1164 = vmatpush1.msra.mxu0 0.0
        %1165 = vmatprep.subr.mxu0 0.0
        %1166 = vmatpush1.msra.mxu0 0.0
        %1167 = vmatprep.subr.mxu0 0.0
        %1168 = vmatpush1.msra.mxu0 0.0
        %1169 = vmatprep.subr.mxu0 0.0
        %1170 = vmatpush1.msra.mxu0 0.0
        %1171 = vmatprep.mubr.f32.mxu0 0.0
        %1172 = vmatmul.mubr.f32.gmra.mrb[0].mxu0 %v1101
        %v1173 = vpop.f32.mrb[0].mxu0
        %v1174 = vadd.f32 %v1097, %v1173
        %v1175 = vpop.f32.mrb[0].mxu0
        %1176 = vdwg.mxu0
        %v1177 = vmax.f32 %v1174, 0.0
        %v1178 = vand.u32 2147483647, %v1174
        %v1179 = vsub.f32 0.0, %v1178
        %v1180 = vmul.f32 %v1179, 1.442695
        %v1181 = vpow.pop %v1180
        %v1182 = vadd.f32 %v1181, 1.0
        %v1183 = vlog2.pop %v1182
        %v1184 = vmul.f32 %v1183, 0.6931472
        %v1185 = vadd.f32 %v1177, %v1184
        %1186 = vst.msk [vmem:[#allocation4] sm:$0xff] %vm966, %v1185
        %v1187 = vmul.f32 %v1185, %v1014
        %1188 = vst.msk [vmem:[#allocation5] sm:$0xff] %vm966, %v1187
        %v1189 = vld [vmem:[#allocation21] sm:$0xf]
        %v1190 = vld [vmem:[#allocation21 + $0x4] sm:$0xf]
        %v1193 = vunpack.c.l.b16 %v1189
        %v1194 = vunpack.c.l.b16 %v1190
        %v1195 = vpack.c.b16 %v1194, %v1193
        %v1197 = vsel %vm966, %v1195, 0
        %1199 = vmatprep.subr.bf16.mxu0 0
        %1200 = vmatpush1.bf16.xpose.msra.mxu0 %v1049
        %1201 = vmatprep.subr.bf16.mxu0 0
        %1202 = vmatpush1.bf16.xpose.msra.mxu0 0
        %1203 = vmatprep.subr.bf16.mxu0 0
        %1204 = vmatpush1.bf16.xpose.msra.mxu0 0
        %1205 = vmatprep.subr.bf16.mxu0 0
        %1206 = vmatpush1.bf16.xpose.msra.mxu0 0
        %1207 = vmatprep.subr.bf16.mxu0 0
        %1208 = vmatpush1.bf16.xpose.msra.mxu0 0
        %1209 = vmatprep.subr.bf16.mxu0 0
        %1210 = vmatpush1.bf16.xpose.msra.mxu0 0
        %1211 = vmatprep.subr.bf16.mxu0 0
        %1212 = vmatpush1.bf16.xpose.msra.mxu0 0
        %1213 = vmatprep.subr.bf16.mxu0 0
        %1214 = vmatpush1.bf16.xpose.msra.mxu0 0
        %1215 = vmatprep.subr.bf16.mxu0 0
        %1216 = vmatpush1.bf16.xpose.msra.mxu0 0
        %1217 = vmatprep.subr.bf16.mxu0 0
        %1218 = vmatpush1.bf16.xpose.msra.mxu0 0
        %1219 = vmatprep.subr.bf16.mxu0 0
        %1220 = vmatpush1.bf16.xpose.msra.mxu0 0
        %1221 = vmatprep.subr.bf16.mxu0 0
        %1222 = vmatpush1.bf16.xpose.msra.mxu0 0
        %1223 = vmatprep.subr.bf16.mxu0 0
        %1224 = vmatpush1.bf16.xpose.msra.mxu0 0
        %1225 = vmatprep.subr.bf16.mxu0 0
        %1226 = vmatpush1.bf16.xpose.msra.mxu0 0
        %1227 = vmatprep.subr.bf16.mxu0 0
        %1228 = vmatpush1.bf16.xpose.msra.mxu0 0
        %1229 = vmatprep.subr.bf16.mxu0 0
        %1230 = vmatpush1.bf16.xpose.msra.mxu0 0
        %1231 = vmatprep.mubr.bf16.mxu0 0
        %1232 = vmatmul.mubr.bf16.gmra.mrb[0].mxu0 %v1197
        %v1233 = vpop.f32.mrb[0].mxu0
        %v1234 = vadd.f32 0.0, %v1233
        %v1235 = vpop.f32.mrb[0].mxu0
        %v1236 = vpop.f32.mrb[0].mxu0
        %v1237 = vadd.f32 0.0, %v1236
        %v1238 = vpop.f32.mrb[0].mxu0
        %1239 = vdwg.mxu0
        %vm1240 = vcmask 64512
        %1241 = vst.msk [vmem:[#allocation6] sm:$0xff] %vm1240, %v1234
        %1242 = vst.msk [vmem:[#allocation7] sm:$0xff] %vm1240, %v1237
        %v1243 = vld [vmem:[#allocation26] sm:$0xff]
        %v1244 = vlaneseq
        %v1245 = vshrl.u32 %v1244, 7
        %v1246 = vld [vmem:[#allocation4] sm:$0xff]
        %v1247 = vld [vmem:[#allocation5] sm:$0xff]
        %v1248 = vld [vmem:[#allocation6] sm:$0xff]
        %v1249 = vld [vmem:[#allocation7] sm:$0xff]
        %v1250 = vlaneseq
        %v1251 = vshrl.u32 %v1250, 7
        %v1252 = vsub.s32 0, %v1251
        %v1253 = vrot.slane %v1246, %v1252
        %v1254 = vmul.f32 %v1253, %v1243
        %v1255 = vmul.f32 %v1254, 1.442695
        %v1256 = vpow.pop %v1255
        %v1257 = vmul.f32 %v1256, 0.0
        %1259 = vset.pattern.permute.xlu0 0
        %1260 = vperm.xlu0 %1259, %v1248
        %v1261 = vpop.permute.xlu0 %1260
        %v1263 = vlaneseq
        %v1264 = vshrl.u32 %v1263, 7
        %v1265 = vsub.s32 0, %v1264
        %v1266 = vrot.slane %v1247, %v1265
        %v1267 = vmul.f32 %v1261, %v1266
        %v1268 = vadd.f32 %v1257, %v1267
        %1270 = vset.pattern.permute.xlu0 0
        %1271 = vperm.xlu0 %1270, %v1249
        %v1272 = vpop.permute.xlu0 %1271
        %v1274 = vmul.f32 %v1272, %v1268
        %v1275 = vsel %vm966, %v1274, 0.0
        %v1276 = vrot.slane %v1275, 4
        %v1277 = vadd.f32 %v1275, %v1276
        %v1278 = vrot.slane %v1277, 2
        %v1279 = vadd.f32 %v1277, %v1278
        %v1280 = vrot.slane %v1279, 1
        %v1281 = vadd.f32 %v1279, %v1280
        %vm1282 = vcmp.eq.s32.totalorder %v1245, 0
        %v1283 = vsel %vm1282, 1, 0
        %vm1284 = vcmp.eq.s32.totalorder %v1283, 1
        %v1285 = vsel %vm1284, %v1281, 0.0
        %v1286 = vlaneseq
        %v1287 = vshrl.u32 %v1286, 7
        %v1288 = vsub.s32 1, %v1287
        %v1289 = vrot.slane %v1246, %v1288
        %v1290 = vmul.f32 %v1289, %v1243
        %v1291 = vmul.f32 %v1290, 1.442695
        %v1292 = vpow.pop %v1291
        %v1293 = vmul.f32 %v1292, %v1268
        %1294 = vset.pattern.permute.xlu0 1
        %1295 = vperm.xlu0 %1294, %v1248
        %v1296 = vpop.permute.xlu0 %1295
        %v1298 = vlaneseq
        %v1299 = vshrl.u32 %v1298, 7
        %v1300 = vsub.s32 1, %v1299
        %v1301 = vrot.slane %v1247, %v1300
        %v1302 = vmul.f32 %v1296, %v1301
        %v1303 = vadd.f32 %v1293, %v1302
        %1304 = vset.pattern.permute.xlu0 1
        %1305 = vperm.xlu0 %1304, %v1249
        %v1306 = vpop.permute.xlu0 %1305
        %v1308 = vmul.f32 %v1306, %v1303
        %v1309 = vsel %vm966, %v1308, 0.0
        %v1310 = vrot.slane %v1309, 4
        %v1311 = vadd.f32 %v1309, %v1310
        %v1312 = vrot.slane %v1311, 2
        %v1313 = vadd.f32 %v1311, %v1312
        %v1314 = vrot.slane %v1313, 1
        %v1315 = vadd.f32 %v1313, %v1314
        %vm1316 = vcmp.eq.s32.totalorder %v1245, 1
        %v1317 = vsel %vm1316, 1, 0
        %vm1318 = vcmp.eq.s32.totalorder %v1317, 1
        %v1319 = vsel %vm1318, %v1315, %v1285
        %v1320 = vlaneseq
        %v1321 = vshrl.u32 %v1320, 7
        %v1322 = vsub.s32 2, %v1321
        %v1323 = vrot.slane %v1246, %v1322
        %v1324 = vmul.f32 %v1323, %v1243
        %v1325 = vmul.f32 %v1324, 1.442695
        %v1326 = vpow.pop %v1325
        %v1327 = vmul.f32 %v1326, %v1303
        %1328 = vset.pattern.permute.xlu0 2
        %1329 = vperm.xlu0 %1328, %v1248
        %v1330 = vpop.permute.xlu0 %1329
        %v1332 = vlaneseq
        %v1333 = vshrl.u32 %v1332, 7
        %v1334 = vsub.s32 2, %v1333
        %v1335 = vrot.slane %v1247, %v1334
        %v1336 = vmul.f32 %v1330, %v1335
        %v1337 = vadd.f32 %v1327, %v1336
        %1338 = vset.pattern.permute.xlu0 2
        %1339 = vperm.xlu0 %1338, %v1249
        %v1340 = vpop.permute.xlu0 %1339
        %v1342 = vmul.f32 %v1340, %v1337
        %v1343 = vsel %vm966, %v1342, 0.0
        %v1344 = vrot.slane %v1343, 4
        %v1345 = vadd.f32 %v1343, %v1344
        %v1346 = vrot.slane %v1345, 2
        %v1347 = vadd.f32 %v1345, %v1346
        %v1348 = vrot.slane %v1347, 1
        %v1349 = vadd.f32 %v1347, %v1348
        %vm1350 = vcmp.eq.s32.totalorder %v1245, 2
        %v1351 = vsel %vm1350, 1, 0
        %vm1352 = vcmp.eq.s32.totalorder %v1351, 1
        %v1353 = vsel %vm1352, %v1349, %v1319
        %v1354 = vlaneseq
        %v1355 = vshrl.u32 %v1354, 7
        %v1356 = vsub.s32 3, %v1355
        %v1357 = vrot.slane %v1246, %v1356
        %v1358 = vmul.f32 %v1357, %v1243
        %v1359 = vmul.f32 %v1358, 1.442695
        %v1360 = vpow.pop %v1359
        %v1361 = vmul.f32 %v1360, %v1337
        %1362 = vset.pattern.permute.xlu0 3
        %1363 = vperm.xlu0 %1362, %v1248
        %v1364 = vpop.permute.xlu0 %1363
        %v1366 = vlaneseq
        %v1367 = vshrl.u32 %v1366, 7
        %v1368 = vsub.s32 3, %v1367
        %v1369 = vrot.slane %v1247, %v1368
        %v1370 = vmul.f32 %v1364, %v1369
        %v1371 = vadd.f32 %v1361, %v1370
        %1372 = vset.pattern.permute.xlu0 3
        %1373 = vperm.xlu0 %1372, %v1249
        %v1374 = vpop.permute.xlu0 %1373
        %v1376 = vmul.f32 %v1374, %v1371
        %v1377 = vsel %vm966, %v1376, 0.0
        %v1378 = vrot.slane %v1377, 4
        %v1379 = vadd.f32 %v1377, %v1378
        %v1380 = vrot.slane %v1379, 2
        %v1381 = vadd.f32 %v1379, %v1380
        %v1382 = vrot.slane %v1381, 1
        %v1383 = vadd.f32 %v1381, %v1382
        %vm1384 = vcmp.eq.s32.totalorder %v1245, 3
        %v1385 = vsel %vm1384, 1, 0
        %vm1386 = vcmp.eq.s32.totalorder %v1385, 1
        %v1387 = vsel %vm1386, %v1383, %v1353
        %v1388 = vlaneseq
        %v1389 = vshrl.u32 %v1388, 7
        %v1390 = vsub.s32 4, %v1389
        %v1391 = vrot.slane %v1246, %v1390
        %v1392 = vmul.f32 %v1391, %v1243
        %v1393 = vmul.f32 %v1392, 1.442695
        %v1394 = vpow.pop %v1393
        %v1395 = vmul.f32 %v1394, %v1371
        %1396 = vset.pattern.permute.xlu0 4
        %1397 = vperm.xlu0 %1396, %v1248
        %v1398 = vpop.permute.xlu0 %1397
        %v1400 = vlaneseq
        %v1401 = vshrl.u32 %v1400, 7
        %v1402 = vsub.s32 4, %v1401
        %v1403 = vrot.slane %v1247, %v1402
        %v1404 = vmul.f32 %v1398, %v1403
        %v1405 = vadd.f32 %v1395, %v1404
        %1406 = vset.pattern.permute.xlu0 4
        %1407 = vperm.xlu0 %1406, %v1249
        %v1408 = vpop.permute.xlu0 %1407
        %v1410 = vmul.f32 %v1408, %v1405
        %v1411 = vsel %vm966, %v1410, 0.0
        %v1412 = vrot.slane %v1411, 4
        %v1413 = vadd.f32 %v1411, %v1412
        %v1414 = vrot.slane %v1413, 2
        %v1415 = vadd.f32 %v1413, %v1414
        %v1416 = vrot.slane %v1415, 1
        %v1417 = vadd.f32 %v1415, %v1416
        %vm1418 = vcmp.eq.s32.totalorder %v1245, 4
        %v1419 = vsel %vm1418, 1, 0
        %vm1420 = vcmp.eq.s32.totalorder %v1419, 1
        %v1421 = vsel %vm1420, %v1417, %v1387
        %v1422 = vlaneseq
        %v1423 = vshrl.u32 %v1422, 7
        %v1424 = vsub.s32 5, %v1423
        %v1425 = vrot.slane %v1246, %v1424
        %v1426 = vmul.f32 %v1425, %v1243
        %v1427 = vmul.f32 %v1426, 1.442695
        %v1428 = vpow.pop %v1427
        %v1429 = vmul.f32 %v1428, %v1405
        %1430 = vset.pattern.permute.xlu0 5
        %1431 = vperm.xlu0 %1430, %v1248
        %v1432 = vpop.permute.xlu0 %1431
        %v1434 = vlaneseq
        %v1435 = vshrl.u32 %v1434, 7
        %v1436 = vsub.s32 5, %v1435
        %v1437 = vrot.slane %v1247, %v1436
        %v1438 = vmul.f32 %v1432, %v1437
        %v1439 = vadd.f32 %v1429, %v1438
        %1440 = vset.pattern.permute.xlu0 5
        %1441 = vperm.xlu0 %1440, %v1249
        %v1442 = vpop.permute.xlu0 %1441
        %v1444 = vmul.f32 %v1442, %v1439
        %v1445 = vsel %vm966, %v1444, 0.0
        %v1446 = vrot.slane %v1445, 4
        %v1447 = vadd.f32 %v1445, %v1446
        %v1448 = vrot.slane %v1447, 2
        %v1449 = vadd.f32 %v1447, %v1448
        %v1450 = vrot.slane %v1449, 1
        %v1451 = vadd.f32 %v1449, %v1450
        %vm1452 = vcmp.eq.s32.totalorder %v1245, 5
        %v1453 = vsel %vm1452, 1, 0
        %vm1454 = vcmp.eq.s32.totalorder %v1453, 1
        %v1455 = vsel %vm1454, %v1451, %v1421
        %v1456 = vlaneseq
        %v1457 = vshrl.u32 %v1456, 7
        %v1458 = vsub.s32 6, %v1457
        %v1459 = vrot.slane %v1246, %v1458
        %v1460 = vmul.f32 %v1459, %v1243
        %v1461 = vmul.f32 %v1460, 1.442695
        %v1462 = vpow.pop %v1461
        %v1463 = vmul.f32 %v1462, %v1439
        %1464 = vset.pattern.permute.xlu0 6
        %1465 = vperm.xlu0 %1464, %v1248
        %v1466 = vpop.permute.xlu0 %1465
        %v1468 = vlaneseq
        %v1469 = vshrl.u32 %v1468, 7
        %v1470 = vsub.s32 6, %v1469
        %v1471 = vrot.slane %v1247, %v1470
        %v1472 = vmul.f32 %v1466, %v1471
        %v1473 = vadd.f32 %v1463, %v1472
        %1474 = vset.pattern.permute.xlu0 6
        %1475 = vperm.xlu0 %1474, %v1249
        %v1476 = vpop.permute.xlu0 %1475
        %v1478 = vmul.f32 %v1476, %v1473
        %v1479 = vsel %vm966, %v1478, 0.0
        %v1480 = vrot.slane %v1479, 4
        %v1481 = vadd.f32 %v1479, %v1480
        %v1482 = vrot.slane %v1481, 2
        %v1483 = vadd.f32 %v1481, %v1482
        %v1484 = vrot.slane %v1483, 1
        %v1485 = vadd.f32 %v1483, %v1484
        %vm1486 = vcmp.eq.s32.totalorder %v1245, 6
        %v1487 = vsel %vm1486, 1, 0
        %vm1488 = vcmp.eq.s32.totalorder %v1487, 1
        %v1489 = vsel %vm1488, %v1485, %v1455
        %v1490 = vlaneseq
        %v1491 = vshrl.u32 %v1490, 7
        %v1492 = vsub.s32 7, %v1491
        %v1493 = vrot.slane %v1246, %v1492
        %v1494 = vmul.f32 %v1493, %v1243
        %v1495 = vmul.f32 %v1494, 1.442695
        %v1496 = vpow.pop %v1495
        %v1497 = vmul.f32 %v1496, %v1473
        %1498 = vset.pattern.permute.xlu0 7
        %1499 = vperm.xlu0 %1498, %v1248
        %v1500 = vpop.permute.xlu0 %1499
        %v1502 = vlaneseq
        %v1503 = vshrl.u32 %v1502, 7
        %v1504 = vsub.s32 7, %v1503
        %v1505 = vrot.slane %v1247, %v1504
        %v1506 = vmul.f32 %v1500, %v1505
        %v1507 = vadd.f32 %v1497, %v1506
        %1508 = vset.pattern.permute.xlu0 7
        %1509 = vperm.xlu0 %1508, %v1249
        %v1510 = vpop.permute.xlu0 %1509
        %v1512 = vmul.f32 %v1510, %v1507
        %v1513 = vsel %vm966, %v1512, 0.0
        %v1514 = vrot.slane %v1513, 4
        %v1515 = vadd.f32 %v1513, %v1514
        %v1516 = vrot.slane %v1515, 2
        %v1517 = vadd.f32 %v1515, %v1516
        %v1518 = vrot.slane %v1517, 1
        %v1519 = vadd.f32 %v1517, %v1518
        %vm1520 = vcmp.eq.s32.totalorder %v1245, 7
        %v1521 = vsel %vm1520, 1, 0
        %vm1522 = vcmp.eq.s32.totalorder %v1521, 1
        %v1523 = vsel %vm1522, %v1519, %v1489
        %1524 = vst.msk [vmem:[#allocation8] sm:$0xff] %vm966, %v1523
        %v1525 = vld [vmem:[#allocation8] sm:$0xff]
        %v1526 = vld [vmem:[#allocation27] sm:$0x1]
        %v1528 = vlaneseq
        %v1529 = vshrl.u32 %v1528, 7
        %v1530 = vsub.s32 0, %v1529
        %v1531 = vrot.slane %v1526, %v1530
        %v1533 = vmul.f32 %v1014, %v1531
        %v1534 = vadd.f32 %v1525, %v1533
        %v1535 = vsub.f32 0.0, %v959
        %v1536 = vmul.f32 %v1535, 1.442695
        %v1537 = vpow.pop %v1536
        %v1538 = vadd.f32 %v1537, 1.0
        %v1539 = vrcp.pop %v1538
        %v1540 = vmul.f32 1.0, %v1539
        %v1541 = vmul.f32 %v959, %v1540
        %1543 = vrot.lane.b32.xlu0 %v1541, 64
        %v1544 = vpop.permute.xlu0 %1543
        %v1546 = vmul.f32 %v1534, %v1544
        %v1547 = vpack.c.bf16 %v1546, %v1546
        %v1548 = vld [vmem:[#allocation29] sm:$0xf]
        %v1549 = vld [vmem:[#allocation29 + $0x4] sm:$0xf]
        %v1550 = vld [vmem:[#allocation29 + $0x8] sm:$0xf]
        %v1551 = vld [vmem:[#allocation29 + $0xc] sm:$0xf]
        %v1552 = vld [vmem:[#allocation29 + $0x10] sm:$0xf]
        %v1553 = vld [vmem:[#allocation29 + $0x14] sm:$0xf]
        %v1554 = vld [vmem:[#allocation29 + $0x18] sm:$0xf]
        %v1555 = vld [vmem:[#allocation29 + $0x1c] sm:$0xf]
        %v1564 = vunpack.c.l.b16 %v1548
        %v1565 = vunpack.c.l.b16 %v1549
        %v1566 = vunpack.c.l.b16 %v1550
        %v1567 = vunpack.c.l.b16 %v1551
        %v1568 = vunpack.c.l.b16 %v1552
        %v1569 = vunpack.c.l.b16 %v1553
        %v1570 = vunpack.c.l.b16 %v1554
        %v1571 = vunpack.c.l.b16 %v1555
        %v1572 = vpack.c.b16 %v1565, %v1564
        %v1573 = vpack.c.b16 %v1567, %v1566
        %v1574 = vpack.c.b16 %v1569, %v1568
        %v1575 = vpack.c.b16 %v1571, %v1570
        %v1581 = vsel %vm966, %v1547, 0
        %1583 = vmatprep.subr.bf16.mxu0 0
        %1584 = vmatpush1.bf16.msra.mxu0 %v1572
        %1585 = vmatprep.subr.bf16.mxu0 0
        %1586 = vmatpush1.bf16.msra.mxu0 %v1573
        %1587 = vmatprep.subr.bf16.mxu0 0
        %1588 = vmatpush1.bf16.msra.mxu0 %v1574
        %1589 = vmatprep.subr.bf16.mxu0 0
        %1590 = vmatpush1.bf16.msra.mxu0 %v1575
        %1591 = vmatprep.subr.bf16.mxu0 0
        %1592 = vmatpush1.bf16.msra.mxu0 0
        %1593 = vmatprep.subr.bf16.mxu0 0
        %1594 = vmatpush1.bf16.msra.mxu0 0
        %1595 = vmatprep.subr.bf16.mxu0 0
        %1596 = vmatpush1.bf16.msra.mxu0 0
        %1597 = vmatprep.subr.bf16.mxu0 0
        %1598 = vmatpush1.bf16.msra.mxu0 0
        %1599 = vmatprep.subr.bf16.mxu0 0
        %1600 = vmatpush1.bf16.msra.mxu0 0
        %1601 = vmatprep.subr.bf16.mxu0 0
        %1602 = vmatpush1.bf16.msra.mxu0 0
        %1603 = vmatprep.subr.bf16.mxu0 0
        %1604 = vmatpush1.bf16.msra.mxu0 0
        %1605 = vmatprep.subr.bf16.mxu0 0
        %1606 = vmatpush1.bf16.msra.mxu0 0
        %1607 = vmatprep.subr.bf16.mxu0 0
        %1608 = vmatpush1.bf16.msra.mxu0 0
        %1609 = vmatprep.subr.bf16.mxu0 0
        %1610 = vmatpush1.bf16.msra.mxu0 0
        %1611 = vmatprep.subr.bf16.mxu0 0
        %1612 = vmatpush1.bf16.msra.mxu0 0
        %1613 = vmatprep.subr.bf16.mxu0 0
        %1614 = vmatpush1.bf16.msra.mxu0 0
        %1615 = vmatprep.mubr.bf16.mxu0 0
        %1616 = vmatmul.mubr.bf16.gmra.mrb[0].mxu0 %v1581
        %v1617 = vpop.f32.mrb[0].mxu0
        %v1618 = vadd.f32 0.0, %v1617
        %v1619 = vpop.f32.mrb[0].mxu0
        %v1620 = vpop.f32.mrb[0].mxu0
        %v1621 = vpop.f32.mrb[0].mxu0
        %1622 = vdwg.mxu0
        %v1624 = vrot.slane %v1618, 1
        %v1626 = vadd.f32 %v856, %v1624
        %v1627 = vld [vmem:[#allocation30] sm:$0x1]
        %v1628 = vld [vmem:[#allocation32] sm:$0x1]
        %v1629 = vsel %vm859, %v1626, 0.0
        %1630 = vadd.xlane.f32.xlu0 %v1629
        %v1631 = vpop.xlane.xlu0 %1630
        %v1632 = vmul.f32 %v1631, %v863
        %v1633 = vsub.f32 %v1626, %v1632
        %v1634 = vmul.f32 %v1633, %v1633
        %v1635 = vsel %vm859, %v1634, 0.0
        %1636 = vadd.xlane.f32.xlu0 %v1635
        %v1637 = vpop.xlane.xlu0 %1636
        %v1638 = vmul.f32 %v1637, %v863
        %v1639 = vadd.f32 %v1638, 1e-05
        %v1640 = vrsqrt.pop %v1639
        %v1641 = vmul.f32 %v1633, %v1640
        %v1643 = vlaneseq
        %v1644 = vshrl.u32 %v1643, 7
        %v1645 = vsub.s32 0, %v1644
        %v1646 = vrot.slane %v1627, %v1645
        %v1648 = vmul.f32 %v1641, %v1646
        %v1650 = vlaneseq
        %v1651 = vshrl.u32 %v1650, 7
        %v1652 = vsub.s32 0, %v1651
        %v1653 = vrot.slane %v1628, %v1652
        %v1655 = vadd.f32 %v1648, %v1653
        %v1656 = vpack.c.bf16 %v1655, %v1655
        %v1657 = vld [vmem:[#allocation33] sm:$0xff]
        %v1658 = vld [vmem:[#allocation33 + $0x8] sm:$0xff]
        %v1659 = vld [vmem:[#allocation33 + $0x10] sm:$0xff]
        %v1660 = vld [vmem:[#allocation33 + $0x18] sm:$0xff]
        %v1661 = vld [vmem:[#allocation35] sm:$0x3]
        %v1663 = vlaneseq
        %v1664 = vshrl.u32 %v1663, 7
        %v1665 = vsub.s32 0, %v1664
        %v1666 = vrot.slane %v1661, %v1665
        %v1667 = vlaneseq
        %v1668 = vshrl.u32 %v1667, 7
        %v1669 = vsub.s32 1, %v1668
        %v1670 = vrot.slane %v1661, %v1669
        %v1677 = vunpack.c.l.b16 %v1657
        %v1678 = vunpack.c.h.b16 %v1657
        %v1679 = vunpack.c.l.b16 %v1658
        %v1680 = vunpack.c.h.b16 %v1658
        %v1681 = vunpack.c.l.b16 %v1659
        %v1682 = vunpack.c.h.b16 %v1659
        %v1683 = vunpack.c.l.b16 %v1660
        %v1684 = vunpack.c.h.b16 %v1660
        %v1685 = vpack.c.b16 %v1679, %v1677
        %v1686 = vpack.c.b16 %v1680, %v1678
        %v1687 = vpack.c.b16 %v1683, %v1681
        %v1688 = vpack.c.b16 %v1684, %v1682
        %v1694 = vsel %vm920, %v1656, 0
        %1696 = vmatprep.subr.bf16.mxu0 %v1686
        %1697 = vmatpush1.bf16.msra.mxu0 %v1685
        %1698 = vmatprep.subr.bf16.mxu0 %v1688
        %1699 = vmatpush1.bf16.msra.mxu0 %v1687
        %1700 = vmatprep.subr.bf16.mxu0 0
        %1701 = vmatpush1.bf16.msra.mxu0 0
        %1702 = vmatprep.subr.bf16.mxu0 0
        %1703 = vmatpush1.bf16.msra.mxu0 0
        %1704 = vmatprep.subr.bf16.mxu0 0
        %1705 = vmatpush1.bf16.msra.mxu0 0
        %1706 = vmatprep.subr.bf16.mxu0 0
        %1707 = vmatpush1.bf16.msra.mxu0 0
        %1708 = vmatprep.subr.bf16.mxu0 0
        %1709 = vmatpush1.bf16.msra.mxu0 0
        %1710 = vmatprep.subr.bf16.mxu0 0
        %1711 = vmatpush1.bf16.msra.mxu0 0
        %1712 = vmatprep.subr.bf16.mxu0 0
        %1713 = vmatpush1.bf16.msra.mxu0 0
        %1714 = vmatprep.subr.bf16.mxu0 0
        %1715 = vmatpush1.bf16.msra.mxu0 0
        %1716 = vmatprep.subr.bf16.mxu0 0
        %1717 = vmatpush1.bf16.msra.mxu0 0
        %1718 = vmatprep.subr.bf16.mxu0 0
        %1719 = vmatpush1.bf16.msra.mxu0 0
        %1720 = vmatprep.subr.bf16.mxu0 0
        %1721 = vmatpush1.bf16.msra.mxu0 0
        %1722 = vmatprep.subr.bf16.mxu0 0
        %1723 = vmatpush1.bf16.msra.mxu0 0
        %1724 = vmatprep.subr.bf16.mxu0 0
        %1725 = vmatpush1.bf16.msra.mxu0 0
        %1726 = vmatprep.subr.bf16.mxu0 0
        %1727 = vmatpush1.bf16.msra.mxu0 0
        %1728 = vmatprep.mubr.bf16.mxu0 0
        %1729 = vmatmul.mubr.bf16.gmra.mrb[0].mxu0 %v1694
        %v1730 = vpop.f32.mrb[0].mxu0
        %v1731 = vadd.f32 %v1666, %v1730
        %v1732 = vpop.f32.mrb[0].mxu0
        %v1733 = vadd.f32 %v1670, %v1732
        %v1734 = vpop.f32.mrb[0].mxu0
        %v1735 = vpop.f32.mrb[0].mxu0
        %1736 = vdwg.mxu0
        %v1737 = vsub.f32 0.0, %v1731
        %v1738 = vmul.f32 %v1737, 1.442695
        %v1739 = vpow.pop %v1738
        %v1740 = vadd.f32 %v1739, 1.0
        %v1741 = vrcp.pop %v1740
        %v1742 = vmul.f32 1.0, %v1741
        %v1743 = vmul.f32 %v1731, %v1742
        %1746 = vrot.lane.b32.xlu0 %v1731, 48
        %v1747 = vpop.permute.xlu0 %1746
        %1748 = vrot.lane.b32.xlu0 %v1733, 48
        %v1749 = vpop.permute.xlu0 %1748
        %vm1750 = vcmask 392192
        %v1751 = vsel %vm1750, %v1747, %v1749
        %v1753 = vmul.f32 %v1743, %v1751
        %v1754 = vpack.c.bf16 %v1753, %v1753
        %v1755 = vld [vmem:[#allocation36] sm:$0xf]
        %v1756 = vld [vmem:[#allocation36 + $0x4] sm:$0xf]
        %v1757 = vld [vmem:[#allocation36 + $0x8] sm:$0xf]
        %v1758 = vld [vmem:[#allocation36 + $0xc] sm:$0xf]
        %v1759 = vld [vmem:[#allocation36 + $0x10] sm:$0xf]
        %v1760 = vld [vmem:[#allocation36 + $0x14] sm:$0xf]
        %v1761 = vld [vmem:[#allocation36 + $0x18] sm:$0xf]
        %v1762 = vld [vmem:[#allocation36 + $0x1c] sm:$0xf]
        %v1763 = vld [vmem:[#allocation36 + $0x20] sm:$0xf]
        %v1764 = vld [vmem:[#allocation36 + $0x24] sm:$0xf]
        %v1765 = vld [vmem:[#allocation38] sm:$0x1]
        %v1767 = vlaneseq
        %v1768 = vshrl.u32 %v1767, 7
        %v1769 = vsub.s32 0, %v1768
        %v1770 = vrot.slane %v1765, %v1769
        %v1782 = vunpack.c.l.b16 %v1755
        %v1783 = vunpack.c.l.b16 %v1756
        %v1784 = vunpack.c.l.b16 %v1757
        %v1785 = vunpack.c.l.b16 %v1758
        %v1786 = vunpack.c.l.b16 %v1759
        %v1787 = vunpack.c.l.b16 %v1760
        %v1788 = vunpack.c.l.b16 %v1761
        %v1789 = vunpack.c.l.b16 %v1762
        %v1790 = vunpack.c.l.b16 %v1763
        %v1791 = vunpack.c.l.b16 %v1764
        %v1792 = vpack.c.b16 %v1783, %v1782
        %v1793 = vpack.c.b16 %v1785, %v1784
        %v1794 = vpack.c.b16 %v1787, %v1786
        %v1795 = vpack.c.b16 %v1789, %v1788
        %v1796 = vpack.c.b16 %v1791, %v1790
        %vm1802 = vcmask 654336
        %v1804 = vsel %vm1802, %v1754, 0
        %1806 = vmatprep.subr.bf16.mxu0 0
        %1807 = vmatpush1.bf16.msra.mxu0 %v1792
        %1808 = vmatprep.subr.bf16.mxu0 0
        %1809 = vmatpush1.bf16.msra.mxu0 %v1793
        %1810 = vmatprep.subr.bf16.mxu0 0
        %1811 = vmatpush1.bf16.msra.mxu0 %v1794
        %1812 = vmatprep.subr.bf16.mxu0 0
        %1813 = vmatpush1.bf16.msra.mxu0 %v1795
        %1814 = vmatprep.subr.bf16.mxu0 0
        %1815 = vmatpush1.bf16.msra.mxu0 %v1796
        %1816 = vmatprep.subr.bf16.mxu0 0
        %1817 = vmatpush1.bf16.msra.mxu0 0
        %1818 = vmatprep.subr.bf16.mxu0 0
        %1819 = vmatpush1.bf16.msra.mxu0 0
        %1820 = vmatprep.subr.bf16.mxu0 0
        %1821 = vmatpush1.bf16.msra.mxu0 0
        %1822 = vmatprep.subr.bf16.mxu0 0
        %1823 = vmatpush1.bf16.msra.mxu0 0
        %1824 = vmatprep.subr.bf16.mxu0 0
        %1825 = vmatpush1.bf16.msra.mxu0 0
        %1826 = vmatprep.subr.bf16.mxu0 0
        %1827 = vmatpush1.bf16.msra.mxu0 0
        %1828 = vmatprep.subr.bf16.mxu0 0
        %1829 = vmatpush1.bf16.msra.mxu0 0
        %1830 = vmatprep.subr.bf16.mxu0 0
        %1831 = vmatpush1.bf16.msra.mxu0 0
        %1832 = vmatprep.subr.bf16.mxu0 0
        %1833 = vmatpush1.bf16.msra.mxu0 0
        %1834 = vmatprep.subr.bf16.mxu0 0
        %1835 = vmatpush1.bf16.msra.mxu0 0
        %1836 = vmatprep.subr.bf16.mxu0 0
        %1837 = vmatpush1.bf16.msra.mxu0 0
        %1838 = vmatprep.mubr.bf16.mxu0 0
        %1839 = vmatmul.mubr.bf16.gmra.mrb[0].mxu0 %v1804
        %v1840 = vpop.f32.mrb[0].mxu0
        %v1841 = vadd.f32 %v1770, %v1840
        %v1842 = vpop.f32.mrb[0].mxu0
        %v1843 = vpop.f32.mrb[0].mxu0
        %v1844 = vpop.f32.mrb[0].mxu0
        %1845 = vdwg.mxu0
        %v1846 = vadd.f32 %v1626, %v1841
        %1847 = vst.msk [vmem:[%s854] sm:$0x1f] %vm859, %v1846
        %s1848 = sand.u32 %s457, 1
        %s1849 = scalar_lea.sflag [#allocation11], %s1848
        %s1850 = sand.u32 %s457, 1
        %s1851 = smul.addr %s1850, 8
        %s1852 = scalar_lea.vmem [#allocation39], %s1851
        // Predicated region
        $region173: #{adventurer_forward.7} parent=95 // pred_check
          %p1853 = pneg %p467
        $region174: #{adventurer_forward.7} parent=95 // pred_check_branch
          %1855 = sbr.rel (%p1853) target = $region176
        $region175: #{adventurer_forward.7} parent=95 // pred_region
          %s1857 = ssub.s32 128, 128
          %1858 = vsyncadd %s1849, %s1857
          %s1859 = smul.addr %s45, 128
          %s1860 = scalar_lea.hbm %s19, %s1859
          %s1862 = sshll.u32 %s1852, 4
          %s1863 = int_to_ptr.vmem [resolvable:$true] %s1862
          %1865 = dma.vmem_to_hbm [thread:$0]  %s1863, 128, %s1860, %s1849
        $region176: #{adventurer_forward.7} parent=95 // pred_fallthru
          _
      $region96: #{adventurer_forward.7} parent=5 // pred_fallthru
        _
      %p1866 = scmp.le.s32.totalorder 2, %s40
      // Predicated region
      $region177: #{adventurer_forward.7} parent=5 // pred_check
        %p1867 = pneg %p1866
      $region178: #{adventurer_forward.7} parent=5 // pred_check_branch
        %1869 = sbr.rel (%p1867) target = $region180
      $region179: #{adventurer_forward.7} parent=5 // pred_region
        %s1870 = ssub.s32 %s40, 2
        // Predicated region
        $region181: #{adventurer_forward.7} parent=179 // pred_check
          %p1871 = pneg %p473
        $region182: #{adventurer_forward.7} parent=179 // pred_check_branch
          %1873 = sbr.rel (%p1871) target = $region184
        $region183: #{adventurer_forward.7} parent=179 // pred_region
          %s1874 = sand.u32 %s458, 1
          %s1875 = scalar_lea.sflag [#allocation11], %s1874
          %s1876 = sand.u32 %s458, 1
          %s1877 = smul.addr %s1876, 8
          %s1878 = scalar_lea.vmem [#allocation39], %s1877
          %1879 = dma.done %s1875, 128
        $region184: #{adventurer_forward.7} parent=179 // pred_fallthru
          _
      $region180: #{adventurer_forward.7} parent=5 // pred_fallthru
        _
    $region6: #{adventurer_forward.7} parent=1 // loop_footer
      %s44 = sadd.s32 1, %s40
    $region7: #{adventurer_forward.7} parent=1 // loop_footer_branch
      %39 = sbr.rel target = $region3
    $region8: #{adventurer_forward.7} parent=1 // loop_exit
      _
    %1880 = vsyncpa [#allocation10], 1
    %s1881 = scalar_lea.sflag [#allocation10], 1
    %1882 = vsyncpa %s1881, 1
    %1883 = vsyncpa [#allocation13], 1
    %1884 = vsyncpa [#allocation16], 1
    %1885 = vsyncpa [#allocation19], 1
    %1886 = vsyncpa [#allocation22], 1
    %1887 = vsyncpa [#allocation25], 1
    %1888 = vsyncpa [#allocation28], 1
    %1889 = vsyncpa [#allocation31], 1
    %1890 = vsyncpa [#allocation34], 1
    %1891 = vsyncpa [#allocation37], 1
    %1892 = vsyncpa [#allocation11], 1
    %s1893 = scalar_lea.sflag [#allocation11], 1
    %1894 = vsyncpa %s1893, 1

</llo_original>
